<compile_context>
chip_gen: v7x
topology: tpu7x:2x2x1
jax: 0.10.0
libtpu: 0.0.40
codegen_flags: <defaults>
</compile_context>

<pallas_src>
import functools

import numpy as np
import jax
import jax.numpy as jnp
from jax.experimental import pallas as pl
from jax.experimental.pallas import tpu as pltpu  # noqa: F401  (TPU backend)

# ----------------------------- configuration ---------------------------------
B = 2                  # batch
C_IN = 4               # configs.enc_in  (nvars)
SEQ_LEN = 16           # configs.seq_len
PRED_LEN = 8           # configs.pred_len == configs.feature_dim
E_LAYERS = 2
N_HEADS = 2
D_MODEL = 16
D_FF = 32
PATCH_LEN = 4
STRIDE = 4
PATCH_NUM = (SEQ_LEN - PATCH_LEN) // STRIDE + 1   # padding_patch=None -> 4
FEATURE_DIM = PRED_LEN
GLOBAL_HEADS = 2
LOCAL_KERNEL = 7
HIDDEN_DIM = 512
NUM_CLASSES = 3
BN_EPS = 1e-5
LN_EPS = 1e-5

BN_ROWS = B * C_IN                     # rows per patch block inside the kernel
NEG_INF = -1e30


# ------------------------------ in-kernel helpers ------------------------------
def _gelu(x):
    # Exact (erf-based) GELU, matching nn.GELU(); erf computed with the
    # Abramowitz-Stegun 7.1.26 polynomial (|err| < 1.5e-7) to avoid relying on
    # an erf primitive lowering inside Mosaic.
    a1, a2, a3, a4, a5 = 0.254829592, -0.284496736, 1.421413741, -1.453152027, 1.061405429
    pp = 0.3275911
    z = x * 0.7071067811865476
    az = jnp.abs(z)
    t = 1.0 / (1.0 + pp * az)
    poly = ((((a5 * t + a4) * t + a3) * t + a2) * t + a1) * t
    erf_abs = 1.0 - poly * jnp.exp(-az * az)
    erf = jnp.where(z >= 0, erf_abs, -erf_abs)
    return 0.5 * x * (1.0 + erf)


def _layernorm(x, g, b, eps=LN_EPS):
    mu = jnp.mean(x, axis=-1, keepdims=True)
    var = jnp.mean((x - mu) ** 2, axis=-1, keepdims=True)
    return (x - mu) * jax.lax.rsqrt(var + eps) * g + b


# ------------------------------ fused forward kernel ---------------------------
def _fused_forward_kernel(*refs, treedef):
    patches_ref = refs[0]
    out_ref = refs[-1]
    # Load every (tiny) weight once into registers/VMEM values.
    w = jax.tree_util.tree_unflatten(treedef, [r[...] for r in refs[1:-1]])

    def mm(a, b):
        return jnp.dot(a, b, preferred_element_type=jnp.float32)

    def mm_nt(a, b):   # a @ b.T without materialising a transpose
        return jax.lax.dot_general(a, b, (((1,), (1,)), ((), ())),
                                   preferred_element_type=jnp.float32)

    dh = D_MODEL // N_HEADS
    scale = dh ** -0.5

    # ---- patch embedding + learned positional encoding (rows are patch-major) ----
    src = mm(patches_ref[...], w["patch_w"]) + w["patch_b"] + w["w_pos"]      # [P*BN, D]

    # ---- TSTEncoder: post-norm, BatchNorm(eval), GELU FFN, res_attention ----
    prev = [None] * N_HEADS
    for L in w["layers"]:
        qkv = mm(src, L["qkv_w"]) + L["qkv_b"]                                # [P*BN, 3D]
        acc = None
        new_prev = []
        for h in range(N_HEADS):
            q = qkv[:, h * dh:(h + 1) * dh]
            k = qkv[:, D_MODEL + h * dh:D_MODEL + (h + 1) * dh]
            v = qkv[:, 2 * D_MODEL + h * dh:2 * D_MODEL + (h + 1) * dh]
            s = mm_nt(q, k) * scale                                           # [P*BN, P*BN]
            if prev[h] is not None:                                           # res_attention
                s = s + prev[h]
            new_prev.append(s)                                                # pre-softmax scores
            sm = s + w["mask_bias"]                                           # block-diag mask
            sm = sm - jnp.max(sm, axis=-1, keepdims=True)
            e = jnp.exp(sm)
            p_attn = e / jnp.sum(e, axis=-1, keepdims=True)
            o_h = mm(p_attn, v)                                               # [P*BN, dh]
            contrib = mm(o_h, L["wo_w"][h * dh:(h + 1) * dh, :])              # per-head out-proj
            acc = contrib if acc is None else acc + contrib
        prev = new_prev
        src = src + acc + L["wo_b"]                                           # residual
        src = src * L["bn1_s"] + L["bn1_t"]                                   # norm_attn (eval BN)
        ffn = mm(_gelu(mm(src, L["ff1_w"]) + L["ff1_b"]), L["ff2_w"]) + L["ff2_b"]
        src = src + ffn                                                       # residual
        src = src * L["bn2_s"] + L["bn2_t"]                                   # norm_ffn (eval BN)

    # ---- Flatten_Head: per-patch weight blocks, accumulate over patches -----
    y = None
    for p_idx in range(PATCH_NUM):
        blk = src[p_idx * BN_ROWS:(p_idx + 1) * BN_ROWS, :]                   # [BN, D]
        wp = w["head_w"][p_idx * D_MODEL:(p_idx + 1) * D_MODEL, :]            # [D, PRED]
        contrib = mm(blk, wp)
        y = contrib if y is None else y + contrib
    y = y + w["head_b"]                                                       # [BN, PRED]

    # ---- x.mean(dim=1) over nvars, expressed as a tiny matmul ----------------
    feat = mm(w["pool"], y)                                                   # [B, PRED]

    # ---- MixedAttentionModule on a length-1 sequence -------------------------
    # Global MHA with a single token: softmax over one key == 1, so the output
    # is exactly out_proj(Wv @ x + bv); q/k projections cannot change it.
    v_g = mm(feat, w["m_v_w"]) + w["m_v_b"]
    global_out = mm(v_g, w["m_o_w"]) + w["m_o_b"]
    # Local branch: depthwise Conv1d (padding=k//2, length-1 seq -> centre tap
    # only) + BN + ReLU, then 1x1 Conv1d + BN + ReLU (BNs folded on host).
    loc = jnp.maximum(feat * w["m_l1_s"] + w["m_l1_t"], 0.0)
    loc = jnp.maximum(mm(loc, w["m_l2_w"]) + w["m_l2_b"], 0.0)
    # Fusion Linear(2F -> 512): the concat([global, local]) is a split-weight sum.
    fw = w["m_f1_w"]
    hf = mm(global_out, fw[:FEATURE_DIM, :]) + mm(loc, fw[FEATURE_DIM:, :]) + w["m_f1_b"]
    hf = jnp.maximum(_layernorm(hf, w["m_fln_g"], w["m_fln_b"]), 0.0)
    fused = mm(hf, w["m_f2_w"]) + w["m_f2_b"]
    feat = _layernorm(feat + fused, w["m_n_g"], w["m_n_b"])

    # ---- classifier (eval BatchNorms folded into the linears) ----------------
    hc = jnp.maximum(mm(feat, w["c1_w"]) + w["c1_b"], 0.0)
    hc = jnp.maximum(mm(hc, w["c2_w"]) + w["c2_b"], 0.0)
    logits = mm(hc, w["c3_w"]) + w["c3_b"]

    # ---- softmax (return_probs=True) ------------------------------------------
    logits = logits - jnp.max(logits, axis=-1, keepdims=True)
    e = jnp.exp(logits)
    out_ref[...] = e / jnp.sum(e, axis=-1, keepdims=True)


# ------------------------------ parameter init (PyTorch layout) ----------------
def init_params(key):
    kit = iter(jax.random.split(key, 128))

    def nrm(shape, s=0.1):
        return (s * jax.random.normal(next(kit), shape)).astype(jnp.float32)

    def unif(shape, lo, hi):
        return jax.random.uniform(next(kit), shape, jnp.float32, lo, hi)

    def bn(c):
        gamma = 1.0 + nrm((c,), 0.1)
        beta = nrm((c,), 0.05)
        rmean = nrm((c,), 0.05)
        rvar = 1.0 + jnp.abs(nrm((c,), 0.1))
        scale = gamma / jnp.sqrt(rvar + BN_EPS)
        shift = beta - rmean * scale
        return scale, shift

    p = {}
    # PatchTST backbone
    p["W_P_w"] = nrm((D_MODEL, PATCH_LEN))
    p["W_P_b"] = nrm((D_MODEL,), 0.05)
    p["W_pos"] = unif((PATCH_NUM, D_MODEL), -0.02, 0.02)   # pe='zeros', learn_pe
    layers = []
    for _ in range(E_LAYERS):
        lp = {}
        for nm in ("Wq", "Wk", "Wv", "Wo"):
            lp[nm + "_w"] = nrm((D_MODEL, D_MODEL))
            lp[nm + "_b"] = nrm((D_MODEL,), 0.05)
        lp["bn1_scale"], lp["bn1_shift"] = bn(D_MODEL)
        lp["ff1_w"] = nrm((D_FF, D_MODEL)); lp["ff1_b"] = nrm((D_FF,), 0.05)
        lp["ff2_w"] = nrm((D_MODEL, D_FF)); lp["ff2_b"] = nrm((D_MODEL,), 0.05)
        lp["bn2_scale"], lp["bn2_shift"] = bn(D_MODEL)
        layers.append(lp)
    p["layers"] = layers
    p["head_w"] = nrm((PRED_LEN, D_MODEL * PATCH_NUM))
    p["head_b"] = nrm((PRED_LEN,), 0.05)

    # MixedAttentionModule (Wq/Wk kept for structural parity; with a length-1
    # sequence they cannot affect the output since softmax over one key == 1).
    m = {}
    for nm in ("Wq", "Wk", "Wv", "Wo"):
        m[nm + "_w"] = nrm((FEATURE_DIM, FEATURE_DIM))
        m[nm + "_b"] = nrm((FEATURE_DIM,), 0.05)
    m["dw_w"] = nrm((FEATURE_DIM, 1, LOCAL_KERNEL))      # depthwise Conv1d weight
    m["dw_b"] = nrm((FEATURE_DIM,), 0.05)
    m["lbn1_scale"], m["lbn1_shift"] = bn(FEATURE_DIM)
    m["pw_w"] = nrm((FEATURE_DIM, FEATURE_DIM, 1))       # 1x1 Conv1d weight
    m["pw_b"] = nrm((FEATURE_DIM,), 0.05)
    m["lbn2_scale"], m["lbn2_shift"] = bn(FEATURE_DIM)
    m["fus1_w"] = nrm((HIDDEN_DIM, 2 * FEATURE_DIM)); m["fus1_b"] = nrm((HIDDEN_DIM,), 0.05)
    m["fus_ln_g"] = 1.0 + nrm((HIDDEN_DIM,), 0.1); m["fus_ln_b"] = nrm((HIDDEN_DIM,), 0.05)
    m["fus2_w"] = nrm((FEATURE_DIM, HIDDEN_DIM)); m["fus2_b"] = nrm((FEATURE_DIM,), 0.05)
    m["norm_g"] = 1.0 + nrm((FEATURE_DIM,), 0.1); m["norm_b"] = nrm((FEATURE_DIM,), 0.05)
    p["mixed"] = m

    # classifier
    c = {}
    f2, f4 = FEATURE_DIM // 2, FEATURE_DIM // 4
    c["l1_w"] = nrm((f2, FEATURE_DIM)); c["l1_b"] = nrm((f2,), 0.05)
    c["bn1_scale"], c["bn1_shift"] = bn(f2)
    c["l2_w"] = nrm((f4, f2)); c["l2_b"] = nrm((f4,), 0.05)
    c["bn2_scale"], c["bn2_shift"] = bn(f4)
    c["l3_w"] = nrm((NUM_CLASSES, f4)); c["l3_b"] = nrm((NUM_CLASSES,), 0.05)
    p["clf"] = c
    return p


# ------------------------ host-side weight preparation (run once) --------------
def prepare_params(p):
    """Pre-transpose / fuse / fold weights into the kernel's native layout."""
    w = {}
    # patch embedding
    w["patch_w"] = p["W_P_w"].T                                   # [PATCH_LEN, D]
    w["patch_b"] = p["W_P_b"][None, :]                            # [1, D]
    # positional encoding expanded to patch-major rows (row r -> W_pos[r // BN_ROWS])
    w["w_pos"] = jnp.repeat(p["W_pos"], BN_ROWS, axis=0)          # [P*BN, D]

    layers = []
    for lp in p["layers"]:
        L = {}
        L["qkv_w"] = jnp.concatenate([lp["Wq_w"].T, lp["Wk_w"].T, lp["Wv_w"].T], axis=1)  # [D, 3D]
        L["qkv_b"] = jnp.concatenate([lp["Wq_b"], lp["Wk_b"], lp["Wv_b"]])[None, :]        # [1, 3D]
        L["wo_w"] = lp["Wo_w"].T                                  # [D, D]
        L["wo_b"] = lp["Wo_b"][None, :]
        L["bn1_s"] = lp["bn1_scale"][None, :]; L["bn1_t"] = lp["bn1_shift"][None, :]
        L["ff1_w"] = lp["ff1_w"].T; L["ff1_b"] = lp["ff1_b"][None, :]
        L["ff2_w"] = lp["ff2_w"].T; L["ff2_b"] = lp["ff2_b"][None, :]
        L["bn2_s"] = lp["bn2_scale"][None, :]; L["bn2_t"] = lp["bn2_shift"][None, :]
        layers.append(L)
    w["layers"] = layers

    # Flatten_Head: flatten index = d*PATCH_NUM + p  ->  per-patch blocks [D, PRED]
    hw = p["head_w"].reshape(PRED_LEN, D_MODEL, PATCH_NUM)        # [o, d, p]
    w["head_w"] = jnp.transpose(hw, (2, 1, 0)).reshape(PATCH_NUM * D_MODEL, PRED_LEN)
    w["head_b"] = p["head_b"][None, :]

    # channel mean pool (x.mean(dim=1)) as a matmul: feat[b] = mean_c y[b*C + c]
    pool = np.zeros((B, BN_ROWS), np.float32)
    for b in range(B):
        pool[b, b * C_IN:(b + 1) * C_IN] = 1.0 / C_IN
    w["pool"] = jnp.asarray(pool)

    # block-diagonal attention mask bias: rows r = p*BN + bn; same sample iff r % BN equal
    idx = np.arange(PATCH_NUM * BN_ROWS)
    same = (idx[:, None] % BN_ROWS) == (idx[None, :] % BN_ROWS)
    w["mask_bias"] = jnp.asarray(np.where(same, 0.0, NEG_INF).astype(np.float32))

    # MixedAttentionModule
    m = p["mixed"]
    w["m_v_w"] = m["Wv_w"].T; w["m_v_b"] = m["Wv_b"][None, :]
    w["m_o_w"] = m["Wo_w"].T; w["m_o_b"] = m["Wo_b"][None, :]
    # depthwise conv (centre tap only, padding=k//2 on a length-1 seq) folded with eval BN1
    dw_scale = m["dw_w"][:, 0, LOCAL_KERNEL // 2]
    w["m_l1_s"] = (dw_scale * m["lbn1_scale"])[None, :]
    w["m_l1_t"] = (m["dw_b"] * m["lbn1_scale"] + m["lbn1_shift"])[None, :]
    # 1x1 conv folded with eval BN2
    pw = m["pw_w"][:, :, 0]                                       # [out, in]
    w["m_l2_w"] = (pw * m["lbn2_scale"][:, None]).T               # [in, out]
    w["m_l2_b"] = (m["pw_b"] * m["lbn2_scale"] + m["lbn2_shift"])[None, :]
    w["m_f1_w"] = m["fus1_w"].T; w["m_f1_b"] = m["fus1_b"][None, :]
    w["m_fln_g"] = m["fus_ln_g"][None, :]; w["m_fln_b"] = m["fus_ln_b"][None, :]
    w["m_f2_w"] = m["fus2_w"].T; w["m_f2_b"] = m["fus2_b"][None, :]
    w["m_n_g"] = m["norm_g"][None, :]; w["m_n_b"] = m["norm_b"][None, :]

    # classifier with eval BatchNorms folded into the linears
    c = p["clf"]
    w["c1_w"] = c["l1_w"].T * c["bn1_scale"][None, :]
    w["c1_b"] = (c["l1_b"] * c["bn1_scale"] + c["bn1_shift"])[None, :]
    w["c2_w"] = c["l2_w"].T * c["bn2_scale"][None, :]
    w["c2_b"] = (c["l2_b"] * c["bn2_scale"] + c["bn2_shift"])[None, :]
    w["c3_w"] = c["l3_w"].T; w["c3_b"] = c["l3_b"][None, :]
    return w


# ------------------------------ forward (one pallas_call) ----------------------
def forward(prepped, x):
    """x: [B, 1, seq_len, enc_in] (PyTorch input before x.squeeze(1))."""
    xb = x[:, 0]                                     # squeeze(1)      -> [B, L, C]
    z = jnp.transpose(xb, (0, 2, 1))                 # permute(0,2,1)  -> [B, C, L]
    # patching: stride == patch_len, so torch.unfold is a pure reshape
    z = z.reshape(B, C_IN, PATCH_NUM, PATCH_LEN)
    # patch-major row ordering: row = p*(B*C) + b*C + c
    patches = jnp.transpose(z, (2, 0, 1, 3)).reshape(PATCH_NUM * B * C_IN, PATCH_LEN)

    flat, treedef = jax.tree_util.tree_flatten(prepped)
    return pl.pallas_call(
        functools.partial(_fused_forward_kernel, treedef=treedef),
        out_shape=jax.ShapeDtypeStruct((B, NUM_CLASSES), jnp.float32),
    )(patches, *flat)


# ----------------------------------- main --------------------------------------
if __name__ == "__main__":
    key = jax.random.PRNGKey(0)
    pkey, xkey = jax.random.split(key)
    params = init_params(pkey)
    prepped = prepare_params(params)        # one-time host-side weight prep
    x = jax.random.normal(xkey, (B, 1, SEQ_LEN, C_IN), jnp.float32)
    probs = jax.jit(forward)(prepped, x)
    jax.block_until_ready(probs)
    assert probs.shape == (B, NUM_CLASSES)
    assert bool(jnp.all(jnp.isfinite(probs)))
    assert bool(jnp.all(jnp.abs(jnp.sum(probs, axis=-1) - 1.0) < 1e-4))
    print("KERNEL_OK")
</pallas_src>

<mosaic_0001>
module attributes {stable_mosaic.version = 11 : i64} {
  func.func @_fused_forward_kernel(%arg0: memref<32x4xf32, #tpu.memory_space<vmem>>, %arg1: memref<1x4xf32, #tpu.memory_space<vmem>>, %arg2: memref<8x4xf32, #tpu.memory_space<vmem>>, %arg3: memref<1x2xf32, #tpu.memory_space<vmem>>, %arg4: memref<4x2xf32, #tpu.memory_space<vmem>>, %arg5: memref<1x3xf32, #tpu.memory_space<vmem>>, %arg6: memref<2x3xf32, #tpu.memory_space<vmem>>, %arg7: memref<1x8xf32, #tpu.memory_space<vmem>>, %arg8: memref<64x8xf32, #tpu.memory_space<vmem>>, %arg9: memref<1x16xf32, #tpu.memory_space<vmem>>, %arg10: memref<1x16xf32, #tpu.memory_space<vmem>>, %arg11: memref<1x16xf32, #tpu.memory_space<vmem>>, %arg12: memref<1x16xf32, #tpu.memory_space<vmem>>, %arg13: memref<1x32xf32, #tpu.memory_space<vmem>>, %arg14: memref<16x32xf32, #tpu.memory_space<vmem>>, %arg15: memref<1x16xf32, #tpu.memory_space<vmem>>, %arg16: memref<32x16xf32, #tpu.memory_space<vmem>>, %arg17: memref<1x48xf32, #tpu.memory_space<vmem>>, %arg18: memref<16x48xf32, #tpu.memory_space<vmem>>, %arg19: memref<1x16xf32, #tpu.memory_space<vmem>>, %arg20: memref<16x16xf32, #tpu.memory_space<vmem>>, %arg21: memref<1x16xf32, #tpu.memory_space<vmem>>, %arg22: memref<1x16xf32, #tpu.memory_space<vmem>>, %arg23: memref<1x16xf32, #tpu.memory_space<vmem>>, %arg24: memref<1x16xf32, #tpu.memory_space<vmem>>, %arg25: memref<1x32xf32, #tpu.memory_space<vmem>>, %arg26: memref<16x32xf32, #tpu.memory_space<vmem>>, %arg27: memref<1x16xf32, #tpu.memory_space<vmem>>, %arg28: memref<32x16xf32, #tpu.memory_space<vmem>>, %arg29: memref<1x48xf32, #tpu.memory_space<vmem>>, %arg30: memref<16x48xf32, #tpu.memory_space<vmem>>, %arg31: memref<1x16xf32, #tpu.memory_space<vmem>>, %arg32: memref<16x16xf32, #tpu.memory_space<vmem>>, %arg33: memref<1x512xf32, #tpu.memory_space<vmem>>, %arg34: memref<16x512xf32, #tpu.memory_space<vmem>>, %arg35: memref<1x8xf32, #tpu.memory_space<vmem>>, %arg36: memref<512x8xf32, #tpu.memory_space<vmem>>, %arg37: memref<1x512xf32, #tpu.memory_space<vmem>>, %arg38: memref<1x512xf32, #tpu.memory_space<vmem>>, %arg39: memref<1x8xf32, #tpu.memory_space<vmem>>, %arg40: memref<1x8xf32, #tpu.memory_space<vmem>>, %arg41: memref<1x8xf32, #tpu.memory_space<vmem>>, %arg42: memref<8x8xf32, #tpu.memory_space<vmem>>, %arg43: memref<1x8xf32, #tpu.memory_space<vmem>>, %arg44: memref<1x8xf32, #tpu.memory_space<vmem>>, %arg45: memref<1x8xf32, #tpu.memory_space<vmem>>, %arg46: memref<8x8xf32, #tpu.memory_space<vmem>>, %arg47: memref<1x8xf32, #tpu.memory_space<vmem>>, %arg48: memref<8x8xf32, #tpu.memory_space<vmem>>, %arg49: memref<32x32xf32, #tpu.memory_space<vmem>>, %arg50: memref<1x16xf32, #tpu.memory_space<vmem>>, %arg51: memref<4x16xf32, #tpu.memory_space<vmem>>, %arg52: memref<2x8xf32, #tpu.memory_space<vmem>>, %arg53: memref<32x16xf32, #tpu.memory_space<vmem>>, %arg54: memref<2x3xf32, #tpu.memory_space<vmem>>) attributes {dimension_semantics = [], scalar_prefetch = 0 : i64, scratch_operands = 0 : i64, tpu.core_type = #tpu.core_type<tc>} {
    %c0 = arith.constant 0 : index
    %c0_0 = arith.constant 0 : index
    %0 = vector.load %arg1[%c0, %c0_0] : memref<1x4xf32, #tpu.memory_space<vmem>>, vector<1x4xf32>
    %c0_1 = arith.constant 0 : index
    %c0_2 = arith.constant 0 : index
    %1 = vector.load %arg2[%c0_1, %c0_2] : memref<8x4xf32, #tpu.memory_space<vmem>>, vector<8x4xf32>
    %c0_3 = arith.constant 0 : index
    %c0_4 = arith.constant 0 : index
    %2 = vector.load %arg3[%c0_3, %c0_4] : memref<1x2xf32, #tpu.memory_space<vmem>>, vector<1x2xf32>
    %c0_5 = arith.constant 0 : index
    %c0_6 = arith.constant 0 : index
    %3 = vector.load %arg4[%c0_5, %c0_6] : memref<4x2xf32, #tpu.memory_space<vmem>>, vector<4x2xf32>
    %c0_7 = arith.constant 0 : index
    %c0_8 = arith.constant 0 : index
    %4 = vector.load %arg5[%c0_7, %c0_8] : memref<1x3xf32, #tpu.memory_space<vmem>>, vector<1x3xf32>
    %c0_9 = arith.constant 0 : index
    %c0_10 = arith.constant 0 : index
    %5 = vector.load %arg6[%c0_9, %c0_10] : memref<2x3xf32, #tpu.memory_space<vmem>>, vector<2x3xf32>
    %c0_11 = arith.constant 0 : index
    %c0_12 = arith.constant 0 : index
    %6 = vector.load %arg7[%c0_11, %c0_12] : memref<1x8xf32, #tpu.memory_space<vmem>>, vector<1x8xf32>
    %c0_13 = arith.constant 0 : index
    %c0_14 = arith.constant 0 : index
    %7 = vector.load %arg8[%c0_13, %c0_14] : memref<64x8xf32, #tpu.memory_space<vmem>>, vector<64x8xf32>
    %c0_15 = arith.constant 0 : index
    %c0_16 = arith.constant 0 : index
    %8 = vector.load %arg9[%c0_15, %c0_16] : memref<1x16xf32, #tpu.memory_space<vmem>>, vector<1x16xf32>
    %c0_17 = arith.constant 0 : index
    %c0_18 = arith.constant 0 : index
    %9 = vector.load %arg10[%c0_17, %c0_18] : memref<1x16xf32, #tpu.memory_space<vmem>>, vector<1x16xf32>
    %c0_19 = arith.constant 0 : index
    %c0_20 = arith.constant 0 : index
    %10 = vector.load %arg11[%c0_19, %c0_20] : memref<1x16xf32, #tpu.memory_space<vmem>>, vector<1x16xf32>
    %c0_21 = arith.constant 0 : index
    %c0_22 = arith.constant 0 : index
    %11 = vector.load %arg12[%c0_21, %c0_22] : memref<1x16xf32, #tpu.memory_space<vmem>>, vector<1x16xf32>
    %c0_23 = arith.constant 0 : index
    %c0_24 = arith.constant 0 : index
    %12 = vector.load %arg13[%c0_23, %c0_24] : memref<1x32xf32, #tpu.memory_space<vmem>>, vector<1x32xf32>
    %c0_25 = arith.constant 0 : index
    %c0_26 = arith.constant 0 : index
    %13 = vector.load %arg14[%c0_25, %c0_26] : memref<16x32xf32, #tpu.memory_space<vmem>>, vector<16x32xf32>
    %c0_27 = arith.constant 0 : index
    %c0_28 = arith.constant 0 : index
    %14 = vector.load %arg15[%c0_27, %c0_28] : memref<1x16xf32, #tpu.memory_space<vmem>>, vector<1x16xf32>
    %c0_29 = arith.constant 0 : index
    %c0_30 = arith.constant 0 : index
    %15 = vector.load %arg16[%c0_29, %c0_30] : memref<32x16xf32, #tpu.memory_space<vmem>>, vector<32x16xf32>
    %c0_31 = arith.constant 0 : index
    %c0_32 = arith.constant 0 : index
    %16 = vector.load %arg17[%c0_31, %c0_32] : memref<1x48xf32, #tpu.memory_space<vmem>>, vector<1x48xf32>
    %c0_33 = arith.constant 0 : index
    %c0_34 = arith.constant 0 : index
    %17 = vector.load %arg18[%c0_33, %c0_34] : memref<16x48xf32, #tpu.memory_space<vmem>>, vector<16x48xf32>
    %c0_35 = arith.constant 0 : index
    %c0_36 = arith.constant 0 : index
    %18 = vector.load %arg19[%c0_35, %c0_36] : memref<1x16xf32, #tpu.memory_space<vmem>>, vector<1x16xf32>
    %c0_37 = arith.constant 0 : index
    %c0_38 = arith.constant 0 : index
    %19 = vector.load %arg20[%c0_37, %c0_38] : memref<16x16xf32, #tpu.memory_space<vmem>>, vector<16x16xf32>
    %c0_39 = arith.constant 0 : index
    %c0_40 = arith.constant 0 : index
    %20 = vector.load %arg21[%c0_39, %c0_40] : memref<1x16xf32, #tpu.memory_space<vmem>>, vector<1x16xf32>
    %c0_41 = arith.constant 0 : index
    %c0_42 = arith.constant 0 : index
    %21 = vector.load %arg22[%c0_41, %c0_42] : memref<1x16xf32, #tpu.memory_space<vmem>>, vector<1x16xf32>
    %c0_43 = arith.constant 0 : index
    %c0_44 = arith.constant 0 : index
    %22 = vector.load %arg23[%c0_43, %c0_44] : memref<1x16xf32, #tpu.memory_space<vmem>>, vector<1x16xf32>
    %c0_45 = arith.constant 0 : index
    %c0_46 = arith.constant 0 : index
    %23 = vector.load %arg24[%c0_45, %c0_46] : memref<1x16xf32, #tpu.memory_space<vmem>>, vector<1x16xf32>
    %c0_47 = arith.constant 0 : index
    %c0_48 = arith.constant 0 : index
    %24 = vector.load %arg25[%c0_47, %c0_48] : memref<1x32xf32, #tpu.memory_space<vmem>>, vector<1x32xf32>
    %c0_49 = arith.constant 0 : index
    %c0_50 = arith.constant 0 : index
    %25 = vector.load %arg26[%c0_49, %c0_50] : memref<16x32xf32, #tpu.memory_space<vmem>>, vector<16x32xf32>
    %c0_51 = arith.constant 0 : index
    %c0_52 = arith.constant 0 : index
    %26 = vector.load %arg27[%c0_51, %c0_52] : memref<1x16xf32, #tpu.memory_space<vmem>>, vector<1x16xf32>
    %c0_53 = arith.constant 0 : index
    %c0_54 = arith.constant 0 : index
    %27 = vector.load %arg28[%c0_53, %c0_54] : memref<32x16xf32, #tpu.memory_space<vmem>>, vector<32x16xf32>
    %c0_55 = arith.constant 0 : index
    %c0_56 = arith.constant 0 : index
    %28 = vector.load %arg29[%c0_55, %c0_56] : memref<1x48xf32, #tpu.memory_space<vmem>>, vector<1x48xf32>
    %c0_57 = arith.constant 0 : index
    %c0_58 = arith.constant 0 : index
    %29 = vector.load %arg30[%c0_57, %c0_58] : memref<16x48xf32, #tpu.memory_space<vmem>>, vector<16x48xf32>
    %c0_59 = arith.constant 0 : index
    %c0_60 = arith.constant 0 : index
    %30 = vector.load %arg31[%c0_59, %c0_60] : memref<1x16xf32, #tpu.memory_space<vmem>>, vector<1x16xf32>
    %c0_61 = arith.constant 0 : index
    %c0_62 = arith.constant 0 : index
    %31 = vector.load %arg32[%c0_61, %c0_62] : memref<16x16xf32, #tpu.memory_space<vmem>>, vector<16x16xf32>
    %c0_63 = arith.constant 0 : index
    %c0_64 = arith.constant 0 : index
    %32 = vector.load %arg33[%c0_63, %c0_64] : memref<1x512xf32, #tpu.memory_space<vmem>>, vector<1x512xf32>
    %c0_65 = arith.constant 0 : index
    %c0_66 = arith.constant 0 : index
    %33 = vector.load %arg34[%c0_65, %c0_66] : memref<16x512xf32, #tpu.memory_space<vmem>>, vector<16x512xf32>
    %c0_67 = arith.constant 0 : index
    %c0_68 = arith.constant 0 : index
    %34 = vector.load %arg35[%c0_67, %c0_68] : memref<1x8xf32, #tpu.memory_space<vmem>>, vector<1x8xf32>
    %c0_69 = arith.constant 0 : index
    %c0_70 = arith.constant 0 : index
    %35 = vector.load %arg36[%c0_69, %c0_70] : memref<512x8xf32, #tpu.memory_space<vmem>>, vector<512x8xf32>
    %c0_71 = arith.constant 0 : index
    %c0_72 = arith.constant 0 : index
    %36 = vector.load %arg37[%c0_71, %c0_72] : memref<1x512xf32, #tpu.memory_space<vmem>>, vector<1x512xf32>
    %c0_73 = arith.constant 0 : index
    %c0_74 = arith.constant 0 : index
    %37 = vector.load %arg38[%c0_73, %c0_74] : memref<1x512xf32, #tpu.memory_space<vmem>>, vector<1x512xf32>
    %c0_75 = arith.constant 0 : index
    %c0_76 = arith.constant 0 : index
    %38 = vector.load %arg39[%c0_75, %c0_76] : memref<1x8xf32, #tpu.memory_space<vmem>>, vector<1x8xf32>
    %c0_77 = arith.constant 0 : index
    %c0_78 = arith.constant 0 : index
    %39 = vector.load %arg40[%c0_77, %c0_78] : memref<1x8xf32, #tpu.memory_space<vmem>>, vector<1x8xf32>
    %c0_79 = arith.constant 0 : index
    %c0_80 = arith.constant 0 : index
    %40 = vector.load %arg41[%c0_79, %c0_80] : memref<1x8xf32, #tpu.memory_space<vmem>>, vector<1x8xf32>
    %c0_81 = arith.constant 0 : index
    %c0_82 = arith.constant 0 : index
    %41 = vector.load %arg42[%c0_81, %c0_82] : memref<8x8xf32, #tpu.memory_space<vmem>>, vector<8x8xf32>
    %c0_83 = arith.constant 0 : index
    %c0_84 = arith.constant 0 : index
    %42 = vector.load %arg43[%c0_83, %c0_84] : memref<1x8xf32, #tpu.memory_space<vmem>>, vector<1x8xf32>
    %c0_85 = arith.constant 0 : index
    %c0_86 = arith.constant 0 : index
    %43 = vector.load %arg44[%c0_85, %c0_86] : memref<1x8xf32, #tpu.memory_space<vmem>>, vector<1x8xf32>
    %c0_87 = arith.constant 0 : index
    %c0_88 = arith.constant 0 : index
    %44 = vector.load %arg45[%c0_87, %c0_88] : memref<1x8xf32, #tpu.memory_space<vmem>>, vector<1x8xf32>
    %c0_89 = arith.constant 0 : index
    %c0_90 = arith.constant 0 : index
    %45 = vector.load %arg46[%c0_89, %c0_90] : memref<8x8xf32, #tpu.memory_space<vmem>>, vector<8x8xf32>
    %c0_91 = arith.constant 0 : index
    %c0_92 = arith.constant 0 : index
    %46 = vector.load %arg47[%c0_91, %c0_92] : memref<1x8xf32, #tpu.memory_space<vmem>>, vector<1x8xf32>
    %c0_93 = arith.constant 0 : index
    %c0_94 = arith.constant 0 : index
    %47 = vector.load %arg48[%c0_93, %c0_94] : memref<8x8xf32, #tpu.memory_space<vmem>>, vector<8x8xf32>
    %c0_95 = arith.constant 0 : index
    %c0_96 = arith.constant 0 : index
    %48 = vector.load %arg49[%c0_95, %c0_96] : memref<32x32xf32, #tpu.memory_space<vmem>>, vector<32x32xf32>
    %c0_97 = arith.constant 0 : index
    %c0_98 = arith.constant 0 : index
    %49 = vector.load %arg50[%c0_97, %c0_98] : memref<1x16xf32, #tpu.memory_space<vmem>>, vector<1x16xf32>
    %c0_99 = arith.constant 0 : index
    %c0_100 = arith.constant 0 : index
    %50 = vector.load %arg51[%c0_99, %c0_100] : memref<4x16xf32, #tpu.memory_space<vmem>>, vector<4x16xf32>
    %c0_101 = arith.constant 0 : index
    %c0_102 = arith.constant 0 : index
    %51 = vector.load %arg52[%c0_101, %c0_102] : memref<2x8xf32, #tpu.memory_space<vmem>>, vector<2x8xf32>
    %c0_103 = arith.constant 0 : index
    %c0_104 = arith.constant 0 : index
    %52 = vector.load %arg53[%c0_103, %c0_104] : memref<32x16xf32, #tpu.memory_space<vmem>>, vector<32x16xf32>
    %c0_105 = arith.constant 0 : index
    %c0_106 = arith.constant 0 : index
    %53 = vector.load %arg0[%c0_105, %c0_106] : memref<32x4xf32, #tpu.memory_space<vmem>>, vector<32x4xf32>
    %cst = arith.constant dense<0.000000e+00> : vector<32x16xf32>
    %54 = tpu.matmul %53, %50, %cst {dimension_numbers = #tpu.dot_dimension_numbers<[1], [0], [0], [1], [0, 0, 1, 1], [], []>} : vector<32x4xf32>, vector<4x16xf32>, vector<32x16xf32> -> vector<32x16xf32>
    %55 = vector.broadcast %49 : vector<1x16xf32> to vector<32x16xf32>
    %56 = arith.addf %54, %55 : vector<32x16xf32>
    %57 = arith.addf %56, %52 : vector<32x16xf32>
    %cst_107 = arith.constant dense<0.000000e+00> : vector<32x48xf32>
    %58 = tpu.matmul %57, %17, %cst_107 {dimension_numbers = #tpu.dot_dimension_numbers<[1], [0], [0], [1], [0, 0, 1, 1], [], []>} : vector<32x16xf32>, vector<16x48xf32>, vector<32x48xf32> -> vector<32x48xf32>
    %59 = vector.broadcast %16 : vector<1x48xf32> to vector<32x48xf32>
    %60 = arith.addf %58, %59 : vector<32x48xf32>
    %61 = vector.extract_strided_slice %60 {offsets = [0, 0], sizes = [32, 8], strides = [1, 1]} : vector<32x48xf32> to vector<32x8xf32>
    %62 = vector.extract_strided_slice %60 {offsets = [0, 16], sizes = [32, 8], strides = [1, 1]} : vector<32x48xf32> to vector<32x8xf32>
    %63 = vector.extract_strided_slice %60 {offsets = [0, 32], sizes = [32, 8], strides = [1, 1]} : vector<32x48xf32> to vector<32x8xf32>
    %cst_108 = arith.constant dense<0.000000e+00> : vector<32x32xf32>
    %64 = tpu.matmul %61, %62, %cst_108 {dimension_numbers = #tpu.dot_dimension_numbers<[1], [1], [0], [0], [0, 0, 1, 0], [], []>} : vector<32x8xf32>, vector<32x8xf32>, vector<32x32xf32> -> vector<32x32xf32>
    %cst_109 = arith.constant 0.353553385 : f32
    %65 = vector.broadcast %cst_109 : f32 to vector<32x32xf32>
    %66 = arith.mulf %64, %65 : vector<32x32xf32>
    %67 = arith.addf %66, %48 : vector<32x32xf32>
    %cst_110 = arith.constant dense<0xFF800000> : vector<32xf32>
    %68 = vector.multi_reduction <maximumf>, %67, %cst_110 [1] : vector<32x32xf32> to vector<32xf32>
    %69 = vector.shape_cast %68 : vector<32xf32> to vector<32x1xf32>
    %70 = vector.broadcast %69 : vector<32x1xf32> to vector<32x32xf32>
    %71 = arith.subf %67, %70 : vector<32x32xf32>
    %72 = math.exp %71 : vector<32x32xf32>
    %cst_111 = arith.constant dense<0.000000e+00> : vector<32xf32>
    %73 = vector.multi_reduction <add>, %72, %cst_111 [1] : vector<32x32xf32> to vector<32xf32>
    %74 = vector.shape_cast %73 : vector<32xf32> to vector<32x1xf32>
    %75 = vector.broadcast %74 : vector<32x1xf32> to vector<32x32xf32>
    %76 = arith.divf %72, %75 : vector<32x32xf32>
    %cst_112 = arith.constant dense<0.000000e+00> : vector<32x8xf32>
    %77 = tpu.matmul %76, %63, %cst_112 {dimension_numbers = #tpu.dot_dimension_numbers<[1], [0], [0], [1], [0, 0, 1, 1], [], []>} : vector<32x32xf32>, vector<32x8xf32>, vector<32x8xf32> -> vector<32x8xf32>
    %78 = vector.extract_strided_slice %19 {offsets = [0, 0], sizes = [8, 16], strides = [1, 1]} : vector<16x16xf32> to vector<8x16xf32>
    %cst_113 = arith.constant dense<0.000000e+00> : vector<32x16xf32>
    %79 = tpu.matmul %77, %78, %cst_113 {dimension_numbers = #tpu.dot_dimension_numbers<[1], [0], [0], [1], [0, 0, 1, 1], [], []>} : vector<32x8xf32>, vector<8x16xf32>, vector<32x16xf32> -> vector<32x16xf32>
    %80 = vector.extract_strided_slice %60 {offsets = [0, 8], sizes = [32, 8], strides = [1, 1]} : vector<32x48xf32> to vector<32x8xf32>
    %81 = vector.extract_strided_slice %60 {offsets = [0, 24], sizes = [32, 8], strides = [1, 1]} : vector<32x48xf32> to vector<32x8xf32>
    %82 = vector.extract_strided_slice %60 {offsets = [0, 40], sizes = [32, 8], strides = [1, 1]} : vector<32x48xf32> to vector<32x8xf32>
    %cst_114 = arith.constant dense<0.000000e+00> : vector<32x32xf32>
    %83 = tpu.matmul %80, %81, %cst_114 {dimension_numbers = #tpu.dot_dimension_numbers<[1], [1], [0], [0], [0, 0, 1, 0], [], []>} : vector<32x8xf32>, vector<32x8xf32>, vector<32x32xf32> -> vector<32x32xf32>
    %cst_115 = arith.constant 0.353553385 : f32
    %84 = vector.broadcast %cst_115 : f32 to vector<32x32xf32>
    %85 = arith.mulf %83, %84 : vector<32x32xf32>
    %86 = arith.addf %85, %48 : vector<32x32xf32>
    %cst_116 = arith.constant dense<0xFF800000> : vector<32xf32>
    %87 = vector.multi_reduction <maximumf>, %86, %cst_116 [1] : vector<32x32xf32> to vector<32xf32>
    %88 = vector.shape_cast %87 : vector<32xf32> to vector<32x1xf32>
    %89 = vector.broadcast %88 : vector<32x1xf32> to vector<32x32xf32>
    %90 = arith.subf %86, %89 : vector<32x32xf32>
    %91 = math.exp %90 : vector<32x32xf32>
    %cst_117 = arith.constant dense<0.000000e+00> : vector<32xf32>
    %92 = vector.multi_reduction <add>, %91, %cst_117 [1] : vector<32x32xf32> to vector<32xf32>
    %93 = vector.shape_cast %92 : vector<32xf32> to vector<32x1xf32>
    %94 = vector.broadcast %93 : vector<32x1xf32> to vector<32x32xf32>
    %95 = arith.divf %91, %94 : vector<32x32xf32>
    %cst_118 = arith.constant dense<0.000000e+00> : vector<32x8xf32>
    %96 = tpu.matmul %95, %82, %cst_118 {dimension_numbers = #tpu.dot_dimension_numbers<[1], [0], [0], [1], [0, 0, 1, 1], [], []>} : vector<32x32xf32>, vector<32x8xf32>, vector<32x8xf32> -> vector<32x8xf32>
    %97 = vector.extract_strided_slice %19 {offsets = [8, 0], sizes = [8, 16], strides = [1, 1]} : vector<16x16xf32> to vector<8x16xf32>
    %cst_119 = arith.constant dense<0.000000e+00> : vector<32x16xf32>
    %98 = tpu.matmul %96, %97, %cst_119 {dimension_numbers = #tpu.dot_dimension_numbers<[1], [0], [0], [1], [0, 0, 1, 1], [], []>} : vector<32x8xf32>, vector<8x16xf32>, vector<32x16xf32> -> vector<32x16xf32>
    %99 = arith.addf %79, %98 : vector<32x16xf32>
    %100 = arith.addf %57, %99 : vector<32x16xf32>
    %101 = vector.broadcast %18 : vector<1x16xf32> to vector<32x16xf32>
    %102 = arith.addf %100, %101 : vector<32x16xf32>
    %103 = vector.broadcast %8 : vector<1x16xf32> to vector<32x16xf32>
    %104 = arith.mulf %102, %103 : vector<32x16xf32>
    %105 = vector.broadcast %9 : vector<1x16xf32> to vector<32x16xf32>
    %106 = arith.addf %104, %105 : vector<32x16xf32>
    %cst_120 = arith.constant dense<0.000000e+00> : vector<32x32xf32>
    %107 = tpu.matmul %106, %13, %cst_120 {dimension_numbers = #tpu.dot_dimension_numbers<[1], [0], [0], [1], [0, 0, 1, 1], [], []>} : vector<32x16xf32>, vector<16x32xf32>, vector<32x32xf32> -> vector<32x32xf32>
    %108 = vector.broadcast %12 : vector<1x32xf32> to vector<32x32xf32>
    %109 = arith.addf %107, %108 : vector<32x32xf32>
    %cst_121 = arith.constant 0.707106769 : f32
    %110 = vector.broadcast %cst_121 : f32 to vector<32x32xf32>
    %111 = arith.mulf %109, %110 : vector<32x32xf32>
    %112 = math.absf %111 : vector<32x32xf32>
    %cst_122 = arith.constant 0.327591091 : f32
    %113 = vector.broadcast %cst_122 : f32 to vector<32x32xf32>
    %114 = arith.mulf %113, %112 : vector<32x32xf32>
    %cst_123 = arith.constant 1.000000e+00 : f32
    %115 = vector.broadcast %cst_123 : f32 to vector<32x32xf32>
    %116 = arith.addf %115, %114 : vector<32x32xf32>
    %cst_124 = arith.constant 1.000000e+00 : f32
    %117 = vector.broadcast %cst_124 : f32 to vector<32x32xf32>
    %118 = arith.divf %117, %116 : vector<32x32xf32>
    %cst_125 = arith.constant 1.06140542 : f32
    %119 = vector.broadcast %cst_125 : f32 to vector<32x32xf32>
    %120 = arith.mulf %119, %118 : vector<32x32xf32>
    %cst_126 = arith.constant -1.45315206 : f32
    %121 = vector.broadcast %cst_126 : f32 to vector<32x32xf32>
    %122 = arith.addf %120, %121 : vector<32x32xf32>
    %123 = arith.mulf %122, %118 : vector<32x32xf32>
    %cst_127 = arith.constant 1.42141378 : f32
    %124 = vector.broadcast %cst_127 : f32 to vector<32x32xf32>
    %125 = arith.addf %123, %124 : vector<32x32xf32>
    %126 = arith.mulf %125, %118 : vector<32x32xf32>
    %cst_128 = arith.constant -0.284496725 : f32
    %127 = vector.broadcast %cst_128 : f32 to vector<32x32xf32>
    %128 = arith.addf %126, %127 : vector<32x32xf32>
    %129 = arith.mulf %128, %118 : vector<32x32xf32>
    %cst_129 = arith.constant 0.254829586 : f32
    %130 = vector.broadcast %cst_129 : f32 to vector<32x32xf32>
    %131 = arith.addf %129, %130 : vector<32x32xf32>
    %132 = arith.mulf %131, %118 : vector<32x32xf32>
    %cst_130 = arith.constant 0.000000e+00 : f32
    %133 = vector.broadcast %cst_130 : f32 to vector<32x32xf32>
    %134 = arith.subf %133, %112 : vector<32x32xf32>
    %135 = arith.mulf %134, %112 : vector<32x32xf32>
    %136 = math.exp %135 : vector<32x32xf32>
    %137 = arith.mulf %132, %136 : vector<32x32xf32>
    %cst_131 = arith.constant 1.000000e+00 : f32
    %138 = vector.broadcast %cst_131 : f32 to vector<32x32xf32>
    %139 = arith.subf %138, %137 : vector<32x32xf32>
    %cst_132 = arith.constant 0.000000e+00 : f32
    %140 = vector.broadcast %cst_132 : f32 to vector<32x32xf32>
    %141 = arith.cmpf oge, %111, %140 : vector<32x32xf32>
    %cst_133 = arith.constant 0.000000e+00 : f32
    %142 = vector.broadcast %cst_133 : f32 to vector<32x32xf32>
    %143 = arith.subf %142, %139 : vector<32x32xf32>
    %144 = arith.select %141, %139, %143 : vector<32x32xi1>, vector<32x32xf32>
    %cst_134 = arith.constant 5.000000e-01 : f32
    %145 = vector.broadcast %cst_134 : f32 to vector<32x32xf32>
    %146 = arith.mulf %145, %109 : vector<32x32xf32>
    %cst_135 = arith.constant 1.000000e+00 : f32
    %147 = vector.broadcast %cst_135 : f32 to vector<32x32xf32>
    %148 = arith.addf %147, %144 : vector<32x32xf32>
    %149 = arith.mulf %146, %148 : vector<32x32xf32>
    %cst_136 = arith.constant dense<0.000000e+00> : vector<32x16xf32>
    %150 = tpu.matmul %149, %15, %cst_136 {dimension_numbers = #tpu.dot_dimension_numbers<[1], [0], [0], [1], [0, 0, 1, 1], [], []>} : vector<32x32xf32>, vector<32x16xf32>, vector<32x16xf32> -> vector<32x16xf32>
    %151 = vector.broadcast %14 : vector<1x16xf32> to vector<32x16xf32>
    %152 = arith.addf %150, %151 : vector<32x16xf32>
    %153 = arith.addf %106, %152 : vector<32x16xf32>
    %154 = vector.broadcast %10 : vector<1x16xf32> to vector<32x16xf32>
    %155 = arith.mulf %153, %154 : vector<32x16xf32>
    %156 = vector.broadcast %11 : vector<1x16xf32> to vector<32x16xf32>
    %157 = arith.addf %155, %156 : vector<32x16xf32>
    %cst_137 = arith.constant dense<0.000000e+00> : vector<32x48xf32>
    %158 = tpu.matmul %157, %29, %cst_137 {dimension_numbers = #tpu.dot_dimension_numbers<[1], [0], [0], [1], [0, 0, 1, 1], [], []>} : vector<32x16xf32>, vector<16x48xf32>, vector<32x48xf32> -> vector<32x48xf32>
    %159 = vector.broadcast %28 : vector<1x48xf32> to vector<32x48xf32>
    %160 = arith.addf %158, %159 : vector<32x48xf32>
    %161 = vector.extract_strided_slice %160 {offsets = [0, 0], sizes = [32, 8], strides = [1, 1]} : vector<32x48xf32> to vector<32x8xf32>
    %162 = vector.extract_strided_slice %160 {offsets = [0, 16], sizes = [32, 8], strides = [1, 1]} : vector<32x48xf32> to vector<32x8xf32>
    %163 = vector.extract_strided_slice %160 {offsets = [0, 32], sizes = [32, 8], strides = [1, 1]} : vector<32x48xf32> to vector<32x8xf32>
    %cst_138 = arith.constant dense<0.000000e+00> : vector<32x32xf32>
    %164 = tpu.matmul %161, %162, %cst_138 {dimension_numbers = #tpu.dot_dimension_numbers<[1], [1], [0], [0], [0, 0, 1, 0], [], []>} : vector<32x8xf32>, vector<32x8xf32>, vector<32x32xf32> -> vector<32x32xf32>
    %cst_139 = arith.constant 0.353553385 : f32
    %165 = vector.broadcast %cst_139 : f32 to vector<32x32xf32>
    %166 = arith.mulf %164, %165 : vector<32x32xf32>
    %167 = arith.addf %166, %66 : vector<32x32xf32>
    %168 = arith.addf %167, %48 : vector<32x32xf32>
    %cst_140 = arith.constant dense<0xFF800000> : vector<32xf32>
    %169 = vector.multi_reduction <maximumf>, %168, %cst_140 [1] : vector<32x32xf32> to vector<32xf32>
    %170 = vector.shape_cast %169 : vector<32xf32> to vector<32x1xf32>
    %171 = vector.broadcast %170 : vector<32x1xf32> to vector<32x32xf32>
    %172 = arith.subf %168, %171 : vector<32x32xf32>
    %173 = math.exp %172 : vector<32x32xf32>
    %cst_141 = arith.constant dense<0.000000e+00> : vector<32xf32>
    %174 = vector.multi_reduction <add>, %173, %cst_141 [1] : vector<32x32xf32> to vector<32xf32>
    %175 = vector.shape_cast %174 : vector<32xf32> to vector<32x1xf32>
    %176 = vector.broadcast %175 : vector<32x1xf32> to vector<32x32xf32>
    %177 = arith.divf %173, %176 : vector<32x32xf32>
    %cst_142 = arith.constant dense<0.000000e+00> : vector<32x8xf32>
    %178 = tpu.matmul %177, %163, %cst_142 {dimension_numbers = #tpu.dot_dimension_numbers<[1], [0], [0], [1], [0, 0, 1, 1], [], []>} : vector<32x32xf32>, vector<32x8xf32>, vector<32x8xf32> -> vector<32x8xf32>
    %179 = vector.extract_strided_slice %31 {offsets = [0, 0], sizes = [8, 16], strides = [1, 1]} : vector<16x16xf32> to vector<8x16xf32>
    %cst_143 = arith.constant dense<0.000000e+00> : vector<32x16xf32>
    %180 = tpu.matmul %178, %179, %cst_143 {dimension_numbers = #tpu.dot_dimension_numbers<[1], [0], [0], [1], [0, 0, 1, 1], [], []>} : vector<32x8xf32>, vector<8x16xf32>, vector<32x16xf32> -> vector<32x16xf32>
    %181 = vector.extract_strided_slice %160 {offsets = [0, 8], sizes = [32, 8], strides = [1, 1]} : vector<32x48xf32> to vector<32x8xf32>
    %182 = vector.extract_strided_slice %160 {offsets = [0, 24], sizes = [32, 8], strides = [1, 1]} : vector<32x48xf32> to vector<32x8xf32>
    %183 = vector.extract_strided_slice %160 {offsets = [0, 40], sizes = [32, 8], strides = [1, 1]} : vector<32x48xf32> to vector<32x8xf32>
    %cst_144 = arith.constant dense<0.000000e+00> : vector<32x32xf32>
    %184 = tpu.matmul %181, %182, %cst_144 {dimension_numbers = #tpu.dot_dimension_numbers<[1], [1], [0], [0], [0, 0, 1, 0], [], []>} : vector<32x8xf32>, vector<32x8xf32>, vector<32x32xf32> -> vector<32x32xf32>
    %cst_145 = arith.constant 0.353553385 : f32
    %185 = vector.broadcast %cst_145 : f32 to vector<32x32xf32>
    %186 = arith.mulf %184, %185 : vector<32x32xf32>
    %187 = arith.addf %186, %85 : vector<32x32xf32>
    %188 = arith.addf %187, %48 : vector<32x32xf32>
    %cst_146 = arith.constant dense<0xFF800000> : vector<32xf32>
    %189 = vector.multi_reduction <maximumf>, %188, %cst_146 [1] : vector<32x32xf32> to vector<32xf32>
    %190 = vector.shape_cast %189 : vector<32xf32> to vector<32x1xf32>
    %191 = vector.broadcast %190 : vector<32x1xf32> to vector<32x32xf32>
    %192 = arith.subf %188, %191 : vector<32x32xf32>
    %193 = math.exp %192 : vector<32x32xf32>
    %cst_147 = arith.constant dense<0.000000e+00> : vector<32xf32>
    %194 = vector.multi_reduction <add>, %193, %cst_147 [1] : vector<32x32xf32> to vector<32xf32>
    %195 = vector.shape_cast %194 : vector<32xf32> to vector<32x1xf32>
    %196 = vector.broadcast %195 : vector<32x1xf32> to vector<32x32xf32>
    %197 = arith.divf %193, %196 : vector<32x32xf32>
    %cst_148 = arith.constant dense<0.000000e+00> : vector<32x8xf32>
    %198 = tpu.matmul %197, %183, %cst_148 {dimension_numbers = #tpu.dot_dimension_numbers<[1], [0], [0], [1], [0, 0, 1, 1], [], []>} : vector<32x32xf32>, vector<32x8xf32>, vector<32x8xf32> -> vector<32x8xf32>
    %199 = vector.extract_strided_slice %31 {offsets = [8, 0], sizes = [8, 16], strides = [1, 1]} : vector<16x16xf32> to vector<8x16xf32>
    %cst_149 = arith.constant dense<0.000000e+00> : vector<32x16xf32>
    %200 = tpu.matmul %198, %199, %cst_149 {dimension_numbers = #tpu.dot_dimension_numbers<[1], [0], [0], [1], [0, 0, 1, 1], [], []>} : vector<32x8xf32>, vector<8x16xf32>, vector<32x16xf32> -> vector<32x16xf32>
    %201 = arith.addf %180, %200 : vector<32x16xf32>
    %202 = arith.addf %157, %201 : vector<32x16xf32>
    %203 = vector.broadcast %30 : vector<1x16xf32> to vector<32x16xf32>
    %204 = arith.addf %202, %203 : vector<32x16xf32>
    %205 = vector.broadcast %20 : vector<1x16xf32> to vector<32x16xf32>
    %206 = arith.mulf %204, %205 : vector<32x16xf32>
    %207 = vector.broadcast %21 : vector<1x16xf32> to vector<32x16xf32>
    %208 = arith.addf %206, %207 : vector<32x16xf32>
    %cst_150 = arith.constant dense<0.000000e+00> : vector<32x32xf32>
    %209 = tpu.matmul %208, %25, %cst_150 {dimension_numbers = #tpu.dot_dimension_numbers<[1], [0], [0], [1], [0, 0, 1, 1], [], []>} : vector<32x16xf32>, vector<16x32xf32>, vector<32x32xf32> -> vector<32x32xf32>
    %210 = vector.broadcast %24 : vector<1x32xf32> to vector<32x32xf32>
    %211 = arith.addf %209, %210 : vector<32x32xf32>
    %cst_151 = arith.constant 0.707106769 : f32
    %212 = vector.broadcast %cst_151 : f32 to vector<32x32xf32>
    %213 = arith.mulf %211, %212 : vector<32x32xf32>
    %214 = math.absf %213 : vector<32x32xf32>
    %cst_152 = arith.constant 0.327591091 : f32
    %215 = vector.broadcast %cst_152 : f32 to vector<32x32xf32>
    %216 = arith.mulf %215, %214 : vector<32x32xf32>
    %cst_153 = arith.constant 1.000000e+00 : f32
    %217 = vector.broadcast %cst_153 : f32 to vector<32x32xf32>
    %218 = arith.addf %217, %216 : vector<32x32xf32>
    %cst_154 = arith.constant 1.000000e+00 : f32
    %219 = vector.broadcast %cst_154 : f32 to vector<32x32xf32>
    %220 = arith.divf %219, %218 : vector<32x32xf32>
    %cst_155 = arith.constant 1.06140542 : f32
    %221 = vector.broadcast %cst_155 : f32 to vector<32x32xf32>
    %222 = arith.mulf %221, %220 : vector<32x32xf32>
    %cst_156 = arith.constant -1.45315206 : f32
    %223 = vector.broadcast %cst_156 : f32 to vector<32x32xf32>
    %224 = arith.addf %222, %223 : vector<32x32xf32>
    %225 = arith.mulf %224, %220 : vector<32x32xf32>
    %cst_157 = arith.constant 1.42141378 : f32
    %226 = vector.broadcast %cst_157 : f32 to vector<32x32xf32>
    %227 = arith.addf %225, %226 : vector<32x32xf32>
    %228 = arith.mulf %227, %220 : vector<32x32xf32>
    %cst_158 = arith.constant -0.284496725 : f32
    %229 = vector.broadcast %cst_158 : f32 to vector<32x32xf32>
    %230 = arith.addf %228, %229 : vector<32x32xf32>
    %231 = arith.mulf %230, %220 : vector<32x32xf32>
    %cst_159 = arith.constant 0.254829586 : f32
    %232 = vector.broadcast %cst_159 : f32 to vector<32x32xf32>
    %233 = arith.addf %231, %232 : vector<32x32xf32>
    %234 = arith.mulf %233, %220 : vector<32x32xf32>
    %cst_160 = arith.constant 0.000000e+00 : f32
    %235 = vector.broadcast %cst_160 : f32 to vector<32x32xf32>
    %236 = arith.subf %235, %214 : vector<32x32xf32>
    %237 = arith.mulf %236, %214 : vector<32x32xf32>
    %238 = math.exp %237 : vector<32x32xf32>
    %239 = arith.mulf %234, %238 : vector<32x32xf32>
    %cst_161 = arith.constant 1.000000e+00 : f32
    %240 = vector.broadcast %cst_161 : f32 to vector<32x32xf32>
    %241 = arith.subf %240, %239 : vector<32x32xf32>
    %cst_162 = arith.constant 0.000000e+00 : f32
    %242 = vector.broadcast %cst_162 : f32 to vector<32x32xf32>
    %243 = arith.cmpf oge, %213, %242 : vector<32x32xf32>
    %cst_163 = arith.constant 0.000000e+00 : f32
    %244 = vector.broadcast %cst_163 : f32 to vector<32x32xf32>
    %245 = arith.subf %244, %241 : vector<32x32xf32>
    %246 = arith.select %243, %241, %245 : vector<32x32xi1>, vector<32x32xf32>
    %cst_164 = arith.constant 5.000000e-01 : f32
    %247 = vector.broadcast %cst_164 : f32 to vector<32x32xf32>
    %248 = arith.mulf %247, %211 : vector<32x32xf32>
    %cst_165 = arith.constant 1.000000e+00 : f32
    %249 = vector.broadcast %cst_165 : f32 to vector<32x32xf32>
    %250 = arith.addf %249, %246 : vector<32x32xf32>
    %251 = arith.mulf %248, %250 : vector<32x32xf32>
    %cst_166 = arith.constant dense<0.000000e+00> : vector<32x16xf32>
    %252 = tpu.matmul %251, %27, %cst_166 {dimension_numbers = #tpu.dot_dimension_numbers<[1], [0], [0], [1], [0, 0, 1, 1], [], []>} : vector<32x32xf32>, vector<32x16xf32>, vector<32x16xf32> -> vector<32x16xf32>
    %253 = vector.broadcast %26 : vector<1x16xf32> to vector<32x16xf32>
    %254 = arith.addf %252, %253 : vector<32x16xf32>
    %255 = arith.addf %208, %254 : vector<32x16xf32>
    %256 = vector.broadcast %22 : vector<1x16xf32> to vector<32x16xf32>
    %257 = arith.mulf %255, %256 : vector<32x16xf32>
    %258 = vector.broadcast %23 : vector<1x16xf32> to vector<32x16xf32>
    %259 = arith.addf %257, %258 : vector<32x16xf32>
    %260 = vector.extract_strided_slice %259 {offsets = [0, 0], sizes = [8, 16], strides = [1, 1]} : vector<32x16xf32> to vector<8x16xf32>
    %261 = vector.extract_strided_slice %7 {offsets = [0, 0], sizes = [16, 8], strides = [1, 1]} : vector<64x8xf32> to vector<16x8xf32>
    %cst_167 = arith.constant dense<0.000000e+00> : vector<8x8xf32>
    %262 = tpu.matmul %260, %261, %cst_167 {dimension_numbers = #tpu.dot_dimension_numbers<[1], [0], [0], [1], [0, 0, 1, 1], [], []>} : vector<8x16xf32>, vector<16x8xf32>, vector<8x8xf32> -> vector<8x8xf32>
    %263 = vector.extract_strided_slice %259 {offsets = [8, 0], sizes = [8, 16], strides = [1, 1]} : vector<32x16xf32> to vector<8x16xf32>
    %264 = vector.extract_strided_slice %7 {offsets = [16, 0], sizes = [16, 8], strides = [1, 1]} : vector<64x8xf32> to vector<16x8xf32>
    %cst_168 = arith.constant dense<0.000000e+00> : vector<8x8xf32>
    %265 = tpu.matmul %263, %264, %cst_168 {dimension_numbers = #tpu.dot_dimension_numbers<[1], [0], [0], [1], [0, 0, 1, 1], [], []>} : vector<8x16xf32>, vector<16x8xf32>, vector<8x8xf32> -> vector<8x8xf32>
    %266 = arith.addf %262, %265 : vector<8x8xf32>
    %267 = vector.extract_strided_slice %259 {offsets = [16, 0], sizes = [8, 16], strides = [1, 1]} : vector<32x16xf32> to vector<8x16xf32>
    %268 = vector.extract_strided_slice %7 {offsets = [32, 0], sizes = [16, 8], strides = [1, 1]} : vector<64x8xf32> to vector<16x8xf32>
    %cst_169 = arith.constant dense<0.000000e+00> : vector<8x8xf32>
    %269 = tpu.matmul %267, %268, %cst_169 {dimension_numbers = #tpu.dot_dimension_numbers<[1], [0], [0], [1], [0, 0, 1, 1], [], []>} : vector<8x16xf32>, vector<16x8xf32>, vector<8x8xf32> -> vector<8x8xf32>
    %270 = arith.addf %266, %269 : vector<8x8xf32>
    %271 = vector.extract_strided_slice %259 {offsets = [24, 0], sizes = [8, 16], strides = [1, 1]} : vector<32x16xf32> to vector<8x16xf32>
    %272 = vector.extract_strided_slice %7 {offsets = [48, 0], sizes = [16, 8], strides = [1, 1]} : vector<64x8xf32> to vector<16x8xf32>
    %cst_170 = arith.constant dense<0.000000e+00> : vector<8x8xf32>
    %273 = tpu.matmul %271, %272, %cst_170 {dimension_numbers = #tpu.dot_dimension_numbers<[1], [0], [0], [1], [0, 0, 1, 1], [], []>} : vector<8x16xf32>, vector<16x8xf32>, vector<8x8xf32> -> vector<8x8xf32>
    %274 = arith.addf %270, %273 : vector<8x8xf32>
    %275 = vector.broadcast %6 : vector<1x8xf32> to vector<8x8xf32>
    %276 = arith.addf %274, %275 : vector<8x8xf32>
    %cst_171 = arith.constant dense<0.000000e+00> : vector<2x8xf32>
    %277 = tpu.matmul %51, %276, %cst_171 {dimension_numbers = #tpu.dot_dimension_numbers<[1], [0], [0], [1], [0, 0, 1, 1], [], []>} : vector<2x8xf32>, vector<8x8xf32>, vector<2x8xf32> -> vector<2x8xf32>
    %cst_172 = arith.constant dense<0.000000e+00> : vector<2x8xf32>
    %278 = tpu.matmul %277, %47, %cst_172 {dimension_numbers = #tpu.dot_dimension_numbers<[1], [0], [0], [1], [0, 0, 1, 1], [], []>} : vector<2x8xf32>, vector<8x8xf32>, vector<2x8xf32> -> vector<2x8xf32>
    %279 = vector.broadcast %46 : vector<1x8xf32> to vector<2x8xf32>
    %280 = arith.addf %278, %279 : vector<2x8xf32>
    %cst_173 = arith.constant dense<0.000000e+00> : vector<2x8xf32>
    %281 = tpu.matmul %280, %45, %cst_173 {dimension_numbers = #tpu.dot_dimension_numbers<[1], [0], [0], [1], [0, 0, 1, 1], [], []>} : vector<2x8xf32>, vector<8x8xf32>, vector<2x8xf32> -> vector<2x8xf32>
    %282 = vector.broadcast %44 : vector<1x8xf32> to vector<2x8xf32>
    %283 = arith.addf %281, %282 : vector<2x8xf32>
    %284 = vector.broadcast %38 : vector<1x8xf32> to vector<2x8xf32>
    %285 = arith.mulf %277, %284 : vector<2x8xf32>
    %286 = vector.broadcast %39 : vector<1x8xf32> to vector<2x8xf32>
    %287 = arith.addf %285, %286 : vector<2x8xf32>
    %cst_174 = arith.constant 0.000000e+00 : f32
    %288 = vector.broadcast %cst_174 : f32 to vector<2x8xf32>
    %289 = arith.maximumf %287, %288 : vector<2x8xf32>
    %cst_175 = arith.constant dense<0.000000e+00> : vector<2x8xf32>
    %290 = tpu.matmul %289, %41, %cst_175 {dimension_numbers = #tpu.dot_dimension_numbers<[1], [0], [0], [1], [0, 0, 1, 1], [], []>} : vector<2x8xf32>, vector<8x8xf32>, vector<2x8xf32> -> vector<2x8xf32>
    %291 = vector.broadcast %40 : vector<1x8xf32> to vector<2x8xf32>
    %292 = arith.addf %290, %291 : vector<2x8xf32>
    %cst_176 = arith.constant 0.000000e+00 : f32
    %293 = vector.broadcast %cst_176 : f32 to vector<2x8xf32>
    %294 = arith.maximumf %292, %293 : vector<2x8xf32>
    %295 = vector.extract_strided_slice %33 {offsets = [0, 0], sizes = [8, 512], strides = [1, 1]} : vector<16x512xf32> to vector<8x512xf32>
    %cst_177 = arith.constant dense<0.000000e+00> : vector<2x512xf32>
    %296 = tpu.matmul %283, %295, %cst_177 {dimension_numbers = #tpu.dot_dimension_numbers<[1], [0], [0], [1], [0, 0, 1, 1], [], []>} : vector<2x8xf32>, vector<8x512xf32>, vector<2x512xf32> -> vector<2x512xf32>
    %297 = vector.extract_strided_slice %33 {offsets = [8, 0], sizes = [8, 512], strides = [1, 1]} : vector<16x512xf32> to vector<8x512xf32>
    %cst_178 = arith.constant dense<0.000000e+00> : vector<2x512xf32>
    %298 = tpu.matmul %294, %297, %cst_178 {dimension_numbers = #tpu.dot_dimension_numbers<[1], [0], [0], [1], [0, 0, 1, 1], [], []>} : vector<2x8xf32>, vector<8x512xf32>, vector<2x512xf32> -> vector<2x512xf32>
    %299 = arith.addf %296, %298 : vector<2x512xf32>
    %300 = vector.broadcast %32 : vector<1x512xf32> to vector<2x512xf32>
    %301 = arith.addf %299, %300 : vector<2x512xf32>
    %cst_179 = arith.constant dense<0.000000e+00> : vector<2xf32>
    %302 = vector.multi_reduction <add>, %301, %cst_179 [1] : vector<2x512xf32> to vector<2xf32>
    %303 = vector.shape_cast %302 : vector<2xf32> to vector<2x1xf32>
    %cst_180 = arith.constant 5.120000e+02 : f32
    %304 = vector.broadcast %cst_180 : f32 to vector<2x1xf32>
    %305 = arith.divf %303, %304 : vector<2x1xf32>
    %306 = vector.broadcast %305 : vector<2x1xf32> to vector<2x512xf32>
    %307 = arith.subf %301, %306 : vector<2x512xf32>
    %308 = arith.mulf %307, %307 : vector<2x512xf32>
    %cst_181 = arith.constant dense<0.000000e+00> : vector<2xf32>
    %309 = vector.multi_reduction <add>, %308, %cst_181 [1] : vector<2x512xf32> to vector<2xf32>
    %310 = vector.shape_cast %309 : vector<2xf32> to vector<2x1xf32>
    %cst_182 = arith.constant 5.120000e+02 : f32
    %311 = vector.broadcast %cst_182 : f32 to vector<2x1xf32>
    %312 = arith.divf %310, %311 : vector<2x1xf32>
    %313 = vector.broadcast %305 : vector<2x1xf32> to vector<2x512xf32>
    %314 = arith.subf %301, %313 : vector<2x512xf32>
    %cst_183 = arith.constant 9.99999974E-6 : f32
    %315 = vector.broadcast %cst_183 : f32 to vector<2x1xf32>
    %316 = arith.addf %312, %315 : vector<2x1xf32>
    %317 = math.rsqrt %316 : vector<2x1xf32>
    %318 = vector.broadcast %317 : vector<2x1xf32> to vector<2x512xf32>
    %319 = arith.mulf %314, %318 : vector<2x512xf32>
    %320 = vector.broadcast %37 : vector<1x512xf32> to vector<2x512xf32>
    %321 = arith.mulf %319, %320 : vector<2x512xf32>
    %322 = vector.broadcast %36 : vector<1x512xf32> to vector<2x512xf32>
    %323 = arith.addf %321, %322 : vector<2x512xf32>
    %cst_184 = arith.constant 0.000000e+00 : f32
    %324 = vector.broadcast %cst_184 : f32 to vector<2x512xf32>
    %325 = arith.maximumf %323, %324 : vector<2x512xf32>
    %cst_185 = arith.constant dense<0.000000e+00> : vector<2x8xf32>
    %326 = tpu.matmul %325, %35, %cst_185 {dimension_numbers = #tpu.dot_dimension_numbers<[1], [0], [0], [1], [0, 0, 1, 1], [], []>} : vector<2x512xf32>, vector<512x8xf32>, vector<2x8xf32> -> vector<2x8xf32>
    %327 = vector.broadcast %34 : vector<1x8xf32> to vector<2x8xf32>
    %328 = arith.addf %326, %327 : vector<2x8xf32>
    %329 = arith.addf %277, %328 : vector<2x8xf32>
    %cst_186 = arith.constant dense<0.000000e+00> : vector<2xf32>
    %330 = vector.multi_reduction <add>, %329, %cst_186 [1] : vector<2x8xf32> to vector<2xf32>
    %331 = vector.shape_cast %330 : vector<2xf32> to vector<2x1xf32>
    %cst_187 = arith.constant 8.000000e+00 : f32
    %332 = vector.broadcast %cst_187 : f32 to vector<2x1xf32>
    %333 = arith.divf %331, %332 : vector<2x1xf32>
    %334 = vector.broadcast %333 : vector<2x1xf32> to vector<2x8xf32>
    %335 = arith.subf %329, %334 : vector<2x8xf32>
    %336 = arith.mulf %335, %335 : vector<2x8xf32>
    %cst_188 = arith.constant dense<0.000000e+00> : vector<2xf32>
    %337 = vector.multi_reduction <add>, %336, %cst_188 [1] : vector<2x8xf32> to vector<2xf32>
    %338 = vector.shape_cast %337 : vector<2xf32> to vector<2x1xf32>
    %cst_189 = arith.constant 8.000000e+00 : f32
    %339 = vector.broadcast %cst_189 : f32 to vector<2x1xf32>
    %340 = arith.divf %338, %339 : vector<2x1xf32>
    %341 = vector.broadcast %333 : vector<2x1xf32> to vector<2x8xf32>
    %342 = arith.subf %329, %341 : vector<2x8xf32>
    %cst_190 = arith.constant 9.99999974E-6 : f32
    %343 = vector.broadcast %cst_190 : f32 to vector<2x1xf32>
    %344 = arith.addf %340, %343 : vector<2x1xf32>
    %345 = math.rsqrt %344 : vector<2x1xf32>
    %346 = vector.broadcast %345 : vector<2x1xf32> to vector<2x8xf32>
    %347 = arith.mulf %342, %346 : vector<2x8xf32>
    %348 = vector.broadcast %43 : vector<1x8xf32> to vector<2x8xf32>
    %349 = arith.mulf %347, %348 : vector<2x8xf32>
    %350 = vector.broadcast %42 : vector<1x8xf32> to vector<2x8xf32>
    %351 = arith.addf %349, %350 : vector<2x8xf32>
    %cst_191 = arith.constant dense<0.000000e+00> : vector<2x4xf32>
    %352 = tpu.matmul %351, %1, %cst_191 {dimension_numbers = #tpu.dot_dimension_numbers<[1], [0], [0], [1], [0, 0, 1, 1], [], []>} : vector<2x8xf32>, vector<8x4xf32>, vector<2x4xf32> -> vector<2x4xf32>
    %353 = vector.broadcast %0 : vector<1x4xf32> to vector<2x4xf32>
    %354 = arith.addf %352, %353 : vector<2x4xf32>
    %cst_192 = arith.constant 0.000000e+00 : f32
    %355 = vector.broadcast %cst_192 : f32 to vector<2x4xf32>
    %356 = arith.maximumf %354, %355 : vector<2x4xf32>
    %cst_193 = arith.constant dense<0.000000e+00> : vector<2x2xf32>
    %357 = tpu.matmul %356, %3, %cst_193 {dimension_numbers = #tpu.dot_dimension_numbers<[1], [0], [0], [1], [0, 0, 1, 1], [], []>} : vector<2x4xf32>, vector<4x2xf32>, vector<2x2xf32> -> vector<2x2xf32>
    %358 = vector.broadcast %2 : vector<1x2xf32> to vector<2x2xf32>
    %359 = arith.addf %357, %358 : vector<2x2xf32>
    %cst_194 = arith.constant 0.000000e+00 : f32
    %360 = vector.broadcast %cst_194 : f32 to vector<2x2xf32>
    %361 = arith.maximumf %359, %360 : vector<2x2xf32>
    %cst_195 = arith.constant dense<0.000000e+00> : vector<2x3xf32>
    %362 = tpu.matmul %361, %5, %cst_195 {dimension_numbers = #tpu.dot_dimension_numbers<[1], [0], [0], [1], [0, 0, 1, 1], [], []>} : vector<2x2xf32>, vector<2x3xf32>, vector<2x3xf32> -> vector<2x3xf32>
    %363 = vector.broadcast %4 : vector<1x3xf32> to vector<2x3xf32>
    %364 = arith.addf %362, %363 : vector<2x3xf32>
    %cst_196 = arith.constant dense<0xFF800000> : vector<2xf32>
    %365 = vector.multi_reduction <maximumf>, %364, %cst_196 [1] : vector<2x3xf32> to vector<2xf32>
    %366 = vector.shape_cast %365 : vector<2xf32> to vector<2x1xf32>
    %367 = vector.broadcast %366 : vector<2x1xf32> to vector<2x3xf32>
    %368 = arith.subf %364, %367 : vector<2x3xf32>
    %369 = math.exp %368 : vector<2x3xf32>
    %cst_197 = arith.constant dense<0.000000e+00> : vector<2xf32>
    %370 = vector.multi_reduction <add>, %369, %cst_197 [1] : vector<2x3xf32> to vector<2xf32>
    %371 = vector.shape_cast %370 : vector<2xf32> to vector<2x1xf32>
    %372 = vector.broadcast %371 : vector<2x1xf32> to vector<2x3xf32>
    %373 = arith.divf %369, %372 : vector<2x3xf32>
    %c0_198 = arith.constant 0 : index
    %c0_199 = arith.constant 0 : index
    %374 = vector.load %arg54[%c0_198, %c0_199] : memref<2x3xf32, #tpu.memory_space<vmem>>, vector<2x3xf32>
    tpu.vector_store %arg54[%c0_198, %c0_199], %373 {strides = array<i32>} : memref<2x3xf32, #tpu.memory_space<vmem>>, vector<2x3xf32>,
    return
  }
}

</mosaic_0001>

<llo_original>
// kernel: forward.1
$region0: #{forward.1}
  #allocation0 [shape = 'u32[]', space=smem, size = 0x4, offset = 0x4, fixed_abs, tag = 'smem constant byte address 0x4 - core index']
  #allocation1 [shape = 'u32[144,128]{1,0:T(1,128)}', space=vmem, size = 0x12000, scoped, tag = 'internal scratch']
  %s0 = inlined_call_operand.smem [shape: u32[55], index: -1, kind: input, shape index: {}]
  %s1 = sld [smem:[%s0]]
  %s2 = scalar_lea.smem %s0, 1
  %s3 = sld [smem:[%s2]]
  %s4 = scalar_lea.smem %s0, 2
  %s5 = sld [smem:[%s4]]
  %s6 = scalar_lea.smem %s0, 3
  %s7 = sld [smem:[%s6]]
  %s8 = scalar_lea.smem %s0, 4
  %s9 = sld [smem:[%s8]]
  %s10 = scalar_lea.smem %s0, 5
  %s11 = sld [smem:[%s10]]
  %s12 = scalar_lea.smem %s0, 6
  %s13 = sld [smem:[%s12]]
  %s14 = scalar_lea.smem %s0, 7
  %s15 = sld [smem:[%s14]]
  %s16 = scalar_lea.smem %s0, 8
  %s17 = sld [smem:[%s16]]
  %s18 = scalar_lea.smem %s0, 9
  %s19 = sld [smem:[%s18]]
  %s20 = scalar_lea.smem %s0, 10
  %s21 = sld [smem:[%s20]]
  %s22 = scalar_lea.smem %s0, 11
  %s23 = sld [smem:[%s22]]
  %s24 = scalar_lea.smem %s0, 12
  %s25 = sld [smem:[%s24]]
  %s26 = scalar_lea.smem %s0, 13
  %s27 = sld [smem:[%s26]]
  %s28 = scalar_lea.smem %s0, 14
  %s29 = sld [smem:[%s28]]
  %s30 = scalar_lea.smem %s0, 15
  %s31 = sld [smem:[%s30]]
  %s32 = scalar_lea.smem %s0, 16
  %s33 = sld [smem:[%s32]]
  %s34 = scalar_lea.smem %s0, 17
  %s35 = sld [smem:[%s34]]
  %s36 = scalar_lea.smem %s0, 18
  %s37 = sld [smem:[%s36]]
  %s38 = scalar_lea.smem %s0, 19
  %s39 = sld [smem:[%s38]]
  %s40 = scalar_lea.smem %s0, 20
  %s41 = sld [smem:[%s40]]
  %s42 = scalar_lea.smem %s0, 21
  %s43 = sld [smem:[%s42]]
  %s44 = scalar_lea.smem %s0, 22
  %s45 = sld [smem:[%s44]]
  %s46 = scalar_lea.smem %s0, 23
  %s47 = sld [smem:[%s46]]
  %s48 = scalar_lea.smem %s0, 24
  %s49 = sld [smem:[%s48]]
  %s50 = scalar_lea.smem %s0, 25
  %s51 = sld [smem:[%s50]]
  %s52 = scalar_lea.smem %s0, 26
  %s53 = sld [smem:[%s52]]
  %s54 = scalar_lea.smem %s0, 27
  %s55 = sld [smem:[%s54]]
  %s56 = scalar_lea.smem %s0, 28
  %s57 = sld [smem:[%s56]]
  %s58 = scalar_lea.smem %s0, 29
  %s59 = sld [smem:[%s58]]
  %s60 = scalar_lea.smem %s0, 30
  %s61 = sld [smem:[%s60]]
  %s62 = scalar_lea.smem %s0, 31
  %s63 = sld [smem:[%s62]]
  %s64 = scalar_lea.smem %s0, 32
  %s65 = sld [smem:[%s64]]
  %s66 = scalar_lea.smem %s0, 33
  %s67 = sld [smem:[%s66]]
  %s68 = scalar_lea.smem %s0, 34
  %s69 = sld [smem:[%s68]]
  %s70 = scalar_lea.smem %s0, 35
  %s71 = sld [smem:[%s70]]
  %s72 = scalar_lea.smem %s0, 36
  %s73 = sld [smem:[%s72]]
  %s74 = scalar_lea.smem %s0, 37
  %s75 = sld [smem:[%s74]]
  %s76 = scalar_lea.smem %s0, 38
  %s77 = sld [smem:[%s76]]
  %s78 = scalar_lea.smem %s0, 39
  %s79 = sld [smem:[%s78]]
  %s80 = scalar_lea.smem %s0, 40
  %s81 = sld [smem:[%s80]]
  %s82 = scalar_lea.smem %s0, 41
  %s83 = sld [smem:[%s82]]
  %s84 = scalar_lea.smem %s0, 42
  %s85 = sld [smem:[%s84]]
  %s86 = scalar_lea.smem %s0, 43
  %s87 = sld [smem:[%s86]]
  %s88 = scalar_lea.smem %s0, 44
  %s89 = sld [smem:[%s88]]
  %s90 = scalar_lea.smem %s0, 45
  %s91 = sld [smem:[%s90]]
  %s92 = scalar_lea.smem %s0, 46
  %s93 = sld [smem:[%s92]]
  %s94 = scalar_lea.smem %s0, 47
  %s95 = sld [smem:[%s94]]
  %s96 = scalar_lea.smem %s0, 48
  %s97 = sld [smem:[%s96]]
  %s98 = scalar_lea.smem %s0, 49
  %s99 = sld [smem:[%s98]]
  %s100 = scalar_lea.smem %s0, 50
  %s101 = sld [smem:[%s100]]
  %s102 = scalar_lea.smem %s0, 51
  %s103 = sld [smem:[%s102]]
  %s104 = scalar_lea.smem %s0, 52
  %s105 = sld [smem:[%s104]]
  %s106 = scalar_lea.smem %s0, 53
  %s107 = sld [smem:[%s106]]
  %s108 = scalar_lea.smem %s0, 54
  %s109 = sld [smem:[%s108]]
  %s110 = sld [smem:[#allocation0]]
  $region258: #{forward.1} parent=0
    _
  %s112 = ssub.s32 1, %s110
  %s113 = scalar_select 0, %s112, %s110
  $region1: #{forward.1} parent=0
    #allocation2 [shape = 'u8[512]{0}', space=vmem, size = 0x400, scoped, tag = 'input window, operand 39, single buffered']
    #allocation3 [shape = 's32[1]{0}', space=sflag, size = 0x4, scoped, tag = 'scoped memory for forward.1']
    #allocation4 [shape = 's32[1]{0}', space=sflag, size = 0x4, scoped, tag = 'scoped memory for forward.1']
    #allocation5 [shape = 'u8[512]{0}', space=vmem, size = 0x400, scoped, tag = 'input window, operand 40, single buffered']
    #allocation6 [shape = 's32[1]{0}', space=sflag, size = 0x4, scoped, tag = 'scoped memory for forward.1']
    #allocation7 [shape = 'u8[512]{0}', space=vmem, size = 0x400, scoped, tag = 'input window, operand 41, single buffered']
    #allocation8 [shape = 'u8[512]{0}', space=vmem, size = 0x400, scoped, tag = 'input window, operand 43, single buffered']
    #allocation9 [shape = 's32[1]{0}', space=sflag, size = 0x4, scoped, tag = 'scoped memory for forward.1']
    #allocation10 [shape = 'u8[512]{0}', space=vmem, size = 0x400, scoped, tag = 'input window, operand 44, single buffered']
    #allocation11 [shape = 'u8[512]{0}', space=vmem, size = 0x400, scoped, tag = 'input window, operand 45, single buffered']
    #allocation12 [shape = 's32[1]{0}', space=sflag, size = 0x4, scoped, tag = 'scoped memory for forward.1']
    #allocation13 [shape = 'u8[512]{0}', space=vmem, size = 0x400, scoped, tag = 'input window, operand 47, single buffered']
    #allocation14 [shape = 'u8[512]{0}', space=vmem, size = 0x400, scoped, tag = 'input window, operand 50, single buffered']
    #allocation15 [shape = 's32[1]{0}', space=sflag, size = 0x4, scoped, tag = 'scoped memory for forward.1']
    #allocation16 [shape = 'u8[1024]{0}', space=vmem, size = 0x400, scoped, tag = 'output window, operand 0, single buffered']
    %114 = vsyncpa [#allocation3], 0
    %115 = vsyncpa [#allocation6], 0
    %116 = vsyncpa [#allocation9], 0
    %117 = vsyncpa [#allocation12], 0
    %118 = vsyncpa [#allocation15], 0
    %119 = vsyncpa [#allocation4], 0
    // Predicated region
    $region2: #{forward.1} parent=1 // pred_check
      _
    $region3: #{forward.1} parent=1 // pred_check_branch
      %121 = sbr.rel (0) target = $region5
    $region4: #{forward.1} parent=1 // pred_region
      _
    $region5: #{forward.1} parent=1 // pred_fallthru
      _
    // Predicated region
    $region6: #{forward.1} parent=1 // pred_check
      _
    $region7: #{forward.1} parent=1 // pred_check_branch
      %123 = sbr.rel (0) target = $region9
    $region8: #{forward.1} parent=1 // pred_region
      _
    $region9: #{forward.1} parent=1 // pred_fallthru
      _
    // Predicated region
    $region10: #{forward.1} parent=1 // pred_check
      _
    $region11: #{forward.1} parent=1 // pred_check_branch
      %125 = sbr.rel (0) target = $region13
    $region12: #{forward.1} parent=1 // pred_region
      _
    $region13: #{forward.1} parent=1 // pred_fallthru
      _
    // Predicated region
    $region14: #{forward.1} parent=1 // pred_check
      _
    $region15: #{forward.1} parent=1 // pred_check_branch
      %127 = sbr.rel (0) target = $region17
    $region16: #{forward.1} parent=1 // pred_region
      _
    $region17: #{forward.1} parent=1 // pred_fallthru
      _
    // Predicated region
    $region18: #{forward.1} parent=1 // pred_check
      _
    $region19: #{forward.1} parent=1 // pred_check_branch
      %129 = sbr.rel (0) target = $region21
    $region20: #{forward.1} parent=1 // pred_region
      _
    $region21: #{forward.1} parent=1 // pred_fallthru
      _
    // Predicated region
    $region22: #{forward.1} parent=1 // pred_check
      _
    $region23: #{forward.1} parent=1 // pred_check_branch
      %131 = sbr.rel (0) target = $region25
    $region24: #{forward.1} parent=1 // pred_region
      _
    $region25: #{forward.1} parent=1 // pred_fallthru
      _
    // Predicated region
    $region26: #{forward.1} parent=1 // pred_check
      _
    $region27: #{forward.1} parent=1 // pred_check_branch
      %133 = sbr.rel (0) target = $region29
    $region28: #{forward.1} parent=1 // pred_region
      _
    $region29: #{forward.1} parent=1 // pred_fallthru
      _
    // Predicated region
    $region30: #{forward.1} parent=1 // pred_check
      _
    $region31: #{forward.1} parent=1 // pred_check_branch
      %135 = sbr.rel (0) target = $region33
    $region32: #{forward.1} parent=1 // pred_region
      _
    $region33: #{forward.1} parent=1 // pred_fallthru
      _
    // Predicated region
    $region34: #{forward.1} parent=1 // pred_check
      _
    $region35: #{forward.1} parent=1 // pred_check_branch
      %137 = sbr.rel (0) target = $region37
    $region36: #{forward.1} parent=1 // pred_region
      _
    $region37: #{forward.1} parent=1 // pred_fallthru
      _
    // Predicated region
    $region38: #{forward.1} parent=1 // pred_check
      _
    $region39: #{forward.1} parent=1 // pred_check_branch
      %139 = sbr.rel (0) target = $region41
    $region40: #{forward.1} parent=1 // pred_region
      _
    $region41: #{forward.1} parent=1 // pred_fallthru
      _
    // Predicated region
    $region42: #{forward.1} parent=1 // pred_check
      _
    $region43: #{forward.1} parent=1 // pred_check_branch
      %141 = sbr.rel (0) target = $region45
    $region44: #{forward.1} parent=1 // pred_region
      _
    $region45: #{forward.1} parent=1 // pred_fallthru
      _
    // Predicated region
    $region46: #{forward.1} parent=1 // pred_check
      _
    $region47: #{forward.1} parent=1 // pred_check_branch
      %143 = sbr.rel (0) target = $region49
    $region48: #{forward.1} parent=1 // pred_region
      _
    $region49: #{forward.1} parent=1 // pred_fallthru
      _
    // Predicated region
    $region50: #{forward.1} parent=1 // pred_check
      _
    $region51: #{forward.1} parent=1 // pred_check_branch
      %145 = sbr.rel (0) target = $region53
    $region52: #{forward.1} parent=1 // pred_region
      _
    $region53: #{forward.1} parent=1 // pred_fallthru
      _
    // Predicated region
    $region54: #{forward.1} parent=1 // pred_check
      _
    $region55: #{forward.1} parent=1 // pred_check_branch
      %147 = sbr.rel (0) target = $region57
    $region56: #{forward.1} parent=1 // pred_region
      _
    $region57: #{forward.1} parent=1 // pred_fallthru
      _
    // Predicated region
    $region58: #{forward.1} parent=1 // pred_check
      _
    $region59: #{forward.1} parent=1 // pred_check_branch
      %149 = sbr.rel (0) target = $region61
    $region60: #{forward.1} parent=1 // pred_region
      _
    $region61: #{forward.1} parent=1 // pred_fallthru
      _
    // Predicated region
    $region62: #{forward.1} parent=1 // pred_check
      _
    $region63: #{forward.1} parent=1 // pred_check_branch
      %151 = sbr.rel (0) target = $region65
    $region64: #{forward.1} parent=1 // pred_region
      _
    $region65: #{forward.1} parent=1 // pred_fallthru
      _
    // Predicated region
    $region66: #{forward.1} parent=1 // pred_check
      _
    $region67: #{forward.1} parent=1 // pred_check_branch
      %153 = sbr.rel (0) target = $region69
    $region68: #{forward.1} parent=1 // pred_region
      _
    $region69: #{forward.1} parent=1 // pred_fallthru
      _
    // Predicated region
    $region70: #{forward.1} parent=1 // pred_check
      _
    $region71: #{forward.1} parent=1 // pred_check_branch
      %155 = sbr.rel (0) target = $region73
    $region72: #{forward.1} parent=1 // pred_region
      _
    $region73: #{forward.1} parent=1 // pred_fallthru
      _
    // Predicated region
    $region74: #{forward.1} parent=1 // pred_check
      _
    $region75: #{forward.1} parent=1 // pred_check_branch
      %157 = sbr.rel (0) target = $region77
    $region76: #{forward.1} parent=1 // pred_region
      _
    $region77: #{forward.1} parent=1 // pred_fallthru
      _
    // Predicated region
    $region78: #{forward.1} parent=1 // pred_check
      _
    $region79: #{forward.1} parent=1 // pred_check_branch
      %159 = sbr.rel (0) target = $region81
    $region80: #{forward.1} parent=1 // pred_region
      _
    $region81: #{forward.1} parent=1 // pred_fallthru
      _
    // Predicated region
    $region82: #{forward.1} parent=1 // pred_check
      _
    $region83: #{forward.1} parent=1 // pred_check_branch
      %161 = sbr.rel (0) target = $region85
    $region84: #{forward.1} parent=1 // pred_region
      _
    $region85: #{forward.1} parent=1 // pred_fallthru
      _
    // Predicated region
    $region86: #{forward.1} parent=1 // pred_check
      _
    $region87: #{forward.1} parent=1 // pred_check_branch
      %163 = sbr.rel (0) target = $region89
    $region88: #{forward.1} parent=1 // pred_region
      _
    $region89: #{forward.1} parent=1 // pred_fallthru
      _
    // Predicated region
    $region90: #{forward.1} parent=1 // pred_check
      _
    $region91: #{forward.1} parent=1 // pred_check_branch
      %165 = sbr.rel (0) target = $region93
    $region92: #{forward.1} parent=1 // pred_region
      _
    $region93: #{forward.1} parent=1 // pred_fallthru
      _
    // Predicated region
    $region94: #{forward.1} parent=1 // pred_check
      _
    $region95: #{forward.1} parent=1 // pred_check_branch
      %167 = sbr.rel (0) target = $region97
    $region96: #{forward.1} parent=1 // pred_region
      _
    $region97: #{forward.1} parent=1 // pred_fallthru
      _
    // Predicated region
    $region98: #{forward.1} parent=1 // pred_check
      _
    $region99: #{forward.1} parent=1 // pred_check_branch
      %169 = sbr.rel (0) target = $region101
    $region100: #{forward.1} parent=1 // pred_region
      _
    $region101: #{forward.1} parent=1 // pred_fallthru
      _
    // Predicated region
    $region102: #{forward.1} parent=1 // pred_check
      _
    $region103: #{forward.1} parent=1 // pred_check_branch
      %171 = sbr.rel (0) target = $region105
    $region104: #{forward.1} parent=1 // pred_region
      _
    $region105: #{forward.1} parent=1 // pred_fallthru
      _
    // Predicated region
    $region106: #{forward.1} parent=1 // pred_check
      _
    $region107: #{forward.1} parent=1 // pred_check_branch
      %173 = sbr.rel (0) target = $region109
    $region108: #{forward.1} parent=1 // pred_region
      _
    $region109: #{forward.1} parent=1 // pred_fallthru
      _
    // Predicated region
    $region110: #{forward.1} parent=1 // pred_check
      _
    $region111: #{forward.1} parent=1 // pred_check_branch
      %175 = sbr.rel (0) target = $region113
    $region112: #{forward.1} parent=1 // pred_region
      _
    $region113: #{forward.1} parent=1 // pred_fallthru
      _
    // Predicated region
    $region114: #{forward.1} parent=1 // pred_check
      _
    $region115: #{forward.1} parent=1 // pred_check_branch
      %177 = sbr.rel (0) target = $region117
    $region116: #{forward.1} parent=1 // pred_region
      _
    $region117: #{forward.1} parent=1 // pred_fallthru
      _
    // Predicated region
    $region118: #{forward.1} parent=1 // pred_check
      _
    $region119: #{forward.1} parent=1 // pred_check_branch
      %179 = sbr.rel (0) target = $region121
    $region120: #{forward.1} parent=1 // pred_region
      _
    $region121: #{forward.1} parent=1 // pred_fallthru
      _
    // Predicated region
    $region122: #{forward.1} parent=1 // pred_check
      _
    $region123: #{forward.1} parent=1 // pred_check_branch
      %181 = sbr.rel (0) target = $region125
    $region124: #{forward.1} parent=1 // pred_region
      _
    $region125: #{forward.1} parent=1 // pred_fallthru
      _
    // Predicated region
    $region126: #{forward.1} parent=1 // pred_check
      _
    $region127: #{forward.1} parent=1 // pred_check_branch
      %183 = sbr.rel (0) target = $region129
    $region128: #{forward.1} parent=1 // pred_region
      _
    $region129: #{forward.1} parent=1 // pred_fallthru
      _
    // Predicated region
    $region130: #{forward.1} parent=1 // pred_check
      _
    $region131: #{forward.1} parent=1 // pred_check_branch
      %185 = sbr.rel (0) target = $region133
    $region132: #{forward.1} parent=1 // pred_region
      _
    $region133: #{forward.1} parent=1 // pred_fallthru
      _
    // Predicated region
    $region134: #{forward.1} parent=1 // pred_check
      _
    $region135: #{forward.1} parent=1 // pred_check_branch
      %187 = sbr.rel (0) target = $region137
    $region136: #{forward.1} parent=1 // pred_region
      _
    $region137: #{forward.1} parent=1 // pred_fallthru
      _
    // Predicated region
    $region138: #{forward.1} parent=1 // pred_check
      _
    $region139: #{forward.1} parent=1 // pred_check_branch
      %189 = sbr.rel (0) target = $region141
    $region140: #{forward.1} parent=1 // pred_region
      _
    $region141: #{forward.1} parent=1 // pred_fallthru
      _
    // Predicated region
    $region142: #{forward.1} parent=1 // pred_check
      _
    $region143: #{forward.1} parent=1 // pred_check_branch
      %191 = sbr.rel (0) target = $region145
    $region144: #{forward.1} parent=1 // pred_region
      _
    $region145: #{forward.1} parent=1 // pred_fallthru
      _
    // Predicated region
    $region146: #{forward.1} parent=1 // pred_check
      _
    $region147: #{forward.1} parent=1 // pred_check_branch
      %193 = sbr.rel (0) target = $region149
    $region148: #{forward.1} parent=1 // pred_region
      _
    $region149: #{forward.1} parent=1 // pred_fallthru
      _
    // Predicated region
    $region150: #{forward.1} parent=1 // pred_check
      _
    $region151: #{forward.1} parent=1 // pred_check_branch
      %195 = sbr.rel (0) target = $region153
    $region152: #{forward.1} parent=1 // pred_region
      _
    $region153: #{forward.1} parent=1 // pred_fallthru
      _
    // Predicated region
    $region154: #{forward.1} parent=1 // pred_check
      _
    $region155: #{forward.1} parent=1 // pred_check_branch
      %197 = sbr.rel (0) target = $region157
    $region156: #{forward.1} parent=1 // pred_region
      _
    $region157: #{forward.1} parent=1 // pred_fallthru
      _
    // Predicated region
    $region158: #{forward.1} parent=1 // pred_check
      _
    $region159: #{forward.1} parent=1 // pred_check_branch
      %199 = sbr.rel (0) target = $region161
    $region160: #{forward.1} parent=1 // pred_region
      %s201 = ssub.s32 16, 16
      %202 = vsyncadd [#allocation3], %s201
      %s204 = sshll.u32 [#allocation2], 4
      %s205 = int_to_ptr.vmem [resolvable:$true] %s204
      %207 = dma.hbm_to_vmem [thread:$0]  %s79, 16, %s205, [#allocation3]
    $region161: #{forward.1} parent=1 // pred_fallthru
      _
    // Predicated region
    $region162: #{forward.1} parent=1 // pred_check
      _
    $region163: #{forward.1} parent=1 // pred_check_branch
      %209 = sbr.rel (0) target = $region165
    $region164: #{forward.1} parent=1 // pred_region
      %s211 = ssub.s32 16, 16
      %212 = vsyncadd [#allocation6], %s211
      %s214 = sshll.u32 [#allocation5], 4
      %s215 = int_to_ptr.vmem [resolvable:$true] %s214
      %217 = dma.hbm_to_vmem [thread:$0]  %s81, 16, %s215, [#allocation6]
    $region165: #{forward.1} parent=1 // pred_fallthru
      _
    // Predicated region
    $region166: #{forward.1} parent=1 // pred_check
      _
    $region167: #{forward.1} parent=1 // pred_check_branch
      %219 = sbr.rel (0) target = $region169
    $region168: #{forward.1} parent=1 // pred_region
      %s221 = ssub.s32 16, 16
      %222 = vsyncadd [#allocation6], %s221
      %s224 = sshll.u32 [#allocation7], 4
      %s225 = int_to_ptr.vmem [resolvable:$true] %s224
      %227 = dma.hbm_to_vmem [thread:$0]  %s83, 16, %s225, [#allocation6]
    $region169: #{forward.1} parent=1 // pred_fallthru
      _
    // Predicated region
    $region170: #{forward.1} parent=1 // pred_check
      _
    $region171: #{forward.1} parent=1 // pred_check_branch
      %229 = sbr.rel (0) target = $region173
    $region172: #{forward.1} parent=1 // pred_region
      _
    $region173: #{forward.1} parent=1 // pred_fallthru
      _
    // Predicated region
    $region174: #{forward.1} parent=1 // pred_check
      _
    $region175: #{forward.1} parent=1 // pred_check_branch
      %231 = sbr.rel (0) target = $region177
    $region176: #{forward.1} parent=1 // pred_region
      %s233 = ssub.s32 16, 16
      %234 = vsyncadd [#allocation9], %s233
      %s236 = sshll.u32 [#allocation8], 4
      %s237 = int_to_ptr.vmem [resolvable:$true] %s236
      %239 = dma.hbm_to_vmem [thread:$0]  %s87, 16, %s237, [#allocation9]
    $region177: #{forward.1} parent=1 // pred_fallthru
      _
    // Predicated region
    $region178: #{forward.1} parent=1 // pred_check
      _
    $region179: #{forward.1} parent=1 // pred_check_branch
      %241 = sbr.rel (0) target = $region181
    $region180: #{forward.1} parent=1 // pred_region
      %s243 = ssub.s32 16, 16
      %244 = vsyncadd [#allocation9], %s243
      %s246 = sshll.u32 [#allocation10], 4
      %s247 = int_to_ptr.vmem [resolvable:$true] %s246
      %249 = dma.hbm_to_vmem [thread:$0]  %s89, 16, %s247, [#allocation9]
    $region181: #{forward.1} parent=1 // pred_fallthru
      _
    // Predicated region
    $region182: #{forward.1} parent=1 // pred_check
      _
    $region183: #{forward.1} parent=1 // pred_check_branch
      %251 = sbr.rel (0) target = $region185
    $region184: #{forward.1} parent=1 // pred_region
      %s253 = ssub.s32 16, 16
      %254 = vsyncadd [#allocation12], %s253
      %s256 = sshll.u32 [#allocation11], 4
      %s257 = int_to_ptr.vmem [resolvable:$true] %s256
      %259 = dma.hbm_to_vmem [thread:$0]  %s91, 16, %s257, [#allocation12]
    $region185: #{forward.1} parent=1 // pred_fallthru
      _
    // Predicated region
    $region186: #{forward.1} parent=1 // pred_check
      _
    $region187: #{forward.1} parent=1 // pred_check_branch
      %261 = sbr.rel (0) target = $region189
    $region188: #{forward.1} parent=1 // pred_region
      _
    $region189: #{forward.1} parent=1 // pred_fallthru
      _
    // Predicated region
    $region190: #{forward.1} parent=1 // pred_check
      _
    $region191: #{forward.1} parent=1 // pred_check_branch
      %263 = sbr.rel (0) target = $region193
    $region192: #{forward.1} parent=1 // pred_region
      %s265 = ssub.s32 16, 16
      %266 = vsyncadd [#allocation12], %s265
      %s268 = sshll.u32 [#allocation13], 4
      %s269 = int_to_ptr.vmem [resolvable:$true] %s268
      %271 = dma.hbm_to_vmem [thread:$0]  %s95, 16, %s269, [#allocation12]
    $region193: #{forward.1} parent=1 // pred_fallthru
      _
    // Predicated region
    $region194: #{forward.1} parent=1 // pred_check
      _
    $region195: #{forward.1} parent=1 // pred_check_branch
      %273 = sbr.rel (0) target = $region197
    $region196: #{forward.1} parent=1 // pred_region
      _
    $region197: #{forward.1} parent=1 // pred_fallthru
      _
    // Predicated region
    $region198: #{forward.1} parent=1 // pred_check
      _
    $region199: #{forward.1} parent=1 // pred_check_branch
      %275 = sbr.rel (0) target = $region201
    $region200: #{forward.1} parent=1 // pred_region
      _
    $region201: #{forward.1} parent=1 // pred_fallthru
      _
    // Predicated region
    $region202: #{forward.1} parent=1 // pred_check
      _
    $region203: #{forward.1} parent=1 // pred_check_branch
      %277 = sbr.rel (0) target = $region205
    $region204: #{forward.1} parent=1 // pred_region
      %s279 = ssub.s32 16, 16
      %280 = vsyncadd [#allocation15], %s279
      %s282 = sshll.u32 [#allocation14], 4
      %s283 = int_to_ptr.vmem [resolvable:$true] %s282
      %285 = dma.hbm_to_vmem [thread:$0]  %s101, 16, %s283, [#allocation15]
    $region205: #{forward.1} parent=1 // pred_fallthru
      _
    // Predicated region
    $region206: #{forward.1} parent=1 // pred_check
      _
    $region207: #{forward.1} parent=1 // pred_check_branch
      %287 = sbr.rel (0) target = $region209
    $region208: #{forward.1} parent=1 // pred_region
      _
    $region209: #{forward.1} parent=1 // pred_fallthru
      _
    // Predicated region
    $region210: #{forward.1} parent=1 // pred_check
      _
    $region211: #{forward.1} parent=1 // pred_check_branch
      %289 = sbr.rel (0) target = $region213
    $region212: #{forward.1} parent=1 // pred_region
      _
    $region213: #{forward.1} parent=1 // pred_fallthru
      _
    // Predicated region
    $region214: #{forward.1} parent=1 // pred_check
      _
    $region215: #{forward.1} parent=1 // pred_check_branch
      %291 = sbr.rel (0) target = $region217
    $region216: #{forward.1} parent=1 // pred_region
      _
    $region217: #{forward.1} parent=1 // pred_fallthru
      _
    // Predicated region
    $region218: #{forward.1} parent=1 // pred_check
      _
    $region219: #{forward.1} parent=1 // pred_check_branch
      %293 = sbr.rel (0) target = $region221
    $region220: #{forward.1} parent=1 // pred_region
      %294 = dma.done [#allocation3], 16
    $region221: #{forward.1} parent=1 // pred_fallthru
      _
    // Predicated region
    $region222: #{forward.1} parent=1 // pred_check
      _
    $region223: #{forward.1} parent=1 // pred_check_branch
      %296 = sbr.rel (0) target = $region225
    $region224: #{forward.1} parent=1 // pred_region
      %297 = dma.done [#allocation6], 16
    $region225: #{forward.1} parent=1 // pred_fallthru
      _
    // Predicated region
    $region226: #{forward.1} parent=1 // pred_check
      _
    $region227: #{forward.1} parent=1 // pred_check_branch
      %299 = sbr.rel (0) target = $region229
    $region228: #{forward.1} parent=1 // pred_region
      %300 = dma.done [#allocation6], 16
    $region229: #{forward.1} parent=1 // pred_fallthru
      _
    // Predicated region
    $region230: #{forward.1} parent=1 // pred_check
      _
    $region231: #{forward.1} parent=1 // pred_check_branch
      %302 = sbr.rel (0) target = $region233
    $region232: #{forward.1} parent=1 // pred_region
      %303 = dma.done [#allocation9], 16
    $region233: #{forward.1} parent=1 // pred_fallthru
      _
    // Predicated region
    $region234: #{forward.1} parent=1 // pred_check
      _
    $region235: #{forward.1} parent=1 // pred_check_branch
      %305 = sbr.rel (0) target = $region237
    $region236: #{forward.1} parent=1 // pred_region
      %306 = dma.done [#allocation9], 16
    $region237: #{forward.1} parent=1 // pred_fallthru
      _
    // Predicated region
    $region238: #{forward.1} parent=1 // pred_check
      _
    $region239: #{forward.1} parent=1 // pred_check_branch
      %308 = sbr.rel (0) target = $region241
    $region240: #{forward.1} parent=1 // pred_region
      %309 = dma.done [#allocation12], 16
    $region241: #{forward.1} parent=1 // pred_fallthru
      _
    // Predicated region
    $region242: #{forward.1} parent=1 // pred_check
      _
    $region243: #{forward.1} parent=1 // pred_check_branch
      %311 = sbr.rel (0) target = $region245
    $region244: #{forward.1} parent=1 // pred_region
      %312 = dma.done [#allocation12], 16
    $region245: #{forward.1} parent=1 // pred_fallthru
      _
    // Predicated region
    $region246: #{forward.1} parent=1 // pred_check
      _
    $region247: #{forward.1} parent=1 // pred_check_branch
      %314 = sbr.rel (0) target = $region249
    $region248: #{forward.1} parent=1 // pred_region
      %315 = dma.done [#allocation15], 16
    $region249: #{forward.1} parent=1 // pred_fallthru
      _
    %v316 = vld [vmem:[%s3] sm:$0x1]
    %v317 = vld [vmem:[%s5] sm:$0xff]
    %v318 = vld [vmem:[%s7] sm:$0x1]
    %v319 = vld [vmem:[%s9] sm:$0xf]
    %v320 = vld [vmem:[%s11] sm:$0x1]
    %v321 = vld [vmem:[%s13] sm:$0x3]
    %v322 = vld [vmem:[%s15] sm:$0x1]
    %v323 = vld [vmem:[%s17] sm:$0xff]
    %v324 = vld [vmem:[%s17 + $0x8] sm:$0xff]
    %v325 = vld [vmem:[%s17 + $0x10] sm:$0xff]
    %v326 = vld [vmem:[%s17 + $0x18] sm:$0xff]
    %v327 = vld [vmem:[%s17 + $0x20] sm:$0xff]
    %v328 = vld [vmem:[%s17 + $0x28] sm:$0xff]
    %v329 = vld [vmem:[%s17 + $0x30] sm:$0xff]
    %v330 = vld [vmem:[%s17 + $0x38] sm:$0xff]
    %v331 = vld [vmem:[%s19] sm:$0x1]
    %v332 = vld [vmem:[%s21] sm:$0x1]
    %v333 = vld [vmem:[%s23] sm:$0x1]
    %v334 = vld [vmem:[%s25] sm:$0x1]
    %v335 = vld [vmem:[%s27] sm:$0x1]
    %v336 = vld [vmem:[%s29] sm:$0xff]
    %v337 = vld [vmem:[%s29 + $0x8] sm:$0xff]
    %v338 = vld [vmem:[%s31] sm:$0x1]
    %v339 = vld [vmem:[%s33] sm:$0xff]
    %v340 = vld [vmem:[%s33 + $0x8] sm:$0xff]
    %v341 = vld [vmem:[%s33 + $0x10] sm:$0xff]
    %v342 = vld [vmem:[%s33 + $0x18] sm:$0xff]
    %v343 = vld [vmem:[%s35] sm:$0x1]
    %v344 = vld [vmem:[%s37] sm:$0xff]
    %v345 = vld [vmem:[%s37 + $0x8] sm:$0xff]
    %v346 = vld [vmem:[%s39] sm:$0x1]
    %v347 = vld [vmem:[%s41] sm:$0xff]
    %v348 = vld [vmem:[%s41 + $0x8] sm:$0xff]
    %v349 = vld [vmem:[%s43] sm:$0x1]
    %v350 = vld [vmem:[%s45] sm:$0x1]
    %v351 = vld [vmem:[%s47] sm:$0x1]
    %v352 = vld [vmem:[%s49] sm:$0x1]
    %v353 = vld [vmem:[%s51] sm:$0x1]
    %v354 = vld [vmem:[%s53] sm:$0xff]
    %v355 = vld [vmem:[%s53 + $0x8] sm:$0xff]
    %v356 = vld [vmem:[%s55] sm:$0x1]
    %v357 = vld [vmem:[%s57] sm:$0xff]
    %v358 = vld [vmem:[%s57 + $0x8] sm:$0xff]
    %v359 = vld [vmem:[%s57 + $0x10] sm:$0xff]
    %v360 = vld [vmem:[%s57 + $0x18] sm:$0xff]
    %v361 = vld [vmem:[%s59] sm:$0x1]
    %v362 = vld [vmem:[%s61] sm:$0xff]
    %v363 = vld [vmem:[%s61 + $0x8] sm:$0xff]
    %v364 = vld [vmem:[%s63] sm:$0x1]
    %v365 = vld [vmem:[%s65] sm:$0xff]
    %v366 = vld [vmem:[%s65 + $0x8] sm:$0xff]
    %v367 = vld [vmem:[%s67] sm:$0xf]
    %v368 = vld [vmem:[%s69] sm:$0xff]
    %v369 = vld [vmem:[%s69 + $0x8] sm:$0xff]
    %v370 = vld [vmem:[%s69 + $0x10] sm:$0xff]
    %v371 = vld [vmem:[%s69 + $0x18] sm:$0xff]
    %v372 = vld [vmem:[%s69 + $0x20] sm:$0xff]
    %v373 = vld [vmem:[%s69 + $0x28] sm:$0xff]
    %v374 = vld [vmem:[%s69 + $0x30] sm:$0xff]
    %v375 = vld [vmem:[%s69 + $0x38] sm:$0xff]
    %v376 = vld [vmem:[%s71] sm:$0x1]
    %v377 = vld [vmem:[%s73] sm:$0xff]
    %v378 = vld [vmem:[%s73 + $0x8] sm:$0xff]
    %v379 = vld [vmem:[%s73 + $0x10] sm:$0xff]
    %v380 = vld [vmem:[%s73 + $0x18] sm:$0xff]
    %v381 = vld [vmem:[%s73 + $0x20] sm:$0xff]
    %v382 = vld [vmem:[%s73 + $0x28] sm:$0xff]
    %v383 = vld [vmem:[%s73 + $0x30] sm:$0xff]
    %v384 = vld [vmem:[%s73 + $0x38] sm:$0xff]
    %v385 = vld [vmem:[%s73 + $0x40] sm:$0xff]
    %v386 = vld [vmem:[%s73 + $0x48] sm:$0xff]
    %v387 = vld [vmem:[%s73 + $0x50] sm:$0xff]
    %v388 = vld [vmem:[%s73 + $0x58] sm:$0xff]
    %v389 = vld [vmem:[%s73 + $0x60] sm:$0xff]
    %v390 = vld [vmem:[%s73 + $0x68] sm:$0xff]
    %v391 = vld [vmem:[%s73 + $0x70] sm:$0xff]
    %v392 = vld [vmem:[%s73 + $0x78] sm:$0xff]
    %v393 = vld [vmem:[%s73 + $0x80] sm:$0xff]
    %v394 = vld [vmem:[%s73 + $0x88] sm:$0xff]
    %v395 = vld [vmem:[%s73 + $0x90] sm:$0xff]
    %v396 = vld [vmem:[%s73 + $0x98] sm:$0xff]
    %v397 = vld [vmem:[%s73 + $0xa0] sm:$0xff]
    %v398 = vld [vmem:[%s73 + $0xa8] sm:$0xff]
    %v399 = vld [vmem:[%s73 + $0xb0] sm:$0xff]
    %v400 = vld [vmem:[%s73 + $0xb8] sm:$0xff]
    %v401 = vld [vmem:[%s73 + $0xc0] sm:$0xff]
    %v402 = vld [vmem:[%s73 + $0xc8] sm:$0xff]
    %v403 = vld [vmem:[%s73 + $0xd0] sm:$0xff]
    %v404 = vld [vmem:[%s73 + $0xd8] sm:$0xff]
    %v405 = vld [vmem:[%s73 + $0xe0] sm:$0xff]
    %v406 = vld [vmem:[%s73 + $0xe8] sm:$0xff]
    %v407 = vld [vmem:[%s73 + $0xf0] sm:$0xff]
    %v408 = vld [vmem:[%s73 + $0xf8] sm:$0xff]
    %v409 = vld [vmem:[%s73 + $0x100] sm:$0xff]
    %v410 = vld [vmem:[%s73 + $0x108] sm:$0xff]
    %v411 = vld [vmem:[%s73 + $0x110] sm:$0xff]
    %v412 = vld [vmem:[%s73 + $0x118] sm:$0xff]
    %v413 = vld [vmem:[%s73 + $0x120] sm:$0xff]
    %v414 = vld [vmem:[%s73 + $0x128] sm:$0xff]
    %v415 = vld [vmem:[%s73 + $0x130] sm:$0xff]
    %v416 = vld [vmem:[%s73 + $0x138] sm:$0xff]
    %v417 = vld [vmem:[%s73 + $0x140] sm:$0xff]
    %v418 = vld [vmem:[%s73 + $0x148] sm:$0xff]
    %v419 = vld [vmem:[%s73 + $0x150] sm:$0xff]
    %v420 = vld [vmem:[%s73 + $0x158] sm:$0xff]
    %v421 = vld [vmem:[%s73 + $0x160] sm:$0xff]
    %v422 = vld [vmem:[%s73 + $0x168] sm:$0xff]
    %v423 = vld [vmem:[%s73 + $0x170] sm:$0xff]
    %v424 = vld [vmem:[%s73 + $0x178] sm:$0xff]
    %v425 = vld [vmem:[%s73 + $0x180] sm:$0xff]
    %v426 = vld [vmem:[%s73 + $0x188] sm:$0xff]
    %v427 = vld [vmem:[%s73 + $0x190] sm:$0xff]
    %v428 = vld [vmem:[%s73 + $0x198] sm:$0xff]
    %v429 = vld [vmem:[%s73 + $0x1a0] sm:$0xff]
    %v430 = vld [vmem:[%s73 + $0x1a8] sm:$0xff]
    %v431 = vld [vmem:[%s73 + $0x1b0] sm:$0xff]
    %v432 = vld [vmem:[%s73 + $0x1b8] sm:$0xff]
    %v433 = vld [vmem:[%s73 + $0x1c0] sm:$0xff]
    %v434 = vld [vmem:[%s73 + $0x1c8] sm:$0xff]
    %v435 = vld [vmem:[%s73 + $0x1d0] sm:$0xff]
    %v436 = vld [vmem:[%s73 + $0x1d8] sm:$0xff]
    %v437 = vld [vmem:[%s73 + $0x1e0] sm:$0xff]
    %v438 = vld [vmem:[%s73 + $0x1e8] sm:$0xff]
    %v439 = vld [vmem:[%s73 + $0x1f0] sm:$0xff]
    %v440 = vld [vmem:[%s73 + $0x1f8] sm:$0xff]
    %v441 = vld [vmem:[%s75] sm:$0xf]
    %v442 = vld [vmem:[%s77] sm:$0xf]
    %v443 = vld [vmem:[#allocation2] sm:$0x1]
    %v444 = vld [vmem:[#allocation5] sm:$0x1]
    %v445 = vld [vmem:[#allocation7] sm:$0x1]
    %v446 = vld [vmem:[%s85] sm:$0xff]
    %v447 = vld [vmem:[#allocation8] sm:$0x1]
    %v448 = vld [vmem:[#allocation10] sm:$0x1]
    %v449 = vld [vmem:[#allocation11] sm:$0x1]
    %v450 = vld [vmem:[%s93] sm:$0xff]
    %v451 = vld [vmem:[#allocation13] sm:$0x1]
    %v452 = vld [vmem:[%s97] sm:$0xff]
    %v453 = vld [vmem:[%s99] sm:$0xff]
    %v454 = vld [vmem:[%s99 + $0x8] sm:$0xff]
    %v455 = vld [vmem:[%s99 + $0x10] sm:$0xff]
    %v456 = vld [vmem:[%s99 + $0x18] sm:$0xff]
    %v457 = vld [vmem:[#allocation14] sm:$0x1]
    %v458 = vld [vmem:[%s103] sm:$0xf]
    %v459 = vld [vmem:[%s105] sm:$0x3]
    %v460 = vld [vmem:[%s107] sm:$0xff]
    %v461 = vld [vmem:[%s107 + $0x8] sm:$0xff]
    %v462 = vld [vmem:[%s107 + $0x10] sm:$0xff]
    %v463 = vld [vmem:[%s107 + $0x18] sm:$0xff]
    %v464 = vld [vmem:[%s1] sm:$0xff]
    %v465 = vld [vmem:[%s1 + $0x8] sm:$0xff]
    %v466 = vld [vmem:[%s1 + $0x10] sm:$0xff]
    %v467 = vld [vmem:[%s1 + $0x18] sm:$0xff]
    %v469 = vlaneseq
    %v470 = vshrl.u32 %v469, 7
    %v471 = vsub.s32 0, %v470
    %v472 = vrot.slane %v457, %v471
    %vm474 = vcmask 31744
    %v476 = vsel %vm474, %v464, 0
    %v479 = vsel %vm474, %v465, 0
    %v482 = vsel %vm474, %v466, 0
    %v485 = vsel %vm474, %v467, 0
    %vm487 = vcmask 1043456
    %v489 = vsel %vm487, %v458, 0
    %491 = vmatprep.subr.mxu0 0.0
    %492 = vmatpush1.msra.mxu0 %v489
    %493 = vmatprep.subr.mxu0 0.0
    %494 = vmatpush1.msra.mxu0 0.0
    %495 = vmatprep.subr.mxu0 0.0
    %496 = vmatpush1.msra.mxu0 0.0
    %497 = vmatprep.subr.mxu0 0.0
    %498 = vmatpush1.msra.mxu0 0.0
    %499 = vmatprep.subr.mxu0 0.0
    %500 = vmatpush1.msra.mxu0 0.0
    %501 = vmatprep.subr.mxu0 0.0
    %502 = vmatpush1.msra.mxu0 0.0
    %503 = vmatprep.subr.mxu0 0.0
    %504 = vmatpush1.msra.mxu0 0.0
    %505 = vmatprep.subr.mxu0 0.0
    %506 = vmatpush1.msra.mxu0 0.0
    %507 = vmatprep.subr.mxu0 0.0
    %508 = vmatpush1.msra.mxu0 0.0
    %509 = vmatprep.subr.mxu0 0.0
    %510 = vmatpush1.msra.mxu0 0.0
    %511 = vmatprep.subr.mxu0 0.0
    %512 = vmatpush1.msra.mxu0 0.0
    %513 = vmatprep.subr.mxu0 0.0
    %514 = vmatpush1.msra.mxu0 0.0
    %515 = vmatprep.subr.mxu0 0.0
    %516 = vmatpush1.msra.mxu0 0.0
    %517 = vmatprep.subr.mxu0 0.0
    %518 = vmatpush1.msra.mxu0 0.0
    %519 = vmatprep.subr.mxu0 0.0
    %520 = vmatpush1.msra.mxu0 0.0
    %521 = vmatprep.subr.mxu0 0.0
    %522 = vmatpush1.msra.mxu0 0.0
    %523 = vmatprep.subr.mxu0 0.0
    %524 = vmatpush1.msra.mxu0 0.0
    %525 = vmatprep.subr.mxu0 0.0
    %526 = vmatpush1.msra.mxu0 0.0
    %527 = vmatprep.subr.mxu0 0.0
    %528 = vmatpush1.msra.mxu0 0.0
    %529 = vmatprep.subr.mxu0 0.0
    %530 = vmatpush1.msra.mxu0 0.0
    %531 = vmatprep.subr.mxu0 0.0
    %532 = vmatpush1.msra.mxu0 0.0
    %533 = vmatprep.subr.mxu0 0.0
    %534 = vmatpush1.msra.mxu0 0.0
    %535 = vmatprep.subr.mxu0 0.0
    %536 = vmatpush1.msra.mxu0 0.0
    %537 = vmatprep.subr.mxu0 0.0
    %538 = vmatpush1.msra.mxu0 0.0
    %539 = vmatprep.subr.mxu0 0.0
    %540 = vmatpush1.msra.mxu0 0.0
    %541 = vmatprep.subr.mxu0 0.0
    %542 = vmatpush1.msra.mxu0 0.0
    %543 = vmatprep.subr.mxu0 0.0
    %544 = vmatpush1.msra.mxu0 0.0
    %545 = vmatprep.subr.mxu0 0.0
    %546 = vmatpush1.msra.mxu0 0.0
    %547 = vmatprep.subr.mxu0 0.0
    %548 = vmatpush1.msra.mxu0 0.0
    %549 = vmatprep.subr.mxu0 0.0
    %550 = vmatpush1.msra.mxu0 0.0
    %551 = vmatprep.subr.mxu0 0.0
    %552 = vmatpush1.msra.mxu0 0.0
    %553 = vmatprep.subr.mxu0 0.0
    %554 = vmatpush1.msra.mxu0 0.0
    %555 = vmatprep.mubr.f32.mxu0 0.0
    %556 = vmatmul.mubr.f32.gmra.mrb[0].mxu0 %v476
    %v557 = vpop.f32.mrb[0].mxu0
    %v558 = vadd.f32 %v472, %v557
    %v559 = vpop.f32.mrb[0].mxu0
    %560 = vmatprep.mubr.f32.mxu0 0.0
    %561 = vmatmul.mubr.f32.gmra.mrb[0].mxu0 %v479
    %v562 = vpop.f32.mrb[0].mxu0
    %v563 = vadd.f32 %v472, %v562
    %v564 = vpop.f32.mrb[0].mxu0
    %565 = vmatprep.mubr.f32.mxu0 0.0
    %566 = vmatmul.mubr.f32.gmra.mrb[0].mxu0 %v482
    %v567 = vpop.f32.mrb[0].mxu0
    %v568 = vadd.f32 %v472, %v567
    %v569 = vpop.f32.mrb[0].mxu0
    %570 = vmatprep.mubr.f32.mxu0 0.0
    %571 = vmatmul.mubr.f32.gmra.mrb[0].mxu0 %v485
    %v572 = vpop.f32.mrb[0].mxu0
    %v573 = vadd.f32 %v472, %v572
    %v574 = vpop.f32.mrb[0].mxu0
    %575 = vdwg.mxu0
    %v576 = vadd.f32 %v558, %v460
    %v577 = vadd.f32 %v563, %v461
    %v578 = vadd.f32 %v568, %v462
    %v579 = vadd.f32 %v573, %v463
    %v581 = vlaneseq
    %v582 = vshrl.u32 %v581, 7
    %v583 = vsub.s32 0, %v582
    %v584 = vrot.slane %v343, %v583
    %vm586 = vcmask 130048
    %v588 = vsel %vm586, %v576, 0
    %v591 = vsel %vm586, %v577, 0
    %v594 = vsel %vm586, %v578, 0
    %v597 = vsel %vm586, %v579, 0
    %599 = vmatprep.subr.mxu0 0.0
    %600 = vmatpush1.msra.mxu0 %v344
    %601 = vmatprep.subr.mxu0 0.0
    %602 = vmatpush1.msra.mxu0 %v345
    %603 = vmatprep.subr.mxu0 0.0
    %604 = vmatpush1.msra.mxu0 0.0
    %605 = vmatprep.subr.mxu0 0.0
    %606 = vmatpush1.msra.mxu0 0.0
    %607 = vmatprep.subr.mxu0 0.0
    %608 = vmatpush1.msra.mxu0 0.0
    %609 = vmatprep.subr.mxu0 0.0
    %610 = vmatpush1.msra.mxu0 0.0
    %611 = vmatprep.subr.mxu0 0.0
    %612 = vmatpush1.msra.mxu0 0.0
    %613 = vmatprep.subr.mxu0 0.0
    %614 = vmatpush1.msra.mxu0 0.0
    %615 = vmatprep.subr.mxu0 0.0
    %616 = vmatpush1.msra.mxu0 0.0
    %617 = vmatprep.subr.mxu0 0.0
    %618 = vmatpush1.msra.mxu0 0.0
    %619 = vmatprep.subr.mxu0 0.0
    %620 = vmatpush1.msra.mxu0 0.0
    %621 = vmatprep.subr.mxu0 0.0
    %622 = vmatpush1.msra.mxu0 0.0
    %623 = vmatprep.subr.mxu0 0.0
    %624 = vmatpush1.msra.mxu0 0.0
    %625 = vmatprep.subr.mxu0 0.0
    %626 = vmatpush1.msra.mxu0 0.0
    %627 = vmatprep.subr.mxu0 0.0
    %628 = vmatpush1.msra.mxu0 0.0
    %629 = vmatprep.subr.mxu0 0.0
    %630 = vmatpush1.msra.mxu0 0.0
    %631 = vmatprep.subr.mxu0 0.0
    %632 = vmatpush1.msra.mxu0 0.0
    %633 = vmatprep.subr.mxu0 0.0
    %634 = vmatpush1.msra.mxu0 0.0
    %635 = vmatprep.subr.mxu0 0.0
    %636 = vmatpush1.msra.mxu0 0.0
    %637 = vmatprep.subr.mxu0 0.0
    %638 = vmatpush1.msra.mxu0 0.0
    %639 = vmatprep.subr.mxu0 0.0
    %640 = vmatpush1.msra.mxu0 0.0
    %641 = vmatprep.subr.mxu0 0.0
    %642 = vmatpush1.msra.mxu0 0.0
    %643 = vmatprep.subr.mxu0 0.0
    %644 = vmatpush1.msra.mxu0 0.0
    %645 = vmatprep.subr.mxu0 0.0
    %646 = vmatpush1.msra.mxu0 0.0
    %647 = vmatprep.subr.mxu0 0.0
    %648 = vmatpush1.msra.mxu0 0.0
    %649 = vmatprep.subr.mxu0 0.0
    %650 = vmatpush1.msra.mxu0 0.0
    %651 = vmatprep.subr.mxu0 0.0
    %652 = vmatpush1.msra.mxu0 0.0
    %653 = vmatprep.subr.mxu0 0.0
    %654 = vmatpush1.msra.mxu0 0.0
    %655 = vmatprep.subr.mxu0 0.0
    %656 = vmatpush1.msra.mxu0 0.0
    %657 = vmatprep.subr.mxu0 0.0
    %658 = vmatpush1.msra.mxu0 0.0
    %659 = vmatprep.subr.mxu0 0.0
    %660 = vmatpush1.msra.mxu0 0.0
    %661 = vmatprep.subr.mxu0 0.0
    %662 = vmatpush1.msra.mxu0 0.0
    %663 = vmatprep.mubr.f32.mxu0 0.0
    %664 = vmatmul.mubr.f32.gmra.mrb[0].mxu0 %v588
    %v665 = vpop.f32.mrb[0].mxu0
    %v666 = vadd.f32 %v584, %v665
    %v667 = vpop.f32.mrb[0].mxu0
    %668 = vmatprep.mubr.f32.mxu0 0.0
    %669 = vmatmul.mubr.f32.gmra.mrb[0].mxu0 %v591
    %v670 = vpop.f32.mrb[0].mxu0
    %v671 = vadd.f32 %v584, %v670
    %v672 = vpop.f32.mrb[0].mxu0
    %673 = vmatprep.mubr.f32.mxu0 0.0
    %674 = vmatmul.mubr.f32.gmra.mrb[0].mxu0 %v594
    %v675 = vpop.f32.mrb[0].mxu0
    %v676 = vadd.f32 %v584, %v675
    %v677 = vpop.f32.mrb[0].mxu0
    %678 = vmatprep.mubr.f32.mxu0 0.0
    %679 = vmatmul.mubr.f32.gmra.mrb[0].mxu0 %v597
    %v680 = vpop.f32.mrb[0].mxu0
    %v681 = vadd.f32 %v584, %v680
    %v682 = vpop.f32.mrb[0].mxu0
    %683 = vdwg.mxu0
    %688 = vrot.lane.b32.xlu0 %v666, 112
    %v689 = vpop.permute.xlu0 %688
    %690 = vrot.lane.b32.xlu0 %v671, 112
    %v691 = vpop.permute.xlu0 %690
    %692 = vrot.lane.b32.xlu0 %v676, 112
    %v693 = vpop.permute.xlu0 %692
    %694 = vrot.lane.b32.xlu0 %v681, 112
    %v695 = vpop.permute.xlu0 %694
    %vm696 = vcmask 64512
    %v697 = vsel %vm696, %v666, 0
    %v699 = vsel %vm696, %v671, 0
    %v701 = vsel %vm696, %v676, 0
    %v703 = vsel %vm696, %v681, 0
    %v705 = vsel %vm696, %v689, 0
    %v707 = vsel %vm696, %v691, 0
    %v709 = vsel %vm696, %v693, 0
    %v711 = vsel %vm696, %v695, 0
    %713 = vmatprep.subr.mxu0 0.0
    %714 = vmatpush1.xpose.msra.mxu0 %v705
    %715 = vmatprep.subr.mxu0 0.0
    %716 = vmatpush1.xpose.msra.mxu0 %v707
    %717 = vmatprep.subr.mxu0 0.0
    %718 = vmatpush1.xpose.msra.mxu0 %v709
    %719 = vmatprep.subr.mxu0 0.0
    %720 = vmatpush1.xpose.msra.mxu0 %v711
    %721 = vmatprep.subr.mxu0 0.0
    %722 = vmatpush1.xpose.msra.mxu0 0.0
    %723 = vmatprep.subr.mxu0 0.0
    %724 = vmatpush1.xpose.msra.mxu0 0.0
    %725 = vmatprep.subr.mxu0 0.0
    %726 = vmatpush1.xpose.msra.mxu0 0.0
    %727 = vmatprep.subr.mxu0 0.0
    %728 = vmatpush1.xpose.msra.mxu0 0.0
    %729 = vmatprep.subr.mxu0 0.0
    %730 = vmatpush1.xpose.msra.mxu0 0.0
    %731 = vmatprep.subr.mxu0 0.0
    %732 = vmatpush1.xpose.msra.mxu0 0.0
    %733 = vmatprep.subr.mxu0 0.0
    %734 = vmatpush1.xpose.msra.mxu0 0.0
    %735 = vmatprep.subr.mxu0 0.0
    %736 = vmatpush1.xpose.msra.mxu0 0.0
    %737 = vmatprep.subr.mxu0 0.0
    %738 = vmatpush1.xpose.msra.mxu0 0.0
    %739 = vmatprep.subr.mxu0 0.0
    %740 = vmatpush1.xpose.msra.mxu0 0.0
    %741 = vmatprep.subr.mxu0 0.0
    %742 = vmatpush1.xpose.msra.mxu0 0.0
    %743 = vmatprep.subr.mxu0 0.0
    %744 = vmatpush1.xpose.msra.mxu0 0.0
    %745 = vmatprep.subr.mxu0 0.0
    %746 = vmatpush1.xpose.msra.mxu0 0.0
    %747 = vmatprep.subr.mxu0 0.0
    %748 = vmatpush1.xpose.msra.mxu0 0.0
    %749 = vmatprep.subr.mxu0 0.0
    %750 = vmatpush1.xpose.msra.mxu0 0.0
    %751 = vmatprep.subr.mxu0 0.0
    %752 = vmatpush1.xpose.msra.mxu0 0.0
    %753 = vmatprep.subr.mxu0 0.0
    %754 = vmatpush1.xpose.msra.mxu0 0.0
    %755 = vmatprep.subr.mxu0 0.0
    %756 = vmatpush1.xpose.msra.mxu0 0.0
    %757 = vmatprep.subr.mxu0 0.0
    %758 = vmatpush1.xpose.msra.mxu0 0.0
    %759 = vmatprep.subr.mxu0 0.0
    %760 = vmatpush1.xpose.msra.mxu0 0.0
    %761 = vmatprep.subr.mxu0 0.0
    %762 = vmatpush1.xpose.msra.mxu0 0.0
    %763 = vmatprep.subr.mxu0 0.0
    %764 = vmatpush1.xpose.msra.mxu0 0.0
    %765 = vmatprep.subr.mxu0 0.0
    %766 = vmatpush1.xpose.msra.mxu0 0.0
    %767 = vmatprep.subr.mxu0 0.0
    %768 = vmatpush1.xpose.msra.mxu0 0.0
    %769 = vmatprep.subr.mxu0 0.0
    %770 = vmatpush1.xpose.msra.mxu0 0.0
    %771 = vmatprep.subr.mxu0 0.0
    %772 = vmatpush1.xpose.msra.mxu0 0.0
    %773 = vmatprep.subr.mxu0 0.0
    %774 = vmatpush1.xpose.msra.mxu0 0.0
    %775 = vmatprep.subr.mxu0 0.0
    %776 = vmatpush1.xpose.msra.mxu0 0.0
    %777 = vmatprep.mubr.f32.mxu0 0.0
    %778 = vmatmul.mubr.f32.gmra.mrb[0].mxu0 %v697
    %v779 = vpop.f32.mrb[0].mxu0
    %v780 = vadd.f32 0.0, %v779
    %v781 = vpop.f32.mrb[0].mxu0
    %782 = vmatprep.mubr.f32.mxu0 0.0
    %783 = vmatmul.mubr.f32.gmra.mrb[0].mxu0 %v699
    %v784 = vpop.f32.mrb[0].mxu0
    %v785 = vadd.f32 0.0, %v784
    %v786 = vpop.f32.mrb[0].mxu0
    %787 = vmatprep.mubr.f32.mxu0 0.0
    %788 = vmatmul.mubr.f32.gmra.mrb[0].mxu0 %v701
    %v789 = vpop.f32.mrb[0].mxu0
    %v790 = vadd.f32 0.0, %v789
    %v791 = vpop.f32.mrb[0].mxu0
    %792 = vmatprep.mubr.f32.mxu0 0.0
    %793 = vmatmul.mubr.f32.gmra.mrb[0].mxu0 %v703
    %v794 = vpop.f32.mrb[0].mxu0
    %v795 = vadd.f32 0.0, %v794
    %v796 = vpop.f32.mrb[0].mxu0
    %797 = vdwg.mxu0
    %v798 = vmul.f32 %v780, 0.35355338
    %v799 = vmul.f32 %v785, 0.35355338
    %v800 = vmul.f32 %v790, 0.35355338
    %v801 = vmul.f32 %v795, 0.35355338
    %v802 = vadd.f32 %v798, %v453
    %v803 = vadd.f32 %v799, %v454
    %v804 = vadd.f32 %v800, %v455
    %v805 = vadd.f32 %v801, %v456
    %vm806 = vcmask 261120
    %v807 = vsel %vm806, %v802, -inf
    %808 = vmax.xlane.f32.xlu0 %v807
    %v809 = vpop.xlane.xlu0 %808
    %v810 = vsel %vm806, %v803, -inf
    %811 = vmax.xlane.f32.xlu0 %v810
    %v812 = vpop.xlane.xlu0 %811
    %v813 = vsel %vm806, %v804, -inf
    %814 = vmax.xlane.f32.xlu0 %v813
    %v815 = vpop.xlane.xlu0 %814
    %v816 = vsel %vm806, %v805, -inf
    %817 = vmax.xlane.f32.xlu0 %v816
    %v818 = vpop.xlane.xlu0 %817
    %v819 = vsub.f32 %v802, %v809
    %v820 = vsub.f32 %v803, %v812
    %v821 = vsub.f32 %v804, %v815
    %v822 = vsub.f32 %v805, %v818
    %v823 = vmul.f32 %v819, 1.442695
    %v824 = vpow.pop %v823
    %v825 = vmul.f32 %v820, 1.442695
    %v826 = vpow.pop %v825
    %v827 = vmul.f32 %v821, 1.442695
    %v828 = vpow.pop %v827
    %v829 = vmul.f32 %v822, 1.442695
    %v830 = vpow.pop %v829
    %v831 = vsel %vm806, %v824, 0.0
    %832 = vadd.xlane.f32.xlu0 %v831
    %v833 = vpop.xlane.xlu0 %832
    %v834 = vsel %vm806, %v826, 0.0
    %835 = vadd.xlane.f32.xlu0 %v834
    %v836 = vpop.xlane.xlu0 %835
    %v837 = vsel %vm806, %v828, 0.0
    %838 = vadd.xlane.f32.xlu0 %v837
    %v839 = vpop.xlane.xlu0 %838
    %v840 = vsel %vm806, %v830, 0.0
    %841 = vadd.xlane.f32.xlu0 %v840
    %v842 = vpop.xlane.xlu0 %841
    %v843 = vrcp.pop %v833
    %v844 = vmul.f32 %v824, %v843
    %v845 = vrcp.pop %v836
    %v846 = vmul.f32 %v826, %v845
    %v847 = vrcp.pop %v839
    %v848 = vmul.f32 %v828, %v847
    %v849 = vrcp.pop %v842
    %v850 = vmul.f32 %v830, %v849
    %851 = vrot.lane.b32.xlu0 %v666, 96
    %v852 = vpop.permute.xlu0 %851
    %853 = vrot.lane.b32.xlu0 %v671, 96
    %v854 = vpop.permute.xlu0 %853
    %855 = vrot.lane.b32.xlu0 %v676, 96
    %v856 = vpop.permute.xlu0 %855
    %857 = vrot.lane.b32.xlu0 %v681, 96
    %v858 = vpop.permute.xlu0 %857
    %v864 = vsel %vm806, %v844, 0
    %v867 = vsel %vm806, %v846, 0
    %v870 = vsel %vm806, %v848, 0
    %v873 = vsel %vm806, %v850, 0
    %875 = vmatprep.subr.mxu0 0.0
    %876 = vmatpush1.msra.mxu0 %v852
    %877 = vmatprep.subr.mxu0 0.0
    %878 = vmatpush1.msra.mxu0 %v854
    %879 = vmatprep.subr.mxu0 0.0
    %880 = vmatpush1.msra.mxu0 %v856
    %881 = vmatprep.subr.mxu0 0.0
    %882 = vmatpush1.msra.mxu0 %v858
    %883 = vmatprep.subr.mxu0 0.0
    %884 = vmatpush1.msra.mxu0 0.0
    %885 = vmatprep.subr.mxu0 0.0
    %886 = vmatpush1.msra.mxu0 0.0
    %887 = vmatprep.subr.mxu0 0.0
    %888 = vmatpush1.msra.mxu0 0.0
    %889 = vmatprep.subr.mxu0 0.0
    %890 = vmatpush1.msra.mxu0 0.0
    %891 = vmatprep.subr.mxu0 0.0
    %892 = vmatpush1.msra.mxu0 0.0
    %893 = vmatprep.subr.mxu0 0.0
    %894 = vmatpush1.msra.mxu0 0.0
    %895 = vmatprep.subr.mxu0 0.0
    %896 = vmatpush1.msra.mxu0 0.0
    %897 = vmatprep.subr.mxu0 0.0
    %898 = vmatpush1.msra.mxu0 0.0
    %899 = vmatprep.subr.mxu0 0.0
    %900 = vmatpush1.msra.mxu0 0.0
    %901 = vmatprep.subr.mxu0 0.0
    %902 = vmatpush1.msra.mxu0 0.0
    %903 = vmatprep.subr.mxu0 0.0
    %904 = vmatpush1.msra.mxu0 0.0
    %905 = vmatprep.subr.mxu0 0.0
    %906 = vmatpush1.msra.mxu0 0.0
    %907 = vmatprep.subr.mxu0 0.0
    %908 = vmatpush1.msra.mxu0 0.0
    %909 = vmatprep.subr.mxu0 0.0
    %910 = vmatpush1.msra.mxu0 0.0
    %911 = vmatprep.subr.mxu0 0.0
    %912 = vmatpush1.msra.mxu0 0.0
    %913 = vmatprep.subr.mxu0 0.0
    %914 = vmatpush1.msra.mxu0 0.0
    %915 = vmatprep.subr.mxu0 0.0
    %916 = vmatpush1.msra.mxu0 0.0
    %917 = vmatprep.subr.mxu0 0.0
    %918 = vmatpush1.msra.mxu0 0.0
    %919 = vmatprep.subr.mxu0 0.0
    %920 = vmatpush1.msra.mxu0 0.0
    %921 = vmatprep.subr.mxu0 0.0
    %922 = vmatpush1.msra.mxu0 0.0
    %923 = vmatprep.subr.mxu0 0.0
    %924 = vmatpush1.msra.mxu0 0.0
    %925 = vmatprep.subr.mxu0 0.0
    %926 = vmatpush1.msra.mxu0 0.0
    %927 = vmatprep.subr.mxu0 0.0
    %928 = vmatpush1.msra.mxu0 0.0
    %929 = vmatprep.subr.mxu0 0.0
    %930 = vmatpush1.msra.mxu0 0.0
    %931 = vmatprep.subr.mxu0 0.0
    %932 = vmatpush1.msra.mxu0 0.0
    %933 = vmatprep.subr.mxu0 0.0
    %934 = vmatpush1.msra.mxu0 0.0
    %935 = vmatprep.subr.mxu0 0.0
    %936 = vmatpush1.msra.mxu0 0.0
    %937 = vmatprep.subr.mxu0 0.0
    %938 = vmatpush1.msra.mxu0 0.0
    %939 = vmatprep.mubr.f32.mxu0 0.0
    %940 = vmatmul.mubr.f32.gmra.mrb[0].mxu0 %v864
    %v941 = vpop.f32.mrb[0].mxu0
    %v942 = vadd.f32 0.0, %v941
    %v943 = vpop.f32.mrb[0].mxu0
    %944 = vmatprep.mubr.f32.mxu0 0.0
    %945 = vmatmul.mubr.f32.gmra.mrb[0].mxu0 %v867
    %v946 = vpop.f32.mrb[0].mxu0
    %v947 = vadd.f32 0.0, %v946
    %v948 = vpop.f32.mrb[0].mxu0
    %949 = vmatprep.mubr.f32.mxu0 0.0
    %950 = vmatmul.mubr.f32.gmra.mrb[0].mxu0 %v870
    %v951 = vpop.f32.mrb[0].mxu0
    %v952 = vadd.f32 0.0, %v951
    %v953 = vpop.f32.mrb[0].mxu0
    %954 = vmatprep.mubr.f32.mxu0 0.0
    %955 = vmatmul.mubr.f32.gmra.mrb[0].mxu0 %v873
    %v956 = vpop.f32.mrb[0].mxu0
    %v957 = vadd.f32 0.0, %v956
    %v958 = vpop.f32.mrb[0].mxu0
    %959 = vdwg.mxu0
    %960 = vrot.lane.b32.xlu0 %v666, 120
    %v961 = vpop.permute.xlu0 %960
    %962 = vrot.lane.b32.xlu0 %v671, 120
    %v963 = vpop.permute.xlu0 %962
    %964 = vrot.lane.b32.xlu0 %v676, 120
    %v965 = vpop.permute.xlu0 %964
    %966 = vrot.lane.b32.xlu0 %v681, 120
    %v967 = vpop.permute.xlu0 %966
    %968 = vrot.lane.b32.xlu0 %v666, 104
    %v969 = vpop.permute.xlu0 %968
    %970 = vrot.lane.b32.xlu0 %v671, 104
    %v971 = vpop.permute.xlu0 %970
    %972 = vrot.lane.b32.xlu0 %v676, 104
    %v973 = vpop.permute.xlu0 %972
    %974 = vrot.lane.b32.xlu0 %v681, 104
    %v975 = vpop.permute.xlu0 %974
    %v976 = vsel %vm696, %v961, 0
    %v978 = vsel %vm696, %v963, 0
    %v980 = vsel %vm696, %v965, 0
    %v982 = vsel %vm696, %v967, 0
    %v984 = vsel %vm696, %v969, 0
    %v986 = vsel %vm696, %v971, 0
    %v988 = vsel %vm696, %v973, 0
    %v990 = vsel %vm696, %v975, 0
    %992 = vmatprep.subr.mxu0 0.0
    %993 = vmatpush1.xpose.msra.mxu0 %v984
    %994 = vmatprep.subr.mxu0 0.0
    %995 = vmatpush1.xpose.msra.mxu0 %v986
    %996 = vmatprep.subr.mxu0 0.0
    %997 = vmatpush1.xpose.msra.mxu0 %v988
    %998 = vmatprep.subr.mxu0 0.0
    %999 = vmatpush1.xpose.msra.mxu0 %v990
    %1000 = vmatprep.subr.mxu0 0.0
    %1001 = vmatpush1.xpose.msra.mxu0 0.0
    %1002 = vmatprep.subr.mxu0 0.0
    %1003 = vmatpush1.xpose.msra.mxu0 0.0
    %1004 = vmatprep.subr.mxu0 0.0
    %1005 = vmatpush1.xpose.msra.mxu0 0.0
    %1006 = vmatprep.subr.mxu0 0.0
    %1007 = vmatpush1.xpose.msra.mxu0 0.0
    %1008 = vmatprep.subr.mxu0 0.0
    %1009 = vmatpush1.xpose.msra.mxu0 0.0
    %1010 = vmatprep.subr.mxu0 0.0
    %1011 = vmatpush1.xpose.msra.mxu0 0.0
    %1012 = vmatprep.subr.mxu0 0.0
    %1013 = vmatpush1.xpose.msra.mxu0 0.0
    %1014 = vmatprep.subr.mxu0 0.0
    %1015 = vmatpush1.xpose.msra.mxu0 0.0
    %1016 = vmatprep.subr.mxu0 0.0
    %1017 = vmatpush1.xpose.msra.mxu0 0.0
    %1018 = vmatprep.subr.mxu0 0.0
    %1019 = vmatpush1.xpose.msra.mxu0 0.0
    %1020 = vmatprep.subr.mxu0 0.0
    %1021 = vmatpush1.xpose.msra.mxu0 0.0
    %1022 = vmatprep.subr.mxu0 0.0
    %1023 = vmatpush1.xpose.msra.mxu0 0.0
    %1024 = vmatprep.subr.mxu0 0.0
    %1025 = vmatpush1.xpose.msra.mxu0 0.0
    %1026 = vmatprep.subr.mxu0 0.0
    %1027 = vmatpush1.xpose.msra.mxu0 0.0
    %1028 = vmatprep.subr.mxu0 0.0
    %1029 = vmatpush1.xpose.msra.mxu0 0.0
    %1030 = vmatprep.subr.mxu0 0.0
    %1031 = vmatpush1.xpose.msra.mxu0 0.0
    %1032 = vmatprep.subr.mxu0 0.0
    %1033 = vmatpush1.xpose.msra.mxu0 0.0
    %1034 = vmatprep.subr.mxu0 0.0
    %1035 = vmatpush1.xpose.msra.mxu0 0.0
    %1036 = vmatprep.subr.mxu0 0.0
    %1037 = vmatpush1.xpose.msra.mxu0 0.0
    %1038 = vmatprep.subr.mxu0 0.0
    %1039 = vmatpush1.xpose.msra.mxu0 0.0
    %1040 = vmatprep.subr.mxu0 0.0
    %1041 = vmatpush1.xpose.msra.mxu0 0.0
    %1042 = vmatprep.subr.mxu0 0.0
    %1043 = vmatpush1.xpose.msra.mxu0 0.0
    %1044 = vmatprep.subr.mxu0 0.0
    %1045 = vmatpush1.xpose.msra.mxu0 0.0
    %1046 = vmatprep.subr.mxu0 0.0
    %1047 = vmatpush1.xpose.msra.mxu0 0.0
    %1048 = vmatprep.subr.mxu0 0.0
    %1049 = vmatpush1.xpose.msra.mxu0 0.0
    %1050 = vmatprep.subr.mxu0 0.0
    %1051 = vmatpush1.xpose.msra.mxu0 0.0
    %1052 = vmatprep.subr.mxu0 0.0
    %1053 = vmatpush1.xpose.msra.mxu0 0.0
    %1054 = vmatprep.subr.mxu0 0.0
    %1055 = vmatpush1.xpose.msra.mxu0 0.0
    %1056 = vmatprep.mubr.f32.mxu0 0.0
    %1057 = vmatmul.mubr.f32.gmra.mrb[0].mxu0 %v976
    %v1058 = vpop.f32.mrb[0].mxu0
    %v1059 = vadd.f32 0.0, %v1058
    %v1060 = vpop.f32.mrb[0].mxu0
    %1061 = vmatprep.mubr.f32.mxu0 0.0
    %1062 = vmatmul.mubr.f32.gmra.mrb[0].mxu0 %v978
    %v1063 = vpop.f32.mrb[0].mxu0
    %v1064 = vadd.f32 0.0, %v1063
    %v1065 = vpop.f32.mrb[0].mxu0
    %1066 = vmatprep.mubr.f32.mxu0 0.0
    %1067 = vmatmul.mubr.f32.gmra.mrb[0].mxu0 %v980
    %v1068 = vpop.f32.mrb[0].mxu0
    %v1069 = vadd.f32 0.0, %v1068
    %v1070 = vpop.f32.mrb[0].mxu0
    %1071 = vmatprep.mubr.f32.mxu0 0.0
    %1072 = vmatmul.mubr.f32.gmra.mrb[0].mxu0 %v982
    %v1073 = vpop.f32.mrb[0].mxu0
    %v1074 = vadd.f32 0.0, %v1073
    %v1075 = vpop.f32.mrb[0].mxu0
    %1076 = vdwg.mxu0
    %v1077 = vmul.f32 %v1059, 0.35355338
    %v1078 = vmul.f32 %v1064, 0.35355338
    %v1079 = vmul.f32 %v1069, 0.35355338
    %v1080 = vmul.f32 %v1074, 0.35355338
    %v1081 = vadd.f32 %v1077, %v453
    %v1082 = vadd.f32 %v1078, %v454
    %v1083 = vadd.f32 %v1079, %v455
    %v1084 = vadd.f32 %v1080, %v456
    %v1085 = vsel %vm806, %v1081, -inf
    %1086 = vmax.xlane.f32.xlu0 %v1085
    %v1087 = vpop.xlane.xlu0 %1086
    %v1088 = vsel %vm806, %v1082, -inf
    %1089 = vmax.xlane.f32.xlu0 %v1088
    %v1090 = vpop.xlane.xlu0 %1089
    %v1091 = vsel %vm806, %v1083, -inf
    %1092 = vmax.xlane.f32.xlu0 %v1091
    %v1093 = vpop.xlane.xlu0 %1092
    %v1094 = vsel %vm806, %v1084, -inf
    %1095 = vmax.xlane.f32.xlu0 %v1094
    %v1096 = vpop.xlane.xlu0 %1095
    %v1097 = vsub.f32 %v1081, %v1087
    %v1098 = vsub.f32 %v1082, %v1090
    %v1099 = vsub.f32 %v1083, %v1093
    %v1100 = vsub.f32 %v1084, %v1096
    %v1101 = vmul.f32 %v1097, 1.442695
    %v1102 = vpow.pop %v1101
    %v1103 = vmul.f32 %v1098, 1.442695
    %v1104 = vpow.pop %v1103
    %v1105 = vmul.f32 %v1099, 1.442695
    %v1106 = vpow.pop %v1105
    %v1107 = vmul.f32 %v1100, 1.442695
    %v1108 = vpow.pop %v1107
    %v1109 = vsel %vm806, %v1102, 0.0
    %1110 = vadd.xlane.f32.xlu0 %v1109
    %v1111 = vpop.xlane.xlu0 %1110
    %v1112 = vsel %vm806, %v1104, 0.0
    %1113 = vadd.xlane.f32.xlu0 %v1112
    %v1114 = vpop.xlane.xlu0 %1113
    %v1115 = vsel %vm806, %v1106, 0.0
    %1116 = vadd.xlane.f32.xlu0 %v1115
    %v1117 = vpop.xlane.xlu0 %1116
    %v1118 = vsel %vm806, %v1108, 0.0
    %1119 = vadd.xlane.f32.xlu0 %v1118
    %v1120 = vpop.xlane.xlu0 %1119
    %v1121 = vrcp.pop %v1111
    %v1122 = vmul.f32 %v1102, %v1121
    %v1123 = vrcp.pop %v1114
    %v1124 = vmul.f32 %v1104, %v1123
    %v1125 = vrcp.pop %v1117
    %v1126 = vmul.f32 %v1106, %v1125
    %v1127 = vrcp.pop %v1120
    %v1128 = vmul.f32 %v1108, %v1127
    %1129 = vrot.lane.b32.xlu0 %v666, 88
    %v1130 = vpop.permute.xlu0 %1129
    %1131 = vrot.lane.b32.xlu0 %v671, 88
    %v1132 = vpop.permute.xlu0 %1131
    %1133 = vrot.lane.b32.xlu0 %v676, 88
    %v1134 = vpop.permute.xlu0 %1133
    %1135 = vrot.lane.b32.xlu0 %v681, 88
    %v1136 = vpop.permute.xlu0 %1135
    %v1142 = vsel %vm806, %v1122, 0
    %v1145 = vsel %vm806, %v1124, 0
    %v1148 = vsel %vm806, %v1126, 0
    %v1151 = vsel %vm806, %v1128, 0
    %1153 = vmatprep.subr.mxu0 0.0
    %1154 = vmatpush1.msra.mxu0 %v1130
    %1155 = vmatprep.subr.mxu0 0.0
    %1156 = vmatpush1.msra.mxu0 %v1132
    %1157 = vmatprep.subr.mxu0 0.0
    %1158 = vmatpush1.msra.mxu0 %v1134
    %1159 = vmatprep.subr.mxu0 0.0
    %1160 = vmatpush1.msra.mxu0 %v1136
    %1161 = vmatprep.subr.mxu0 0.0
    %1162 = vmatpush1.msra.mxu0 0.0
    %1163 = vmatprep.subr.mxu0 0.0
    %1164 = vmatpush1.msra.mxu0 0.0
    %1165 = vmatprep.subr.mxu0 0.0
    %1166 = vmatpush1.msra.mxu0 0.0
    %1167 = vmatprep.subr.mxu0 0.0
    %1168 = vmatpush1.msra.mxu0 0.0
    %1169 = vmatprep.subr.mxu0 0.0
    %1170 = vmatpush1.msra.mxu0 0.0
    %1171 = vmatprep.subr.mxu0 0.0
    %1172 = vmatpush1.msra.mxu0 0.0
    %1173 = vmatprep.subr.mxu0 0.0
    %1174 = vmatpush1.msra.mxu0 0.0
    %1175 = vmatprep.subr.mxu0 0.0
    %1176 = vmatpush1.msra.mxu0 0.0
    %1177 = vmatprep.subr.mxu0 0.0
    %1178 = vmatpush1.msra.mxu0 0.0
    %1179 = vmatprep.subr.mxu0 0.0
    %1180 = vmatpush1.msra.mxu0 0.0
    %1181 = vmatprep.subr.mxu0 0.0
    %1182 = vmatpush1.msra.mxu0 0.0
    %1183 = vmatprep.subr.mxu0 0.0
    %1184 = vmatpush1.msra.mxu0 0.0
    %1185 = vmatprep.subr.mxu0 0.0
    %1186 = vmatpush1.msra.mxu0 0.0
    %1187 = vmatprep.subr.mxu0 0.0
    %1188 = vmatpush1.msra.mxu0 0.0
    %1189 = vmatprep.subr.mxu0 0.0
    %1190 = vmatpush1.msra.mxu0 0.0
    %1191 = vmatprep.subr.mxu0 0.0
    %1192 = vmatpush1.msra.mxu0 0.0
    %1193 = vmatprep.subr.mxu0 0.0
    %1194 = vmatpush1.msra.mxu0 0.0
    %1195 = vmatprep.subr.mxu0 0.0
    %1196 = vmatpush1.msra.mxu0 0.0
    %1197 = vmatprep.subr.mxu0 0.0
    %1198 = vmatpush1.msra.mxu0 0.0
    %1199 = vmatprep.subr.mxu0 0.0
    %1200 = vmatpush1.msra.mxu0 0.0
    %1201 = vmatprep.subr.mxu0 0.0
    %1202 = vmatpush1.msra.mxu0 0.0
    %1203 = vmatprep.subr.mxu0 0.0
    %1204 = vmatpush1.msra.mxu0 0.0
    %1205 = vmatprep.subr.mxu0 0.0
    %1206 = vmatpush1.msra.mxu0 0.0
    %1207 = vmatprep.subr.mxu0 0.0
    %1208 = vmatpush1.msra.mxu0 0.0
    %1209 = vmatprep.subr.mxu0 0.0
    %1210 = vmatpush1.msra.mxu0 0.0
    %1211 = vmatprep.subr.mxu0 0.0
    %1212 = vmatpush1.msra.mxu0 0.0
    %1213 = vmatprep.subr.mxu0 0.0
    %1214 = vmatpush1.msra.mxu0 0.0
    %1215 = vmatprep.subr.mxu0 0.0
    %1216 = vmatpush1.msra.mxu0 0.0
    %1217 = vmatprep.mubr.f32.mxu0 0.0
    %1218 = vmatmul.mubr.f32.gmra.mrb[0].mxu0 %v1142
    %v1219 = vpop.f32.mrb[0].mxu0
    %v1220 = vadd.f32 0.0, %v1219
    %v1221 = vpop.f32.mrb[0].mxu0
    %1222 = vmatprep.mubr.f32.mxu0 0.0
    %1223 = vmatmul.mubr.f32.gmra.mrb[0].mxu0 %v1145
    %v1224 = vpop.f32.mrb[0].mxu0
    %v1225 = vadd.f32 0.0, %v1224
    %v1226 = vpop.f32.mrb[0].mxu0
    %1227 = vmatprep.mubr.f32.mxu0 0.0
    %1228 = vmatmul.mubr.f32.gmra.mrb[0].mxu0 %v1148
    %v1229 = vpop.f32.mrb[0].mxu0
    %v1230 = vadd.f32 0.0, %v1229
    %v1231 = vpop.f32.mrb[0].mxu0
    %1232 = vmatprep.mubr.f32.mxu0 0.0
    %1233 = vmatmul.mubr.f32.gmra.mrb[0].mxu0 %v1151
    %v1234 = vpop.f32.mrb[0].mxu0
    %v1235 = vadd.f32 0.0, %v1234
    %v1236 = vpop.f32.mrb[0].mxu0
    %1237 = vdwg.mxu0
    %v1239 = vsel %vm696, %v1220, 0
    %v1242 = vsel %vm696, %v1225, 0
    %v1245 = vsel %vm696, %v1230, 0
    %v1248 = vsel %vm696, %v1235, 0
    %1250 = vmatprep.subr.mxu0 0.0
    %1251 = vmatpush1.msra.mxu0 %v348
    %1252 = vmatprep.subr.mxu0 0.0
    %1253 = vmatpush1.msra.mxu0 0.0
    %1254 = vmatprep.subr.mxu0 0.0
    %1255 = vmatpush1.msra.mxu0 0.0
    %1256 = vmatprep.subr.mxu0 0.0
    %1257 = vmatpush1.msra.mxu0 0.0
    %1258 = vmatprep.subr.mxu0 0.0
    %1259 = vmatpush1.msra.mxu0 0.0
    %1260 = vmatprep.subr.mxu0 0.0
    %1261 = vmatpush1.msra.mxu0 0.0
    %1262 = vmatprep.subr.mxu0 0.0
    %1263 = vmatpush1.msra.mxu0 0.0
    %1264 = vmatprep.subr.mxu0 0.0
    %1265 = vmatpush1.msra.mxu0 0.0
    %1266 = vmatprep.subr.mxu0 0.0
    %1267 = vmatpush1.msra.mxu0 0.0
    %1268 = vmatprep.subr.mxu0 0.0
    %1269 = vmatpush1.msra.mxu0 0.0
    %1270 = vmatprep.subr.mxu0 0.0
    %1271 = vmatpush1.msra.mxu0 0.0
    %1272 = vmatprep.subr.mxu0 0.0
    %1273 = vmatpush1.msra.mxu0 0.0
    %1274 = vmatprep.subr.mxu0 0.0
    %1275 = vmatpush1.msra.mxu0 0.0
    %1276 = vmatprep.subr.mxu0 0.0
    %1277 = vmatpush1.msra.mxu0 0.0
    %1278 = vmatprep.subr.mxu0 0.0
    %1279 = vmatpush1.msra.mxu0 0.0
    %1280 = vmatprep.subr.mxu0 0.0
    %1281 = vmatpush1.msra.mxu0 0.0
    %1282 = vmatprep.subr.mxu0 0.0
    %1283 = vmatpush1.msra.mxu0 0.0
    %1284 = vmatprep.subr.mxu0 0.0
    %1285 = vmatpush1.msra.mxu0 0.0
    %1286 = vmatprep.subr.mxu0 0.0
    %1287 = vmatpush1.msra.mxu0 0.0
    %1288 = vmatprep.subr.mxu0 0.0
    %1289 = vmatpush1.msra.mxu0 0.0
    %1290 = vmatprep.subr.mxu0 0.0
    %1291 = vmatpush1.msra.mxu0 0.0
    %1292 = vmatprep.subr.mxu0 0.0
    %1293 = vmatpush1.msra.mxu0 0.0
    %1294 = vmatprep.subr.mxu0 0.0
    %1295 = vmatpush1.msra.mxu0 0.0
    %1296 = vmatprep.subr.mxu0 0.0
    %1297 = vmatpush1.msra.mxu0 0.0
    %1298 = vmatprep.subr.mxu0 0.0
    %1299 = vmatpush1.msra.mxu0 0.0
    %1300 = vmatprep.subr.mxu0 0.0
    %1301 = vmatpush1.msra.mxu0 0.0
    %1302 = vmatprep.subr.mxu0 0.0
    %1303 = vmatpush1.msra.mxu0 0.0
    %1304 = vmatprep.subr.mxu0 0.0
    %1305 = vmatpush1.msra.mxu0 0.0
    %1306 = vmatprep.subr.mxu0 0.0
    %1307 = vmatpush1.msra.mxu0 0.0
    %1308 = vmatprep.subr.mxu0 0.0
    %1309 = vmatpush1.msra.mxu0 0.0
    %1310 = vmatprep.subr.mxu0 0.0
    %1311 = vmatpush1.msra.mxu0 0.0
    %1312 = vmatprep.subr.mxu0 0.0
    %1313 = vmatpush1.msra.mxu0 0.0
    %1314 = vmatprep.mubr.f32.mxu0 0.0
    %1315 = vmatmul.mubr.f32.gmra.mrb[0].mxu0 %v1239
    %v1316 = vpop.f32.mrb[0].mxu0
    %v1317 = vadd.f32 0.0, %v1316
    %v1318 = vpop.f32.mrb[0].mxu0
    %1319 = vmatprep.mubr.f32.mxu0 0.0
    %1320 = vmatmul.mubr.f32.gmra.mrb[0].mxu0 %v1242
    %v1321 = vpop.f32.mrb[0].mxu0
    %v1322 = vadd.f32 0.0, %v1321
    %v1323 = vpop.f32.mrb[0].mxu0
    %1324 = vmatprep.mubr.f32.mxu0 0.0
    %1325 = vmatmul.mubr.f32.gmra.mrb[0].mxu0 %v1245
    %v1326 = vpop.f32.mrb[0].mxu0
    %v1327 = vadd.f32 0.0, %v1326
    %v1328 = vpop.f32.mrb[0].mxu0
    %1329 = vmatprep.mubr.f32.mxu0 0.0
    %1330 = vmatmul.mubr.f32.gmra.mrb[0].mxu0 %v1248
    %v1331 = vpop.f32.mrb[0].mxu0
    %v1332 = vadd.f32 0.0, %v1331
    %v1333 = vpop.f32.mrb[0].mxu0
    %1334 = vdwg.mxu0
    %v1336 = vsel %vm696, %v942, 0
    %v1339 = vsel %vm696, %v947, 0
    %v1342 = vsel %vm696, %v952, 0
    %v1345 = vsel %vm696, %v957, 0
    %1347 = vmatprep.subr.mxu0 0.0
    %1348 = vmatpush1.msra.mxu0 %v347
    %1349 = vmatprep.subr.mxu0 0.0
    %1350 = vmatpush1.msra.mxu0 0.0
    %1351 = vmatprep.subr.mxu0 0.0
    %1352 = vmatpush1.msra.mxu0 0.0
    %1353 = vmatprep.subr.mxu0 0.0
    %1354 = vmatpush1.msra.mxu0 0.0
    %1355 = vmatprep.subr.mxu0 0.0
    %1356 = vmatpush1.msra.mxu0 0.0
    %1357 = vmatprep.subr.mxu0 0.0
    %1358 = vmatpush1.msra.mxu0 0.0
    %1359 = vmatprep.subr.mxu0 0.0
    %1360 = vmatpush1.msra.mxu0 0.0
    %1361 = vmatprep.subr.mxu0 0.0
    %1362 = vmatpush1.msra.mxu0 0.0
    %1363 = vmatprep.subr.mxu0 0.0
    %1364 = vmatpush1.msra.mxu0 0.0
    %1365 = vmatprep.subr.mxu0 0.0
    %1366 = vmatpush1.msra.mxu0 0.0
    %1367 = vmatprep.subr.mxu0 0.0
    %1368 = vmatpush1.msra.mxu0 0.0
    %1369 = vmatprep.subr.mxu0 0.0
    %1370 = vmatpush1.msra.mxu0 0.0
    %1371 = vmatprep.subr.mxu0 0.0
    %1372 = vmatpush1.msra.mxu0 0.0
    %1373 = vmatprep.subr.mxu0 0.0
    %1374 = vmatpush1.msra.mxu0 0.0
    %1375 = vmatprep.subr.mxu0 0.0
    %1376 = vmatpush1.msra.mxu0 0.0
    %1377 = vmatprep.subr.mxu0 0.0
    %1378 = vmatpush1.msra.mxu0 0.0
    %1379 = vmatprep.subr.mxu0 0.0
    %1380 = vmatpush1.msra.mxu0 0.0
    %1381 = vmatprep.subr.mxu0 0.0
    %1382 = vmatpush1.msra.mxu0 0.0
    %1383 = vmatprep.subr.mxu0 0.0
    %1384 = vmatpush1.msra.mxu0 0.0
    %1385 = vmatprep.subr.mxu0 0.0
    %1386 = vmatpush1.msra.mxu0 0.0
    %1387 = vmatprep.subr.mxu0 0.0
    %1388 = vmatpush1.msra.mxu0 0.0
    %1389 = vmatprep.subr.mxu0 0.0
    %1390 = vmatpush1.msra.mxu0 0.0
    %1391 = vmatprep.subr.mxu0 0.0
    %1392 = vmatpush1.msra.mxu0 0.0
    %1393 = vmatprep.subr.mxu0 0.0
    %1394 = vmatpush1.msra.mxu0 0.0
    %1395 = vmatprep.subr.mxu0 0.0
    %1396 = vmatpush1.msra.mxu0 0.0
    %1397 = vmatprep.subr.mxu0 0.0
    %1398 = vmatpush1.msra.mxu0 0.0
    %1399 = vmatprep.subr.mxu0 0.0
    %1400 = vmatpush1.msra.mxu0 0.0
    %1401 = vmatprep.subr.mxu0 0.0
    %1402 = vmatpush1.msra.mxu0 0.0
    %1403 = vmatprep.subr.mxu0 0.0
    %1404 = vmatpush1.msra.mxu0 0.0
    %1405 = vmatprep.subr.mxu0 0.0
    %1406 = vmatpush1.msra.mxu0 0.0
    %1407 = vmatprep.subr.mxu0 0.0
    %1408 = vmatpush1.msra.mxu0 0.0
    %1409 = vmatprep.subr.mxu0 0.0
    %1410 = vmatpush1.msra.mxu0 0.0
    %1411 = vmatprep.mubr.f32.mxu0 0.0
    %1412 = vmatmul.mubr.f32.gmra.mrb[0].mxu0 %v1336
    %v1413 = vpop.f32.mrb[0].mxu0
    %v1414 = vadd.f32 %v1317, %v1413
    %v1415 = vpop.f32.mrb[0].mxu0
    %1416 = vmatprep.mubr.f32.mxu0 0.0
    %1417 = vmatmul.mubr.f32.gmra.mrb[0].mxu0 %v1339
    %v1418 = vpop.f32.mrb[0].mxu0
    %v1419 = vadd.f32 %v1322, %v1418
    %v1420 = vpop.f32.mrb[0].mxu0
    %1421 = vmatprep.mubr.f32.mxu0 0.0
    %1422 = vmatmul.mubr.f32.gmra.mrb[0].mxu0 %v1342
    %v1423 = vpop.f32.mrb[0].mxu0
    %v1424 = vadd.f32 %v1327, %v1423
    %v1425 = vpop.f32.mrb[0].mxu0
    %1426 = vmatprep.mubr.f32.mxu0 0.0
    %1427 = vmatmul.mubr.f32.gmra.mrb[0].mxu0 %v1345
    %v1428 = vpop.f32.mrb[0].mxu0
    %v1429 = vadd.f32 %v1332, %v1428
    %v1430 = vpop.f32.mrb[0].mxu0
    %1431 = vdwg.mxu0
    %v1432 = vadd.f32 %v576, %v1414
    %v1433 = vadd.f32 %v577, %v1419
    %v1434 = vadd.f32 %v578, %v1424
    %v1435 = vadd.f32 %v579, %v1429
    %v1437 = vlaneseq
    %v1438 = vshrl.u32 %v1437, 7
    %v1439 = vsub.s32 0, %v1438
    %v1440 = vrot.slane %v346, %v1439
    %v1442 = vadd.f32 %v1432, %v1440
    %v1443 = vadd.f32 %v1433, %v1440
    %v1444 = vadd.f32 %v1434, %v1440
    %v1445 = vadd.f32 %v1435, %v1440
    %v1447 = vlaneseq
    %v1448 = vshrl.u32 %v1447, 7
    %v1449 = vsub.s32 0, %v1448
    %v1450 = vrot.slane %v331, %v1449
    %v1452 = vmul.f32 %v1442, %v1450
    %v1453 = vmul.f32 %v1443, %v1450
    %v1454 = vmul.f32 %v1444, %v1450
    %v1455 = vmul.f32 %v1445, %v1450
    %v1457 = vlaneseq
    %v1458 = vshrl.u32 %v1457, 7
    %v1459 = vsub.s32 0, %v1458
    %v1460 = vrot.slane %v332, %v1459
    %v1462 = vadd.f32 %v1452, %v1460
    %v1463 = vadd.f32 %v1453, %v1460
    %v1464 = vadd.f32 %v1454, %v1460
    %v1465 = vadd.f32 %v1455, %v1460
    %v1467 = vlaneseq
    %v1468 = vshrl.u32 %v1467, 7
    %v1469 = vsub.s32 0, %v1468
    %v1470 = vrot.slane %v335, %v1469
    %v1473 = vsel %vm586, %v1462, 0
    %v1476 = vsel %vm586, %v1463, 0
    %v1479 = vsel %vm586, %v1464, 0
    %v1482 = vsel %vm586, %v1465, 0
    %1484 = vmatprep.subr.mxu0 0.0
    %1485 = vmatpush1.msra.mxu0 %v336
    %1486 = vmatprep.subr.mxu0 0.0
    %1487 = vmatpush1.msra.mxu0 %v337
    %1488 = vmatprep.subr.mxu0 0.0
    %1489 = vmatpush1.msra.mxu0 0.0
    %1490 = vmatprep.subr.mxu0 0.0
    %1491 = vmatpush1.msra.mxu0 0.0
    %1492 = vmatprep.subr.mxu0 0.0
    %1493 = vmatpush1.msra.mxu0 0.0
    %1494 = vmatprep.subr.mxu0 0.0
    %1495 = vmatpush1.msra.mxu0 0.0
    %1496 = vmatprep.subr.mxu0 0.0
    %1497 = vmatpush1.msra.mxu0 0.0
    %1498 = vmatprep.subr.mxu0 0.0
    %1499 = vmatpush1.msra.mxu0 0.0
    %1500 = vmatprep.subr.mxu0 0.0
    %1501 = vmatpush1.msra.mxu0 0.0
    %1502 = vmatprep.subr.mxu0 0.0
    %1503 = vmatpush1.msra.mxu0 0.0
    %1504 = vmatprep.subr.mxu0 0.0
    %1505 = vmatpush1.msra.mxu0 0.0
    %1506 = vmatprep.subr.mxu0 0.0
    %1507 = vmatpush1.msra.mxu0 0.0
    %1508 = vmatprep.subr.mxu0 0.0
    %1509 = vmatpush1.msra.mxu0 0.0
    %1510 = vmatprep.subr.mxu0 0.0
    %1511 = vmatpush1.msra.mxu0 0.0
    %1512 = vmatprep.subr.mxu0 0.0
    %1513 = vmatpush1.msra.mxu0 0.0
    %1514 = vmatprep.subr.mxu0 0.0
    %1515 = vmatpush1.msra.mxu0 0.0
    %1516 = vmatprep.subr.mxu0 0.0
    %1517 = vmatpush1.msra.mxu0 0.0
    %1518 = vmatprep.subr.mxu0 0.0
    %1519 = vmatpush1.msra.mxu0 0.0
    %1520 = vmatprep.subr.mxu0 0.0
    %1521 = vmatpush1.msra.mxu0 0.0
    %1522 = vmatprep.subr.mxu0 0.0
    %1523 = vmatpush1.msra.mxu0 0.0
    %1524 = vmatprep.subr.mxu0 0.0
    %1525 = vmatpush1.msra.mxu0 0.0
    %1526 = vmatprep.subr.mxu0 0.0
    %1527 = vmatpush1.msra.mxu0 0.0
    %1528 = vmatprep.subr.mxu0 0.0
    %1529 = vmatpush1.msra.mxu0 0.0
    %1530 = vmatprep.subr.mxu0 0.0
    %1531 = vmatpush1.msra.mxu0 0.0
    %1532 = vmatprep.subr.mxu0 0.0
    %1533 = vmatpush1.msra.mxu0 0.0
    %1534 = vmatprep.subr.mxu0 0.0
    %1535 = vmatpush1.msra.mxu0 0.0
    %1536 = vmatprep.subr.mxu0 0.0
    %1537 = vmatpush1.msra.mxu0 0.0
    %1538 = vmatprep.subr.mxu0 0.0
    %1539 = vmatpush1.msra.mxu0 0.0
    %1540 = vmatprep.subr.mxu0 0.0
    %1541 = vmatpush1.msra.mxu0 0.0
    %1542 = vmatprep.subr.mxu0 0.0
    %1543 = vmatpush1.msra.mxu0 0.0
    %1544 = vmatprep.subr.mxu0 0.0
    %1545 = vmatpush1.msra.mxu0 0.0
    %1546 = vmatprep.subr.mxu0 0.0
    %1547 = vmatpush1.msra.mxu0 0.0
    %1548 = vmatprep.mubr.f32.mxu0 0.0
    %1549 = vmatmul.mubr.f32.gmra.mrb[0].mxu0 %v1473
    %v1550 = vpop.f32.mrb[0].mxu0
    %v1551 = vadd.f32 %v1470, %v1550
    %v1552 = vpop.f32.mrb[0].mxu0
    %1553 = vmatprep.mubr.f32.mxu0 0.0
    %1554 = vmatmul.mubr.f32.gmra.mrb[0].mxu0 %v1476
    %v1555 = vpop.f32.mrb[0].mxu0
    %v1556 = vadd.f32 %v1470, %v1555
    %v1557 = vpop.f32.mrb[0].mxu0
    %1558 = vmatprep.mubr.f32.mxu0 0.0
    %1559 = vmatmul.mubr.f32.gmra.mrb[0].mxu0 %v1479
    %v1560 = vpop.f32.mrb[0].mxu0
    %v1561 = vadd.f32 %v1470, %v1560
    %v1562 = vpop.f32.mrb[0].mxu0
    %1563 = vmatprep.mubr.f32.mxu0 0.0
    %1564 = vmatmul.mubr.f32.gmra.mrb[0].mxu0 %v1482
    %v1565 = vpop.f32.mrb[0].mxu0
    %v1566 = vadd.f32 %v1470, %v1565
    %v1567 = vpop.f32.mrb[0].mxu0
    %1568 = vdwg.mxu0
    %v1569 = vmul.f32 %v1551, 0.70710677
    %v1570 = vmul.f32 %v1556, 0.70710677
    %v1571 = vmul.f32 %v1561, 0.70710677
    %v1572 = vmul.f32 %v1566, 0.70710677
    %v1573 = vand.u32 2147483647, %v1569
    %v1574 = vand.u32 2147483647, %v1570
    %v1575 = vand.u32 2147483647, %v1571
    %v1576 = vand.u32 2147483647, %v1572
    %v1577 = vmul.f32 %v1573, 0.3275911
    %v1578 = vmul.f32 %v1574, 0.3275911
    %v1579 = vmul.f32 %v1575, 0.3275911
    %v1580 = vmul.f32 %v1576, 0.3275911
    %v1581 = vadd.f32 %v1577, 1.0
    %v1582 = vadd.f32 %v1578, 1.0
    %v1583 = vadd.f32 %v1579, 1.0
    %v1584 = vadd.f32 %v1580, 1.0
    %v1585 = vrcp.pop %v1581
    %v1586 = vmul.f32 1.0, %v1585
    %v1587 = vrcp.pop %v1582
    %v1588 = vmul.f32 1.0, %v1587
    %v1589 = vrcp.pop %v1583
    %v1590 = vmul.f32 1.0, %v1589
    %v1591 = vrcp.pop %v1584
    %v1592 = vmul.f32 1.0, %v1591
    %v1593 = vmul.f32 %v1586, 1.0614054
    %v1594 = vmul.f32 %v1588, 1.0614054
    %v1595 = vmul.f32 %v1590, 1.0614054
    %v1596 = vmul.f32 %v1592, 1.0614054
    %v1597 = vadd.f32 %v1593, -1.4531521
    %v1598 = vadd.f32 %v1594, -1.4531521
    %v1599 = vadd.f32 %v1595, -1.4531521
    %v1600 = vadd.f32 %v1596, -1.4531521
    %v1601 = vmul.f32 %v1597, %v1586
    %v1602 = vmul.f32 %v1598, %v1588
    %v1603 = vmul.f32 %v1599, %v1590
    %v1604 = vmul.f32 %v1600, %v1592
    %v1605 = vadd.f32 %v1601, 1.4214138
    %v1606 = vadd.f32 %v1602, 1.4214138
    %v1607 = vadd.f32 %v1603, 1.4214138
    %v1608 = vadd.f32 %v1604, 1.4214138
    %v1609 = vmul.f32 %v1605, %v1586
    %v1610 = vmul.f32 %v1606, %v1588
    %v1611 = vmul.f32 %v1607, %v1590
    %v1612 = vmul.f32 %v1608, %v1592
    %v1613 = vadd.f32 %v1609, -0.28449672
    %v1614 = vadd.f32 %v1610, -0.28449672
    %v1615 = vadd.f32 %v1611, -0.28449672
    %v1616 = vadd.f32 %v1612, -0.28449672
    %v1617 = vmul.f32 %v1613, %v1586
    %v1618 = vmul.f32 %v1614, %v1588
    %v1619 = vmul.f32 %v1615, %v1590
    %v1620 = vmul.f32 %v1616, %v1592
    %v1621 = vadd.f32 %v1617, 0.2548296
    %v1622 = vadd.f32 %v1618, 0.2548296
    %v1623 = vadd.f32 %v1619, 0.2548296
    %v1624 = vadd.f32 %v1620, 0.2548296
    %v1625 = vmul.f32 %v1621, %v1586
    %v1626 = vmul.f32 %v1622, %v1588
    %v1627 = vmul.f32 %v1623, %v1590
    %v1628 = vmul.f32 %v1624, %v1592
    %v1629 = vsub.f32 0.0, %v1573
    %v1630 = vsub.f32 0.0, %v1574
    %v1631 = vsub.f32 0.0, %v1575
    %v1632 = vsub.f32 0.0, %v1576
    %v1633 = vmul.f32 %v1629, %v1573
    %v1634 = vmul.f32 %v1630, %v1574
    %v1635 = vmul.f32 %v1631, %v1575
    %v1636 = vmul.f32 %v1632, %v1576
    %v1637 = vmul.f32 %v1633, 1.442695
    %v1638 = vpow.pop %v1637
    %v1639 = vmul.f32 %v1634, 1.442695
    %v1640 = vpow.pop %v1639
    %v1641 = vmul.f32 %v1635, 1.442695
    %v1642 = vpow.pop %v1641
    %v1643 = vmul.f32 %v1636, 1.442695
    %v1644 = vpow.pop %v1643
    %v1645 = vmul.f32 %v1625, %v1638
    %v1646 = vmul.f32 %v1626, %v1640
    %v1647 = vmul.f32 %v1627, %v1642
    %v1648 = vmul.f32 %v1628, %v1644
    %v1649 = vsub.f32 1.0, %v1645
    %v1650 = vsub.f32 1.0, %v1646
    %v1651 = vsub.f32 1.0, %v1647
    %v1652 = vsub.f32 1.0, %v1648
    %vm1653 = vcmp.ge.f32.partialorder %v1569, 0.0
    %vm1654 = vcmp.ge.f32.partialorder %v1570, 0.0
    %vm1655 = vcmp.ge.f32.partialorder %v1571, 0.0
    %vm1656 = vcmp.ge.f32.partialorder %v1572, 0.0
    %v1657 = vsub.f32 0.0, %v1649
    %v1658 = vsub.f32 0.0, %v1650
    %v1659 = vsub.f32 0.0, %v1651
    %v1660 = vsub.f32 0.0, %v1652
    %v1661 = vsel %vm1653, %v1649, %v1657
    %v1662 = vsel %vm1654, %v1650, %v1658
    %v1663 = vsel %vm1655, %v1651, %v1659
    %v1664 = vsel %vm1656, %v1652, %v1660
    %v1665 = vmul.f32 %v1551, 0.5
    %v1666 = vmul.f32 %v1556, 0.5
    %v1667 = vmul.f32 %v1561, 0.5
    %v1668 = vmul.f32 %v1566, 0.5
    %v1669 = vadd.f32 %v1661, 1.0
    %v1670 = vadd.f32 %v1662, 1.0
    %v1671 = vadd.f32 %v1663, 1.0
    %v1672 = vadd.f32 %v1664, 1.0
    %v1673 = vmul.f32 %v1665, %v1669
    %v1674 = vmul.f32 %v1666, %v1670
    %v1675 = vmul.f32 %v1667, %v1671
    %v1676 = vmul.f32 %v1668, %v1672
    %v1678 = vlaneseq
    %v1679 = vshrl.u32 %v1678, 7
    %v1680 = vsub.s32 0, %v1679
    %v1681 = vrot.slane %v338, %v1680
    %v1684 = vsel %vm806, %v1673, 0
    %v1687 = vsel %vm806, %v1674, 0
    %v1690 = vsel %vm806, %v1675, 0
    %v1693 = vsel %vm806, %v1676, 0
    %1695 = vmatprep.subr.mxu0 0.0
    %1696 = vmatpush1.msra.mxu0 %v339
    %1697 = vmatprep.subr.mxu0 0.0
    %1698 = vmatpush1.msra.mxu0 %v340
    %1699 = vmatprep.subr.mxu0 0.0
    %1700 = vmatpush1.msra.mxu0 %v341
    %1701 = vmatprep.subr.mxu0 0.0
    %1702 = vmatpush1.msra.mxu0 %v342
    %1703 = vmatprep.subr.mxu0 0.0
    %1704 = vmatpush1.msra.mxu0 0.0
    %1705 = vmatprep.subr.mxu0 0.0
    %1706 = vmatpush1.msra.mxu0 0.0
    %1707 = vmatprep.subr.mxu0 0.0
    %1708 = vmatpush1.msra.mxu0 0.0
    %1709 = vmatprep.subr.mxu0 0.0
    %1710 = vmatpush1.msra.mxu0 0.0
    %1711 = vmatprep.subr.mxu0 0.0
    %1712 = vmatpush1.msra.mxu0 0.0
    %1713 = vmatprep.subr.mxu0 0.0
    %1714 = vmatpush1.msra.mxu0 0.0
    %1715 = vmatprep.subr.mxu0 0.0
    %1716 = vmatpush1.msra.mxu0 0.0
    %1717 = vmatprep.subr.mxu0 0.0
    %1718 = vmatpush1.msra.mxu0 0.0
    %1719 = vmatprep.subr.mxu0 0.0
    %1720 = vmatpush1.msra.mxu0 0.0
    %1721 = vmatprep.subr.mxu0 0.0
    %1722 = vmatpush1.msra.mxu0 0.0
    %1723 = vmatprep.subr.mxu0 0.0
    %1724 = vmatpush1.msra.mxu0 0.0
    %1725 = vmatprep.subr.mxu0 0.0
    %1726 = vmatpush1.msra.mxu0 0.0
    %1727 = vmatprep.subr.mxu0 0.0
    %1728 = vmatpush1.msra.mxu0 0.0
    %1729 = vmatprep.subr.mxu0 0.0
    %1730 = vmatpush1.msra.mxu0 0.0
    %1731 = vmatprep.subr.mxu0 0.0
    %1732 = vmatpush1.msra.mxu0 0.0
    %1733 = vmatprep.subr.mxu0 0.0
    %1734 = vmatpush1.msra.mxu0 0.0
    %1735 = vmatprep.subr.mxu0 0.0
    %1736 = vmatpush1.msra.mxu0 0.0
    %1737 = vmatprep.subr.mxu0 0.0
    %1738 = vmatpush1.msra.mxu0 0.0
    %1739 = vmatprep.subr.mxu0 0.0
    %1740 = vmatpush1.msra.mxu0 0.0
    %1741 = vmatprep.subr.mxu0 0.0
    %1742 = vmatpush1.msra.mxu0 0.0
    %1743 = vmatprep.subr.mxu0 0.0
    %1744 = vmatpush1.msra.mxu0 0.0
    %1745 = vmatprep.subr.mxu0 0.0
    %1746 = vmatpush1.msra.mxu0 0.0
    %1747 = vmatprep.subr.mxu0 0.0
    %1748 = vmatpush1.msra.mxu0 0.0
    %1749 = vmatprep.subr.mxu0 0.0
    %1750 = vmatpush1.msra.mxu0 0.0
    %1751 = vmatprep.subr.mxu0 0.0
    %1752 = vmatpush1.msra.mxu0 0.0
    %1753 = vmatprep.subr.mxu0 0.0
    %1754 = vmatpush1.msra.mxu0 0.0
    %1755 = vmatprep.subr.mxu0 0.0
    %1756 = vmatpush1.msra.mxu0 0.0
    %1757 = vmatprep.subr.mxu0 0.0
    %1758 = vmatpush1.msra.mxu0 0.0
    %1759 = vmatprep.mubr.f32.mxu0 0.0
    %1760 = vmatmul.mubr.f32.gmra.mrb[0].mxu0 %v1684
    %v1761 = vpop.f32.mrb[0].mxu0
    %v1762 = vadd.f32 %v1681, %v1761
    %v1763 = vpop.f32.mrb[0].mxu0
    %1764 = vmatprep.mubr.f32.mxu0 0.0
    %1765 = vmatmul.mubr.f32.gmra.mrb[0].mxu0 %v1687
    %v1766 = vpop.f32.mrb[0].mxu0
    %v1767 = vadd.f32 %v1681, %v1766
    %v1768 = vpop.f32.mrb[0].mxu0
    %1769 = vmatprep.mubr.f32.mxu0 0.0
    %1770 = vmatmul.mubr.f32.gmra.mrb[0].mxu0 %v1690
    %v1771 = vpop.f32.mrb[0].mxu0
    %v1772 = vadd.f32 %v1681, %v1771
    %v1773 = vpop.f32.mrb[0].mxu0
    %1774 = vmatprep.mubr.f32.mxu0 0.0
    %1775 = vmatmul.mubr.f32.gmra.mrb[0].mxu0 %v1693
    %v1776 = vpop.f32.mrb[0].mxu0
    %v1777 = vadd.f32 %v1681, %v1776
    %v1778 = vpop.f32.mrb[0].mxu0
    %1779 = vdwg.mxu0
    %v1780 = vadd.f32 %v1462, %v1762
    %v1781 = vadd.f32 %v1463, %v1767
    %v1782 = vadd.f32 %v1464, %v1772
    %v1783 = vadd.f32 %v1465, %v1777
    %v1785 = vlaneseq
    %v1786 = vshrl.u32 %v1785, 7
    %v1787 = vsub.s32 0, %v1786
    %v1788 = vrot.slane %v333, %v1787
    %v1790 = vmul.f32 %v1780, %v1788
    %v1791 = vmul.f32 %v1781, %v1788
    %v1792 = vmul.f32 %v1782, %v1788
    %v1793 = vmul.f32 %v1783, %v1788
    %v1795 = vlaneseq
    %v1796 = vshrl.u32 %v1795, 7
    %v1797 = vsub.s32 0, %v1796
    %v1798 = vrot.slane %v334, %v1797
    %v1800 = vadd.f32 %v1790, %v1798
    %v1801 = vadd.f32 %v1791, %v1798
    %v1802 = vadd.f32 %v1792, %v1798
    %v1803 = vadd.f32 %v1793, %v1798
    %v1805 = vlaneseq
    %v1806 = vshrl.u32 %v1805, 7
    %v1807 = vsub.s32 0, %v1806
    %v1808 = vrot.slane %v361, %v1807
    %v1811 = vsel %vm586, %v1800, 0
    %v1814 = vsel %vm586, %v1801, 0
    %v1817 = vsel %vm586, %v1802, 0
    %v1820 = vsel %vm586, %v1803, 0
    %1822 = vmatprep.subr.mxu0 0.0
    %1823 = vmatpush1.msra.mxu0 %v362
    %1824 = vmatprep.subr.mxu0 0.0
    %1825 = vmatpush1.msra.mxu0 %v363
    %1826 = vmatprep.subr.mxu0 0.0
    %1827 = vmatpush1.msra.mxu0 0.0
    %1828 = vmatprep.subr.mxu0 0.0
    %1829 = vmatpush1.msra.mxu0 0.0
    %1830 = vmatprep.subr.mxu0 0.0
    %1831 = vmatpush1.msra.mxu0 0.0
    %1832 = vmatprep.subr.mxu0 0.0
    %1833 = vmatpush1.msra.mxu0 0.0
    %1834 = vmatprep.subr.mxu0 0.0
    %1835 = vmatpush1.msra.mxu0 0.0
    %1836 = vmatprep.subr.mxu0 0.0
    %1837 = vmatpush1.msra.mxu0 0.0
    %1838 = vmatprep.subr.mxu0 0.0
    %1839 = vmatpush1.msra.mxu0 0.0
    %1840 = vmatprep.subr.mxu0 0.0
    %1841 = vmatpush1.msra.mxu0 0.0
    %1842 = vmatprep.subr.mxu0 0.0
    %1843 = vmatpush1.msra.mxu0 0.0
    %1844 = vmatprep.subr.mxu0 0.0
    %1845 = vmatpush1.msra.mxu0 0.0
    %1846 = vmatprep.subr.mxu0 0.0
    %1847 = vmatpush1.msra.mxu0 0.0
    %1848 = vmatprep.subr.mxu0 0.0
    %1849 = vmatpush1.msra.mxu0 0.0
    %1850 = vmatprep.subr.mxu0 0.0
    %1851 = vmatpush1.msra.mxu0 0.0
    %1852 = vmatprep.subr.mxu0 0.0
    %1853 = vmatpush1.msra.mxu0 0.0
    %1854 = vmatprep.subr.mxu0 0.0
    %1855 = vmatpush1.msra.mxu0 0.0
    %1856 = vmatprep.subr.mxu0 0.0
    %1857 = vmatpush1.msra.mxu0 0.0
    %1858 = vmatprep.subr.mxu0 0.0
    %1859 = vmatpush1.msra.mxu0 0.0
    %1860 = vmatprep.subr.mxu0 0.0
    %1861 = vmatpush1.msra.mxu0 0.0
    %1862 = vmatprep.subr.mxu0 0.0
    %1863 = vmatpush1.msra.mxu0 0.0
    %1864 = vmatprep.subr.mxu0 0.0
    %1865 = vmatpush1.msra.mxu0 0.0
    %1866 = vmatprep.subr.mxu0 0.0
    %1867 = vmatpush1.msra.mxu0 0.0
    %1868 = vmatprep.subr.mxu0 0.0
    %1869 = vmatpush1.msra.mxu0 0.0
    %1870 = vmatprep.subr.mxu0 0.0
    %1871 = vmatpush1.msra.mxu0 0.0
    %1872 = vmatprep.subr.mxu0 0.0
    %1873 = vmatpush1.msra.mxu0 0.0
    %1874 = vmatprep.subr.mxu0 0.0
    %1875 = vmatpush1.msra.mxu0 0.0
    %1876 = vmatprep.subr.mxu0 0.0
    %1877 = vmatpush1.msra.mxu0 0.0
    %1878 = vmatprep.subr.mxu0 0.0
    %1879 = vmatpush1.msra.mxu0 0.0
    %1880 = vmatprep.subr.mxu0 0.0
    %1881 = vmatpush1.msra.mxu0 0.0
    %1882 = vmatprep.subr.mxu0 0.0
    %1883 = vmatpush1.msra.mxu0 0.0
    %1884 = vmatprep.subr.mxu0 0.0
    %1885 = vmatpush1.msra.mxu0 0.0
    %1886 = vmatprep.mubr.f32.mxu0 0.0
    %1887 = vmatmul.mubr.f32.gmra.mrb[0].mxu0 %v1811
    %v1888 = vpop.f32.mrb[0].mxu0
    %v1889 = vadd.f32 %v1808, %v1888
    %v1890 = vpop.f32.mrb[0].mxu0
    %1891 = vmatprep.mubr.f32.mxu0 0.0
    %1892 = vmatmul.mubr.f32.gmra.mrb[0].mxu0 %v1814
    %v1893 = vpop.f32.mrb[0].mxu0
    %v1894 = vadd.f32 %v1808, %v1893
    %v1895 = vpop.f32.mrb[0].mxu0
    %1896 = vmatprep.mubr.f32.mxu0 0.0
    %1897 = vmatmul.mubr.f32.gmra.mrb[0].mxu0 %v1817
    %v1898 = vpop.f32.mrb[0].mxu0
    %v1899 = vadd.f32 %v1808, %v1898
    %v1900 = vpop.f32.mrb[0].mxu0
    %1901 = vmatprep.mubr.f32.mxu0 0.0
    %1902 = vmatmul.mubr.f32.gmra.mrb[0].mxu0 %v1820
    %v1903 = vpop.f32.mrb[0].mxu0
    %v1904 = vadd.f32 %v1808, %v1903
    %v1905 = vpop.f32.mrb[0].mxu0
    %1906 = vdwg.mxu0
    %1911 = vrot.lane.b32.xlu0 %v1889, 112
    %v1912 = vpop.permute.xlu0 %1911
    %1913 = vrot.lane.b32.xlu0 %v1894, 112
    %v1914 = vpop.permute.xlu0 %1913
    %1915 = vrot.lane.b32.xlu0 %v1899, 112
    %v1916 = vpop.permute.xlu0 %1915
    %1917 = vrot.lane.b32.xlu0 %v1904, 112
    %v1918 = vpop.permute.xlu0 %1917
    %v1919 = vsel %vm696, %v1889, 0
    %v1921 = vsel %vm696, %v1894, 0
    %v1923 = vsel %vm696, %v1899, 0
    %v1925 = vsel %vm696, %v1904, 0
    %v1927 = vsel %vm696, %v1912, 0
    %v1929 = vsel %vm696, %v1914, 0
    %v1931 = vsel %vm696, %v1916, 0
    %v1933 = vsel %vm696, %v1918, 0
    %1935 = vmatprep.subr.mxu0 0.0
    %1936 = vmatpush1.xpose.msra.mxu0 %v1927
    %1937 = vmatprep.subr.mxu0 0.0
    %1938 = vmatpush1.xpose.msra.mxu0 %v1929
    %1939 = vmatprep.subr.mxu0 0.0
    %1940 = vmatpush1.xpose.msra.mxu0 %v1931
    %1941 = vmatprep.subr.mxu0 0.0
    %1942 = vmatpush1.xpose.msra.mxu0 %v1933
    %1943 = vmatprep.subr.mxu0 0.0
    %1944 = vmatpush1.xpose.msra.mxu0 0.0
    %1945 = vmatprep.subr.mxu0 0.0
    %1946 = vmatpush1.xpose.msra.mxu0 0.0
    %1947 = vmatprep.subr.mxu0 0.0
    %1948 = vmatpush1.xpose.msra.mxu0 0.0
    %1949 = vmatprep.subr.mxu0 0.0
    %1950 = vmatpush1.xpose.msra.mxu0 0.0
    %1951 = vmatprep.subr.mxu0 0.0
    %1952 = vmatpush1.xpose.msra.mxu0 0.0
    %1953 = vmatprep.subr.mxu0 0.0
    %1954 = vmatpush1.xpose.msra.mxu0 0.0
    %1955 = vmatprep.subr.mxu0 0.0
    %1956 = vmatpush1.xpose.msra.mxu0 0.0
    %1957 = vmatprep.subr.mxu0 0.0
    %1958 = vmatpush1.xpose.msra.mxu0 0.0
    %1959 = vmatprep.subr.mxu0 0.0
    %1960 = vmatpush1.xpose.msra.mxu0 0.0
    %1961 = vmatprep.subr.mxu0 0.0
    %1962 = vmatpush1.xpose.msra.mxu0 0.0
    %1963 = vmatprep.subr.mxu0 0.0
    %1964 = vmatpush1.xpose.msra.mxu0 0.0
    %1965 = vmatprep.subr.mxu0 0.0
    %1966 = vmatpush1.xpose.msra.mxu0 0.0
    %1967 = vmatprep.subr.mxu0 0.0
    %1968 = vmatpush1.xpose.msra.mxu0 0.0
    %1969 = vmatprep.subr.mxu0 0.0
    %1970 = vmatpush1.xpose.msra.mxu0 0.0
    %1971 = vmatprep.subr.mxu0 0.0
    %1972 = vmatpush1.xpose.msra.mxu0 0.0
    %1973 = vmatprep.subr.mxu0 0.0
    %1974 = vmatpush1.xpose.msra.mxu0 0.0
    %1975 = vmatprep.subr.mxu0 0.0
    %1976 = vmatpush1.xpose.msra.mxu0 0.0
    %1977 = vmatprep.subr.mxu0 0.0
    %1978 = vmatpush1.xpose.msra.mxu0 0.0
    %1979 = vmatprep.subr.mxu0 0.0
    %1980 = vmatpush1.xpose.msra.mxu0 0.0
    %1981 = vmatprep.subr.mxu0 0.0
    %1982 = vmatpush1.xpose.msra.mxu0 0.0
    %1983 = vmatprep.subr.mxu0 0.0
    %1984 = vmatpush1.xpose.msra.mxu0 0.0
    %1985 = vmatprep.subr.mxu0 0.0
    %1986 = vmatpush1.xpose.msra.mxu0 0.0
    %1987 = vmatprep.subr.mxu0 0.0
    %1988 = vmatpush1.xpose.msra.mxu0 0.0
    %1989 = vmatprep.subr.mxu0 0.0
    %1990 = vmatpush1.xpose.msra.mxu0 0.0
    %1991 = vmatprep.subr.mxu0 0.0
    %1992 = vmatpush1.xpose.msra.mxu0 0.0
    %1993 = vmatprep.subr.mxu0 0.0
    %1994 = vmatpush1.xpose.msra.mxu0 0.0
    %1995 = vmatprep.subr.mxu0 0.0
    %1996 = vmatpush1.xpose.msra.mxu0 0.0
    %1997 = vmatprep.subr.mxu0 0.0
    %1998 = vmatpush1.xpose.msra.mxu0 0.0
    %1999 = vmatprep.mubr.f32.mxu0 0.0
    %2000 = vmatmul.mubr.f32.gmra.mrb[0].mxu0 %v1919
    %v2001 = vpop.f32.mrb[0].mxu0
    %v2002 = vadd.f32 0.0, %v2001
    %v2003 = vpop.f32.mrb[0].mxu0
    %2004 = vmatprep.mubr.f32.mxu0 0.0
    %2005 = vmatmul.mubr.f32.gmra.mrb[0].mxu0 %v1921
    %v2006 = vpop.f32.mrb[0].mxu0
    %v2007 = vadd.f32 0.0, %v2006
    %v2008 = vpop.f32.mrb[0].mxu0
    %2009 = vmatprep.mubr.f32.mxu0 0.0
    %2010 = vmatmul.mubr.f32.gmra.mrb[0].mxu0 %v1923
    %v2011 = vpop.f32.mrb[0].mxu0
    %v2012 = vadd.f32 0.0, %v2011
    %v2013 = vpop.f32.mrb[0].mxu0
    %2014 = vmatprep.mubr.f32.mxu0 0.0
    %2015 = vmatmul.mubr.f32.gmra.mrb[0].mxu0 %v1925
    %v2016 = vpop.f32.mrb[0].mxu0
    %v2017 = vadd.f32 0.0, %v2016
    %v2018 = vpop.f32.mrb[0].mxu0
    %2019 = vdwg.mxu0
    %v2020 = vmul.f32 %v2002, 0.35355338
    %v2021 = vmul.f32 %v2007, 0.35355338
    %v2022 = vmul.f32 %v2012, 0.35355338
    %v2023 = vmul.f32 %v2017, 0.35355338
    %v2024 = vadd.f32 %v2020, %v798
    %v2025 = vadd.f32 %v2021, %v799
    %v2026 = vadd.f32 %v2022, %v800
    %v2027 = vadd.f32 %v2023, %v801
    %v2028 = vadd.f32 %v2024, %v453
    %v2029 = vadd.f32 %v2025, %v454
    %v2030 = vadd.f32 %v2026, %v455
    %v2031 = vadd.f32 %v2027, %v456
    %v2032 = vsel %vm806, %v2028, -inf
    %2033 = vmax.xlane.f32.xlu0 %v2032
    %v2034 = vpop.xlane.xlu0 %2033
    %v2035 = vsel %vm806, %v2029, -inf
    %2036 = vmax.xlane.f32.xlu0 %v2035
    %v2037 = vpop.xlane.xlu0 %2036
    %v2038 = vsel %vm806, %v2030, -inf
    %2039 = vmax.xlane.f32.xlu0 %v2038
    %v2040 = vpop.xlane.xlu0 %2039
    %v2041 = vsel %vm806, %v2031, -inf
    %2042 = vmax.xlane.f32.xlu0 %v2041
    %v2043 = vpop.xlane.xlu0 %2042
    %v2044 = vsub.f32 %v2028, %v2034
    %v2045 = vsub.f32 %v2029, %v2037
    %v2046 = vsub.f32 %v2030, %v2040
    %v2047 = vsub.f32 %v2031, %v2043
    %v2048 = vmul.f32 %v2044, 1.442695
    %v2049 = vpow.pop %v2048
    %v2050 = vmul.f32 %v2045, 1.442695
    %v2051 = vpow.pop %v2050
    %v2052 = vmul.f32 %v2046, 1.442695
    %v2053 = vpow.pop %v2052
    %v2054 = vmul.f32 %v2047, 1.442695
    %v2055 = vpow.pop %v2054
    %v2056 = vsel %vm806, %v2049, 0.0
    %2057 = vadd.xlane.f32.xlu0 %v2056
    %v2058 = vpop.xlane.xlu0 %2057
    %v2059 = vsel %vm806, %v2051, 0.0
    %2060 = vadd.xlane.f32.xlu0 %v2059
    %v2061 = vpop.xlane.xlu0 %2060
    %v2062 = vsel %vm806, %v2053, 0.0
    %2063 = vadd.xlane.f32.xlu0 %v2062
    %v2064 = vpop.xlane.xlu0 %2063
    %v2065 = vsel %vm806, %v2055, 0.0
    %2066 = vadd.xlane.f32.xlu0 %v2065
    %v2067 = vpop.xlane.xlu0 %2066
    %v2068 = vrcp.pop %v2058
    %v2069 = vmul.f32 %v2049, %v2068
    %v2070 = vrcp.pop %v2061
    %v2071 = vmul.f32 %v2051, %v2070
    %v2072 = vrcp.pop %v2064
    %v2073 = vmul.f32 %v2053, %v2072
    %v2074 = vrcp.pop %v2067
    %v2075 = vmul.f32 %v2055, %v2074
    %2076 = vrot.lane.b32.xlu0 %v1889, 96
    %v2077 = vpop.permute.xlu0 %2076
    %2078 = vrot.lane.b32.xlu0 %v1894, 96
    %v2079 = vpop.permute.xlu0 %2078
    %2080 = vrot.lane.b32.xlu0 %v1899, 96
    %v2081 = vpop.permute.xlu0 %2080
    %2082 = vrot.lane.b32.xlu0 %v1904, 96
    %v2083 = vpop.permute.xlu0 %2082
    %v2089 = vsel %vm806, %v2069, 0
    %v2092 = vsel %vm806, %v2071, 0
    %v2095 = vsel %vm806, %v2073, 0
    %v2098 = vsel %vm806, %v2075, 0
    %2100 = vmatprep.subr.mxu0 0.0
    %2101 = vmatpush1.msra.mxu0 %v2077
    %2102 = vmatprep.subr.mxu0 0.0
    %2103 = vmatpush1.msra.mxu0 %v2079
    %2104 = vmatprep.subr.mxu0 0.0
    %2105 = vmatpush1.msra.mxu0 %v2081
    %2106 = vmatprep.subr.mxu0 0.0
    %2107 = vmatpush1.msra.mxu0 %v2083
    %2108 = vmatprep.subr.mxu0 0.0
    %2109 = vmatpush1.msra.mxu0 0.0
    %2110 = vmatprep.subr.mxu0 0.0
    %2111 = vmatpush1.msra.mxu0 0.0
    %2112 = vmatprep.subr.mxu0 0.0
    %2113 = vmatpush1.msra.mxu0 0.0
    %2114 = vmatprep.subr.mxu0 0.0
    %2115 = vmatpush1.msra.mxu0 0.0
    %2116 = vmatprep.subr.mxu0 0.0
    %2117 = vmatpush1.msra.mxu0 0.0
    %2118 = vmatprep.subr.mxu0 0.0
    %2119 = vmatpush1.msra.mxu0 0.0
    %2120 = vmatprep.subr.mxu0 0.0
    %2121 = vmatpush1.msra.mxu0 0.0
    %2122 = vmatprep.subr.mxu0 0.0
    %2123 = vmatpush1.msra.mxu0 0.0
    %2124 = vmatprep.subr.mxu0 0.0
    %2125 = vmatpush1.msra.mxu0 0.0
    %2126 = vmatprep.subr.mxu0 0.0
    %2127 = vmatpush1.msra.mxu0 0.0
    %2128 = vmatprep.subr.mxu0 0.0
    %2129 = vmatpush1.msra.mxu0 0.0
    %2130 = vmatprep.subr.mxu0 0.0
    %2131 = vmatpush1.msra.mxu0 0.0
    %2132 = vmatprep.subr.mxu0 0.0
    %2133 = vmatpush1.msra.mxu0 0.0
    %2134 = vmatprep.subr.mxu0 0.0
    %2135 = vmatpush1.msra.mxu0 0.0
    %2136 = vmatprep.subr.mxu0 0.0
    %2137 = vmatpush1.msra.mxu0 0.0
    %2138 = vmatprep.subr.mxu0 0.0
    %2139 = vmatpush1.msra.mxu0 0.0
    %2140 = vmatprep.subr.mxu0 0.0
    %2141 = vmatpush1.msra.mxu0 0.0
    %2142 = vmatprep.subr.mxu0 0.0
    %2143 = vmatpush1.msra.mxu0 0.0
    %2144 = vmatprep.subr.mxu0 0.0
    %2145 = vmatpush1.msra.mxu0 0.0
    %2146 = vmatprep.subr.mxu0 0.0
    %2147 = vmatpush1.msra.mxu0 0.0
    %2148 = vmatprep.subr.mxu0 0.0
    %2149 = vmatpush1.msra.mxu0 0.0
    %2150 = vmatprep.subr.mxu0 0.0
    %2151 = vmatpush1.msra.mxu0 0.0
    %2152 = vmatprep.subr.mxu0 0.0
    %2153 = vmatpush1.msra.mxu0 0.0
    %2154 = vmatprep.subr.mxu0 0.0
    %2155 = vmatpush1.msra.mxu0 0.0
    %2156 = vmatprep.subr.mxu0 0.0
    %2157 = vmatpush1.msra.mxu0 0.0
    %2158 = vmatprep.subr.mxu0 0.0
    %2159 = vmatpush1.msra.mxu0 0.0
    %2160 = vmatprep.subr.mxu0 0.0
    %2161 = vmatpush1.msra.mxu0 0.0
    %2162 = vmatprep.subr.mxu0 0.0
    %2163 = vmatpush1.msra.mxu0 0.0
    %2164 = vmatprep.mubr.f32.mxu0 0.0
    %2165 = vmatmul.mubr.f32.gmra.mrb[0].mxu0 %v2089
    %v2166 = vpop.f32.mrb[0].mxu0
    %v2167 = vadd.f32 0.0, %v2166
    %v2168 = vpop.f32.mrb[0].mxu0
    %2169 = vmatprep.mubr.f32.mxu0 0.0
    %2170 = vmatmul.mubr.f32.gmra.mrb[0].mxu0 %v2092
    %v2171 = vpop.f32.mrb[0].mxu0
    %v2172 = vadd.f32 0.0, %v2171
    %v2173 = vpop.f32.mrb[0].mxu0
    %2174 = vmatprep.mubr.f32.mxu0 0.0
    %2175 = vmatmul.mubr.f32.gmra.mrb[0].mxu0 %v2095
    %v2176 = vpop.f32.mrb[0].mxu0
    %v2177 = vadd.f32 0.0, %v2176
    %v2178 = vpop.f32.mrb[0].mxu0
    %2179 = vmatprep.mubr.f32.mxu0 0.0
    %2180 = vmatmul.mubr.f32.gmra.mrb[0].mxu0 %v2098
    %v2181 = vpop.f32.mrb[0].mxu0
    %v2182 = vadd.f32 0.0, %v2181
    %v2183 = vpop.f32.mrb[0].mxu0
    %2184 = vdwg.mxu0
    %2185 = vrot.lane.b32.xlu0 %v1889, 120
    %v2186 = vpop.permute.xlu0 %2185
    %2187 = vrot.lane.b32.xlu0 %v1894, 120
    %v2188 = vpop.permute.xlu0 %2187
    %2189 = vrot.lane.b32.xlu0 %v1899, 120
    %v2190 = vpop.permute.xlu0 %2189
    %2191 = vrot.lane.b32.xlu0 %v1904, 120
    %v2192 = vpop.permute.xlu0 %2191
    %2193 = vrot.lane.b32.xlu0 %v1889, 104
    %v2194 = vpop.permute.xlu0 %2193
    %2195 = vrot.lane.b32.xlu0 %v1894, 104
    %v2196 = vpop.permute.xlu0 %2195
    %2197 = vrot.lane.b32.xlu0 %v1899, 104
    %v2198 = vpop.permute.xlu0 %2197
    %2199 = vrot.lane.b32.xlu0 %v1904, 104
    %v2200 = vpop.permute.xlu0 %2199
    %v2201 = vsel %vm696, %v2186, 0
    %v2203 = vsel %vm696, %v2188, 0
    %v2205 = vsel %vm696, %v2190, 0
    %v2207 = vsel %vm696, %v2192, 0
    %v2209 = vsel %vm696, %v2194, 0
    %v2211 = vsel %vm696, %v2196, 0
    %v2213 = vsel %vm696, %v2198, 0
    %v2215 = vsel %vm696, %v2200, 0
    %2217 = vmatprep.subr.mxu0 0.0
    %2218 = vmatpush1.xpose.msra.mxu0 %v2209
    %2219 = vmatprep.subr.mxu0 0.0
    %2220 = vmatpush1.xpose.msra.mxu0 %v2211
    %2221 = vmatprep.subr.mxu0 0.0
    %2222 = vmatpush1.xpose.msra.mxu0 %v2213
    %2223 = vmatprep.subr.mxu0 0.0
    %2224 = vmatpush1.xpose.msra.mxu0 %v2215
    %2225 = vmatprep.subr.mxu0 0.0
    %2226 = vmatpush1.xpose.msra.mxu0 0.0
    %2227 = vmatprep.subr.mxu0 0.0
    %2228 = vmatpush1.xpose.msra.mxu0 0.0
    %2229 = vmatprep.subr.mxu0 0.0
    %2230 = vmatpush1.xpose.msra.mxu0 0.0
    %2231 = vmatprep.subr.mxu0 0.0
    %2232 = vmatpush1.xpose.msra.mxu0 0.0
    %2233 = vmatprep.subr.mxu0 0.0
    %2234 = vmatpush1.xpose.msra.mxu0 0.0
    %2235 = vmatprep.subr.mxu0 0.0
    %2236 = vmatpush1.xpose.msra.mxu0 0.0
    %2237 = vmatprep.subr.mxu0 0.0
    %2238 = vmatpush1.xpose.msra.mxu0 0.0
    %2239 = vmatprep.subr.mxu0 0.0
    %2240 = vmatpush1.xpose.msra.mxu0 0.0
    %2241 = vmatprep.subr.mxu0 0.0
    %2242 = vmatpush1.xpose.msra.mxu0 0.0
    %2243 = vmatprep.subr.mxu0 0.0
    %2244 = vmatpush1.xpose.msra.mxu0 0.0
    %2245 = vmatprep.subr.mxu0 0.0
    %2246 = vmatpush1.xpose.msra.mxu0 0.0
    %2247 = vmatprep.subr.mxu0 0.0
    %2248 = vmatpush1.xpose.msra.mxu0 0.0
    %2249 = vmatprep.subr.mxu0 0.0
    %2250 = vmatpush1.xpose.msra.mxu0 0.0
    %2251 = vmatprep.subr.mxu0 0.0
    %2252 = vmatpush1.xpose.msra.mxu0 0.0
    %2253 = vmatprep.subr.mxu0 0.0
    %2254 = vmatpush1.xpose.msra.mxu0 0.0
    %2255 = vmatprep.subr.mxu0 0.0
    %2256 = vmatpush1.xpose.msra.mxu0 0.0
    %2257 = vmatprep.subr.mxu0 0.0
    %2258 = vmatpush1.xpose.msra.mxu0 0.0
    %2259 = vmatprep.subr.mxu0 0.0
    %2260 = vmatpush1.xpose.msra.mxu0 0.0
    %2261 = vmatprep.subr.mxu0 0.0
    %2262 = vmatpush1.xpose.msra.mxu0 0.0
    %2263 = vmatprep.subr.mxu0 0.0
    %2264 = vmatpush1.xpose.msra.mxu0 0.0
    %2265 = vmatprep.subr.mxu0 0.0
    %2266 = vmatpush1.xpose.msra.mxu0 0.0
    %2267 = vmatprep.subr.mxu0 0.0
    %2268 = vmatpush1.xpose.msra.mxu0 0.0
    %2269 = vmatprep.subr.mxu0 0.0
    %2270 = vmatpush1.xpose.msra.mxu0 0.0
    %2271 = vmatprep.subr.mxu0 0.0
    %2272 = vmatpush1.xpose.msra.mxu0 0.0
    %2273 = vmatprep.subr.mxu0 0.0
    %2274 = vmatpush1.xpose.msra.mxu0 0.0
    %2275 = vmatprep.subr.mxu0 0.0
    %2276 = vmatpush1.xpose.msra.mxu0 0.0
    %2277 = vmatprep.subr.mxu0 0.0
    %2278 = vmatpush1.xpose.msra.mxu0 0.0
    %2279 = vmatprep.subr.mxu0 0.0
    %2280 = vmatpush1.xpose.msra.mxu0 0.0
    %2281 = vmatprep.mubr.f32.mxu0 0.0
    %2282 = vmatmul.mubr.f32.gmra.mrb[0].mxu0 %v2201
    %v2283 = vpop.f32.mrb[0].mxu0
    %v2284 = vadd.f32 0.0, %v2283
    %v2285 = vpop.f32.mrb[0].mxu0
    %2286 = vmatprep.mubr.f32.mxu0 0.0
    %2287 = vmatmul.mubr.f32.gmra.mrb[0].mxu0 %v2203
    %v2288 = vpop.f32.mrb[0].mxu0
    %v2289 = vadd.f32 0.0, %v2288
    %v2290 = vpop.f32.mrb[0].mxu0
    %2291 = vmatprep.mubr.f32.mxu0 0.0
    %2292 = vmatmul.mubr.f32.gmra.mrb[0].mxu0 %v2205
    %v2293 = vpop.f32.mrb[0].mxu0
    %v2294 = vadd.f32 0.0, %v2293
    %v2295 = vpop.f32.mrb[0].mxu0
    %2296 = vmatprep.mubr.f32.mxu0 0.0
    %2297 = vmatmul.mubr.f32.gmra.mrb[0].mxu0 %v2207
    %v2298 = vpop.f32.mrb[0].mxu0
    %v2299 = vadd.f32 0.0, %v2298
    %v2300 = vpop.f32.mrb[0].mxu0
    %2301 = vdwg.mxu0
    %v2302 = vmul.f32 %v2284, 0.35355338
    %v2303 = vmul.f32 %v2289, 0.35355338
    %v2304 = vmul.f32 %v2294, 0.35355338
    %v2305 = vmul.f32 %v2299, 0.35355338
    %v2306 = vadd.f32 %v2302, %v1077
    %v2307 = vadd.f32 %v2303, %v1078
    %v2308 = vadd.f32 %v2304, %v1079
    %v2309 = vadd.f32 %v2305, %v1080
    %v2310 = vadd.f32 %v2306, %v453
    %v2311 = vadd.f32 %v2307, %v454
    %v2312 = vadd.f32 %v2308, %v455
    %v2313 = vadd.f32 %v2309, %v456
    %v2314 = vsel %vm806, %v2310, -inf
    %2315 = vmax.xlane.f32.xlu0 %v2314
    %v2316 = vpop.xlane.xlu0 %2315
    %v2317 = vsel %vm806, %v2311, -inf
    %2318 = vmax.xlane.f32.xlu0 %v2317
    %v2319 = vpop.xlane.xlu0 %2318
    %v2320 = vsel %vm806, %v2312, -inf
    %2321 = vmax.xlane.f32.xlu0 %v2320
    %v2322 = vpop.xlane.xlu0 %2321
    %v2323 = vsel %vm806, %v2313, -inf
    %2324 = vmax.xlane.f32.xlu0 %v2323
    %v2325 = vpop.xlane.xlu0 %2324
    %v2326 = vsub.f32 %v2310, %v2316
    %v2327 = vsub.f32 %v2311, %v2319
    %v2328 = vsub.f32 %v2312, %v2322
    %v2329 = vsub.f32 %v2313, %v2325
    %v2330 = vmul.f32 %v2326, 1.442695
    %v2331 = vpow.pop %v2330
    %v2332 = vmul.f32 %v2327, 1.442695
    %v2333 = vpow.pop %v2332
    %v2334 = vmul.f32 %v2328, 1.442695
    %v2335 = vpow.pop %v2334
    %v2336 = vmul.f32 %v2329, 1.442695
    %v2337 = vpow.pop %v2336
    %v2338 = vsel %vm806, %v2331, 0.0
    %2339 = vadd.xlane.f32.xlu0 %v2338
    %v2340 = vpop.xlane.xlu0 %2339
    %v2341 = vsel %vm806, %v2333, 0.0
    %2342 = vadd.xlane.f32.xlu0 %v2341
    %v2343 = vpop.xlane.xlu0 %2342
    %v2344 = vsel %vm806, %v2335, 0.0
    %2345 = vadd.xlane.f32.xlu0 %v2344
    %v2346 = vpop.xlane.xlu0 %2345
    %v2347 = vsel %vm806, %v2337, 0.0
    %2348 = vadd.xlane.f32.xlu0 %v2347
    %v2349 = vpop.xlane.xlu0 %2348
    %v2350 = vrcp.pop %v2340
    %v2351 = vmul.f32 %v2331, %v2350
    %v2352 = vrcp.pop %v2343
    %v2353 = vmul.f32 %v2333, %v2352
    %v2354 = vrcp.pop %v2346
    %v2355 = vmul.f32 %v2335, %v2354
    %v2356 = vrcp.pop %v2349
    %v2357 = vmul.f32 %v2337, %v2356
    %2358 = vrot.lane.b32.xlu0 %v1889, 88
    %v2359 = vpop.permute.xlu0 %2358
    %2360 = vrot.lane.b32.xlu0 %v1894, 88
    %v2361 = vpop.permute.xlu0 %2360
    %2362 = vrot.lane.b32.xlu0 %v1899, 88
    %v2363 = vpop.permute.xlu0 %2362
    %2364 = vrot.lane.b32.xlu0 %v1904, 88
    %v2365 = vpop.permute.xlu0 %2364
    %v2371 = vsel %vm806, %v2351, 0
    %v2374 = vsel %vm806, %v2353, 0
    %v2377 = vsel %vm806, %v2355, 0
    %v2380 = vsel %vm806, %v2357, 0
    %2382 = vmatprep.subr.mxu0 0.0
    %2383 = vmatpush1.msra.mxu0 %v2359
    %2384 = vmatprep.subr.mxu0 0.0
    %2385 = vmatpush1.msra.mxu0 %v2361
    %2386 = vmatprep.subr.mxu0 0.0
    %2387 = vmatpush1.msra.mxu0 %v2363
    %2388 = vmatprep.subr.mxu0 0.0
    %2389 = vmatpush1.msra.mxu0 %v2365
    %2390 = vmatprep.subr.mxu0 0.0
    %2391 = vmatpush1.msra.mxu0 0.0
    %2392 = vmatprep.subr.mxu0 0.0
    %2393 = vmatpush1.msra.mxu0 0.0
    %2394 = vmatprep.subr.mxu0 0.0
    %2395 = vmatpush1.msra.mxu0 0.0
    %2396 = vmatprep.subr.mxu0 0.0
    %2397 = vmatpush1.msra.mxu0 0.0
    %2398 = vmatprep.subr.mxu0 0.0
    %2399 = vmatpush1.msra.mxu0 0.0
    %2400 = vmatprep.subr.mxu0 0.0
    %2401 = vmatpush1.msra.mxu0 0.0
    %2402 = vmatprep.subr.mxu0 0.0
    %2403 = vmatpush1.msra.mxu0 0.0
    %2404 = vmatprep.subr.mxu0 0.0
    %2405 = vmatpush1.msra.mxu0 0.0
    %2406 = vmatprep.subr.mxu0 0.0
    %2407 = vmatpush1.msra.mxu0 0.0
    %2408 = vmatprep.subr.mxu0 0.0
    %2409 = vmatpush1.msra.mxu0 0.0
    %2410 = vmatprep.subr.mxu0 0.0
    %2411 = vmatpush1.msra.mxu0 0.0
    %2412 = vmatprep.subr.mxu0 0.0
    %2413 = vmatpush1.msra.mxu0 0.0
    %2414 = vmatprep.subr.mxu0 0.0
    %2415 = vmatpush1.msra.mxu0 0.0
    %2416 = vmatprep.subr.mxu0 0.0
    %2417 = vmatpush1.msra.mxu0 0.0
    %2418 = vmatprep.subr.mxu0 0.0
    %2419 = vmatpush1.msra.mxu0 0.0
    %2420 = vmatprep.subr.mxu0 0.0
    %2421 = vmatpush1.msra.mxu0 0.0
    %2422 = vmatprep.subr.mxu0 0.0
    %2423 = vmatpush1.msra.mxu0 0.0
    %2424 = vmatprep.subr.mxu0 0.0
    %2425 = vmatpush1.msra.mxu0 0.0
    %2426 = vmatprep.subr.mxu0 0.0
    %2427 = vmatpush1.msra.mxu0 0.0
    %2428 = vmatprep.subr.mxu0 0.0
    %2429 = vmatpush1.msra.mxu0 0.0
    %2430 = vmatprep.subr.mxu0 0.0
    %2431 = vmatpush1.msra.mxu0 0.0
    %2432 = vmatprep.subr.mxu0 0.0
    %2433 = vmatpush1.msra.mxu0 0.0
    %2434 = vmatprep.subr.mxu0 0.0
    %2435 = vmatpush1.msra.mxu0 0.0
    %2436 = vmatprep.subr.mxu0 0.0
    %2437 = vmatpush1.msra.mxu0 0.0
    %2438 = vmatprep.subr.mxu0 0.0
    %2439 = vmatpush1.msra.mxu0 0.0
    %2440 = vmatprep.subr.mxu0 0.0
    %2441 = vmatpush1.msra.mxu0 0.0
    %2442 = vmatprep.subr.mxu0 0.0
    %2443 = vmatpush1.msra.mxu0 0.0
    %2444 = vmatprep.subr.mxu0 0.0
    %2445 = vmatpush1.msra.mxu0 0.0
    %2446 = vmatprep.mubr.f32.mxu0 0.0
    %2447 = vmatmul.mubr.f32.gmra.mrb[0].mxu0 %v2371
    %v2448 = vpop.f32.mrb[0].mxu0
    %v2449 = vadd.f32 0.0, %v2448
    %v2450 = vpop.f32.mrb[0].mxu0
    %2451 = vmatprep.mubr.f32.mxu0 0.0
    %2452 = vmatmul.mubr.f32.gmra.mrb[0].mxu0 %v2374
    %v2453 = vpop.f32.mrb[0].mxu0
    %v2454 = vadd.f32 0.0, %v2453
    %v2455 = vpop.f32.mrb[0].mxu0
    %2456 = vmatprep.mubr.f32.mxu0 0.0
    %2457 = vmatmul.mubr.f32.gmra.mrb[0].mxu0 %v2377
    %v2458 = vpop.f32.mrb[0].mxu0
    %v2459 = vadd.f32 0.0, %v2458
    %v2460 = vpop.f32.mrb[0].mxu0
    %2461 = vmatprep.mubr.f32.mxu0 0.0
    %2462 = vmatmul.mubr.f32.gmra.mrb[0].mxu0 %v2380
    %v2463 = vpop.f32.mrb[0].mxu0
    %v2464 = vadd.f32 0.0, %v2463
    %v2465 = vpop.f32.mrb[0].mxu0
    %2466 = vdwg.mxu0
    %v2468 = vsel %vm696, %v2449, 0
    %v2471 = vsel %vm696, %v2454, 0
    %v2474 = vsel %vm696, %v2459, 0
    %v2477 = vsel %vm696, %v2464, 0
    %2479 = vmatprep.subr.mxu0 0.0
    %2480 = vmatpush1.msra.mxu0 %v366
    %2481 = vmatprep.subr.mxu0 0.0
    %2482 = vmatpush1.msra.mxu0 0.0
    %2483 = vmatprep.subr.mxu0 0.0
    %2484 = vmatpush1.msra.mxu0 0.0
    %2485 = vmatprep.subr.mxu0 0.0
    %2486 = vmatpush1.msra.mxu0 0.0
    %2487 = vmatprep.subr.mxu0 0.0
    %2488 = vmatpush1.msra.mxu0 0.0
    %2489 = vmatprep.subr.mxu0 0.0
    %2490 = vmatpush1.msra.mxu0 0.0
    %2491 = vmatprep.subr.mxu0 0.0
    %2492 = vmatpush1.msra.mxu0 0.0
    %2493 = vmatprep.subr.mxu0 0.0
    %2494 = vmatpush1.msra.mxu0 0.0
    %2495 = vmatprep.subr.mxu0 0.0
    %2496 = vmatpush1.msra.mxu0 0.0
    %2497 = vmatprep.subr.mxu0 0.0
    %2498 = vmatpush1.msra.mxu0 0.0
    %2499 = vmatprep.subr.mxu0 0.0
    %2500 = vmatpush1.msra.mxu0 0.0
    %2501 = vmatprep.subr.mxu0 0.0
    %2502 = vmatpush1.msra.mxu0 0.0
    %2503 = vmatprep.subr.mxu0 0.0
    %2504 = vmatpush1.msra.mxu0 0.0
    %2505 = vmatprep.subr.mxu0 0.0
    %2506 = vmatpush1.msra.mxu0 0.0
    %2507 = vmatprep.subr.mxu0 0.0
    %2508 = vmatpush1.msra.mxu0 0.0
    %2509 = vmatprep.subr.mxu0 0.0
    %2510 = vmatpush1.msra.mxu0 0.0
    %2511 = vmatprep.subr.mxu0 0.0
    %2512 = vmatpush1.msra.mxu0 0.0
    %2513 = vmatprep.subr.mxu0 0.0
    %2514 = vmatpush1.msra.mxu0 0.0
    %2515 = vmatprep.subr.mxu0 0.0
    %2516 = vmatpush1.msra.mxu0 0.0
    %2517 = vmatprep.subr.mxu0 0.0
    %2518 = vmatpush1.msra.mxu0 0.0
    %2519 = vmatprep.subr.mxu0 0.0
    %2520 = vmatpush1.msra.mxu0 0.0
    %2521 = vmatprep.subr.mxu0 0.0
    %2522 = vmatpush1.msra.mxu0 0.0
    %2523 = vmatprep.subr.mxu0 0.0
    %2524 = vmatpush1.msra.mxu0 0.0
    %2525 = vmatprep.subr.mxu0 0.0
    %2526 = vmatpush1.msra.mxu0 0.0
    %2527 = vmatprep.subr.mxu0 0.0
    %2528 = vmatpush1.msra.mxu0 0.0
    %2529 = vmatprep.subr.mxu0 0.0
    %2530 = vmatpush1.msra.mxu0 0.0
    %2531 = vmatprep.subr.mxu0 0.0
    %2532 = vmatpush1.msra.mxu0 0.0
    %2533 = vmatprep.subr.mxu0 0.0
    %2534 = vmatpush1.msra.mxu0 0.0
    %2535 = vmatprep.subr.mxu0 0.0
    %2536 = vmatpush1.msra.mxu0 0.0
    %2537 = vmatprep.subr.mxu0 0.0
    %2538 = vmatpush1.msra.mxu0 0.0
    %2539 = vmatprep.subr.mxu0 0.0
    %2540 = vmatpush1.msra.mxu0 0.0
    %2541 = vmatprep.subr.mxu0 0.0
    %2542 = vmatpush1.msra.mxu0 0.0
    %2543 = vmatprep.mubr.f32.mxu0 0.0
    %2544 = vmatmul.mubr.f32.gmra.mrb[0].mxu0 %v2468
    %v2545 = vpop.f32.mrb[0].mxu0
    %v2546 = vadd.f32 0.0, %v2545
    %v2547 = vpop.f32.mrb[0].mxu0
    %2548 = vmatprep.mubr.f32.mxu0 0.0
    %2549 = vmatmul.mubr.f32.gmra.mrb[0].mxu0 %v2471
    %v2550 = vpop.f32.mrb[0].mxu0
    %v2551 = vadd.f32 0.0, %v2550
    %v2552 = vpop.f32.mrb[0].mxu0
    %2553 = vmatprep.mubr.f32.mxu0 0.0
    %2554 = vmatmul.mubr.f32.gmra.mrb[0].mxu0 %v2474
    %v2555 = vpop.f32.mrb[0].mxu0
    %v2556 = vadd.f32 0.0, %v2555
    %v2557 = vpop.f32.mrb[0].mxu0
    %2558 = vmatprep.mubr.f32.mxu0 0.0
    %2559 = vmatmul.mubr.f32.gmra.mrb[0].mxu0 %v2477
    %v2560 = vpop.f32.mrb[0].mxu0
    %v2561 = vadd.f32 0.0, %v2560
    %v2562 = vpop.f32.mrb[0].mxu0
    %2563 = vdwg.mxu0
    %v2565 = vsel %vm696, %v2167, 0
    %v2568 = vsel %vm696, %v2172, 0
    %v2571 = vsel %vm696, %v2177, 0
    %v2574 = vsel %vm696, %v2182, 0
    %2576 = vmatprep.subr.mxu0 0.0
    %2577 = vmatpush1.msra.mxu0 %v365
    %2578 = vmatprep.subr.mxu0 0.0
    %2579 = vmatpush1.msra.mxu0 0.0
    %2580 = vmatprep.subr.mxu0 0.0
    %2581 = vmatpush1.msra.mxu0 0.0
    %2582 = vmatprep.subr.mxu0 0.0
    %2583 = vmatpush1.msra.mxu0 0.0
    %2584 = vmatprep.subr.mxu0 0.0
    %2585 = vmatpush1.msra.mxu0 0.0
    %2586 = vmatprep.subr.mxu0 0.0
    %2587 = vmatpush1.msra.mxu0 0.0
    %2588 = vmatprep.subr.mxu0 0.0
    %2589 = vmatpush1.msra.mxu0 0.0
    %2590 = vmatprep.subr.mxu0 0.0
    %2591 = vmatpush1.msra.mxu0 0.0
    %2592 = vmatprep.subr.mxu0 0.0
    %2593 = vmatpush1.msra.mxu0 0.0
    %2594 = vmatprep.subr.mxu0 0.0
    %2595 = vmatpush1.msra.mxu0 0.0
    %2596 = vmatprep.subr.mxu0 0.0
    %2597 = vmatpush1.msra.mxu0 0.0
    %2598 = vmatprep.subr.mxu0 0.0
    %2599 = vmatpush1.msra.mxu0 0.0
    %2600 = vmatprep.subr.mxu0 0.0
    %2601 = vmatpush1.msra.mxu0 0.0
    %2602 = vmatprep.subr.mxu0 0.0
    %2603 = vmatpush1.msra.mxu0 0.0
    %2604 = vmatprep.subr.mxu0 0.0
    %2605 = vmatpush1.msra.mxu0 0.0
    %2606 = vmatprep.subr.mxu0 0.0
    %2607 = vmatpush1.msra.mxu0 0.0
    %2608 = vmatprep.subr.mxu0 0.0
    %2609 = vmatpush1.msra.mxu0 0.0
    %2610 = vmatprep.subr.mxu0 0.0
    %2611 = vmatpush1.msra.mxu0 0.0
    %2612 = vmatprep.subr.mxu0 0.0
    %2613 = vmatpush1.msra.mxu0 0.0
    %2614 = vmatprep.subr.mxu0 0.0
    %2615 = vmatpush1.msra.mxu0 0.0
    %2616 = vmatprep.subr.mxu0 0.0
    %2617 = vmatpush1.msra.mxu0 0.0
    %2618 = vmatprep.subr.mxu0 0.0
    %2619 = vmatpush1.msra.mxu0 0.0
    %2620 = vmatprep.subr.mxu0 0.0
    %2621 = vmatpush1.msra.mxu0 0.0
    %2622 = vmatprep.subr.mxu0 0.0
    %2623 = vmatpush1.msra.mxu0 0.0
    %2624 = vmatprep.subr.mxu0 0.0
    %2625 = vmatpush1.msra.mxu0 0.0
    %2626 = vmatprep.subr.mxu0 0.0
    %2627 = vmatpush1.msra.mxu0 0.0
    %2628 = vmatprep.subr.mxu0 0.0
    %2629 = vmatpush1.msra.mxu0 0.0
    %2630 = vmatprep.subr.mxu0 0.0
    %2631 = vmatpush1.msra.mxu0 0.0
    %2632 = vmatprep.subr.mxu0 0.0
    %2633 = vmatpush1.msra.mxu0 0.0
    %2634 = vmatprep.subr.mxu0 0.0
    %2635 = vmatpush1.msra.mxu0 0.0
    %2636 = vmatprep.subr.mxu0 0.0
    %2637 = vmatpush1.msra.mxu0 0.0
    %2638 = vmatprep.subr.mxu0 0.0
    %2639 = vmatpush1.msra.mxu0 0.0
    %2640 = vmatprep.mubr.f32.mxu0 0.0
    %2641 = vmatmul.mubr.f32.gmra.mrb[0].mxu0 %v2565
    %v2642 = vpop.f32.mrb[0].mxu0
    %v2643 = vadd.f32 %v2546, %v2642
    %v2644 = vpop.f32.mrb[0].mxu0
    %2645 = vmatprep.mubr.f32.mxu0 0.0
    %2646 = vmatmul.mubr.f32.gmra.mrb[0].mxu0 %v2568
    %v2647 = vpop.f32.mrb[0].mxu0
    %v2648 = vadd.f32 %v2551, %v2647
    %v2649 = vpop.f32.mrb[0].mxu0
    %2650 = vmatprep.mubr.f32.mxu0 0.0
    %2651 = vmatmul.mubr.f32.gmra.mrb[0].mxu0 %v2571
    %v2652 = vpop.f32.mrb[0].mxu0
    %v2653 = vadd.f32 %v2556, %v2652
    %v2654 = vpop.f32.mrb[0].mxu0
    %2655 = vmatprep.mubr.f32.mxu0 0.0
    %2656 = vmatmul.mubr.f32.gmra.mrb[0].mxu0 %v2574
    %v2657 = vpop.f32.mrb[0].mxu0
    %v2658 = vadd.f32 %v2561, %v2657
    %v2659 = vpop.f32.mrb[0].mxu0
    %2660 = vdwg.mxu0
    %v2661 = vadd.f32 %v1800, %v2643
    %v2662 = vadd.f32 %v1801, %v2648
    %v2663 = vadd.f32 %v1802, %v2653
    %v2664 = vadd.f32 %v1803, %v2658
    %v2666 = vlaneseq
    %v2667 = vshrl.u32 %v2666, 7
    %v2668 = vsub.s32 0, %v2667
    %v2669 = vrot.slane %v364, %v2668
    %v2671 = vadd.f32 %v2661, %v2669
    %v2672 = vadd.f32 %v2662, %v2669
    %v2673 = vadd.f32 %v2663, %v2669
    %v2674 = vadd.f32 %v2664, %v2669
    %v2676 = vlaneseq
    %v2677 = vshrl.u32 %v2676, 7
    %v2678 = vsub.s32 0, %v2677
    %v2679 = vrot.slane %v349, %v2678
    %v2681 = vmul.f32 %v2671, %v2679
    %v2682 = vmul.f32 %v2672, %v2679
    %v2683 = vmul.f32 %v2673, %v2679
    %v2684 = vmul.f32 %v2674, %v2679
    %v2686 = vlaneseq
    %v2687 = vshrl.u32 %v2686, 7
    %v2688 = vsub.s32 0, %v2687
    %v2689 = vrot.slane %v350, %v2688
    %v2691 = vadd.f32 %v2681, %v2689
    %v2692 = vadd.f32 %v2682, %v2689
    %v2693 = vadd.f32 %v2683, %v2689
    %v2694 = vadd.f32 %v2684, %v2689
    %v2696 = vlaneseq
    %v2697 = vshrl.u32 %v2696, 7
    %v2698 = vsub.s32 0, %v2697
    %v2699 = vrot.slane %v353, %v2698
    %v2702 = vsel %vm586, %v2691, 0
    %v2705 = vsel %vm586, %v2692, 0
    %v2708 = vsel %vm586, %v2693, 0
    %v2711 = vsel %vm586, %v2694, 0
    %2713 = vmatprep.subr.mxu0 0.0
    %2714 = vmatpush1.msra.mxu0 %v354
    %2715 = vmatprep.subr.mxu0 0.0
    %2716 = vmatpush1.msra.mxu0 %v355
    %2717 = vmatprep.subr.mxu0 0.0
    %2718 = vmatpush1.msra.mxu0 0.0
    %2719 = vmatprep.subr.mxu0 0.0
    %2720 = vmatpush1.msra.mxu0 0.0
    %2721 = vmatprep.subr.mxu0 0.0
    %2722 = vmatpush1.msra.mxu0 0.0
    %2723 = vmatprep.subr.mxu0 0.0
    %2724 = vmatpush1.msra.mxu0 0.0
    %2725 = vmatprep.subr.mxu0 0.0
    %2726 = vmatpush1.msra.mxu0 0.0
    %2727 = vmatprep.subr.mxu0 0.0
    %2728 = vmatpush1.msra.mxu0 0.0
    %2729 = vmatprep.subr.mxu0 0.0
    %2730 = vmatpush1.msra.mxu0 0.0
    %2731 = vmatprep.subr.mxu0 0.0
    %2732 = vmatpush1.msra.mxu0 0.0
    %2733 = vmatprep.subr.mxu0 0.0
    %2734 = vmatpush1.msra.mxu0 0.0
    %2735 = vmatprep.subr.mxu0 0.0
    %2736 = vmatpush1.msra.mxu0 0.0
    %2737 = vmatprep.subr.mxu0 0.0
    %2738 = vmatpush1.msra.mxu0 0.0
    %2739 = vmatprep.subr.mxu0 0.0
    %2740 = vmatpush1.msra.mxu0 0.0
    %2741 = vmatprep.subr.mxu0 0.0
    %2742 = vmatpush1.msra.mxu0 0.0
    %2743 = vmatprep.subr.mxu0 0.0
    %2744 = vmatpush1.msra.mxu0 0.0
    %2745 = vmatprep.subr.mxu0 0.0
    %2746 = vmatpush1.msra.mxu0 0.0
    %2747 = vmatprep.subr.mxu0 0.0
    %2748 = vmatpush1.msra.mxu0 0.0
    %2749 = vmatprep.subr.mxu0 0.0
    %2750 = vmatpush1.msra.mxu0 0.0
    %2751 = vmatprep.subr.mxu0 0.0
    %2752 = vmatpush1.msra.mxu0 0.0
    %2753 = vmatprep.subr.mxu0 0.0
    %2754 = vmatpush1.msra.mxu0 0.0
    %2755 = vmatprep.subr.mxu0 0.0
    %2756 = vmatpush1.msra.mxu0 0.0
    %2757 = vmatprep.subr.mxu0 0.0
    %2758 = vmatpush1.msra.mxu0 0.0
    %2759 = vmatprep.subr.mxu0 0.0
    %2760 = vmatpush1.msra.mxu0 0.0
    %2761 = vmatprep.subr.mxu0 0.0
    %2762 = vmatpush1.msra.mxu0 0.0
    %2763 = vmatprep.subr.mxu0 0.0
    %2764 = vmatpush1.msra.mxu0 0.0
    %2765 = vmatprep.subr.mxu0 0.0
    %2766 = vmatpush1.msra.mxu0 0.0
    %2767 = vmatprep.subr.mxu0 0.0
    %2768 = vmatpush1.msra.mxu0 0.0
    %2769 = vmatprep.subr.mxu0 0.0
    %2770 = vmatpush1.msra.mxu0 0.0
    %2771 = vmatprep.subr.mxu0 0.0
    %2772 = vmatpush1.msra.mxu0 0.0
    %2773 = vmatprep.subr.mxu0 0.0
    %2774 = vmatpush1.msra.mxu0 0.0
    %2775 = vmatprep.subr.mxu0 0.0
    %2776 = vmatpush1.msra.mxu0 0.0
    %2777 = vmatprep.mubr.f32.mxu0 0.0
    %2778 = vmatmul.mubr.f32.gmra.mrb[0].mxu0 %v2702
    %v2779 = vpop.f32.mrb[0].mxu0
    %v2780 = vadd.f32 %v2699, %v2779
    %v2781 = vpop.f32.mrb[0].mxu0
    %2782 = vmatprep.mubr.f32.mxu0 0.0
    %2783 = vmatmul.mubr.f32.gmra.mrb[0].mxu0 %v2705
    %v2784 = vpop.f32.mrb[0].mxu0
    %v2785 = vadd.f32 %v2699, %v2784
    %v2786 = vpop.f32.mrb[0].mxu0
    %2787 = vmatprep.mubr.f32.mxu0 0.0
    %2788 = vmatmul.mubr.f32.gmra.mrb[0].mxu0 %v2708
    %v2789 = vpop.f32.mrb[0].mxu0
    %v2790 = vadd.f32 %v2699, %v2789
    %v2791 = vpop.f32.mrb[0].mxu0
    %2792 = vmatprep.mubr.f32.mxu0 0.0
    %2793 = vmatmul.mubr.f32.gmra.mrb[0].mxu0 %v2711
    %v2794 = vpop.f32.mrb[0].mxu0
    %v2795 = vadd.f32 %v2699, %v2794
    %v2796 = vpop.f32.mrb[0].mxu0
    %2797 = vdwg.mxu0
    %v2798 = vmul.f32 %v2780, 0.70710677
    %v2799 = vmul.f32 %v2785, 0.70710677
    %v2800 = vmul.f32 %v2790, 0.70710677
    %v2801 = vmul.f32 %v2795, 0.70710677
    %v2802 = vand.u32 2147483647, %v2798
    %v2803 = vand.u32 2147483647, %v2799
    %v2804 = vand.u32 2147483647, %v2800
    %v2805 = vand.u32 2147483647, %v2801
    %v2806 = vmul.f32 %v2802, 0.3275911
    %v2807 = vmul.f32 %v2803, 0.3275911
    %v2808 = vmul.f32 %v2804, 0.3275911
    %v2809 = vmul.f32 %v2805, 0.3275911
    %v2810 = vadd.f32 %v2806, 1.0
    %v2811 = vadd.f32 %v2807, 1.0
    %v2812 = vadd.f32 %v2808, 1.0
    %v2813 = vadd.f32 %v2809, 1.0
    %v2814 = vrcp.pop %v2810
    %v2815 = vmul.f32 1.0, %v2814
    %v2816 = vrcp.pop %v2811
    %v2817 = vmul.f32 1.0, %v2816
    %v2818 = vrcp.pop %v2812
    %v2819 = vmul.f32 1.0, %v2818
    %v2820 = vrcp.pop %v2813
    %v2821 = vmul.f32 1.0, %v2820
    %v2822 = vmul.f32 %v2815, 1.0614054
    %v2823 = vmul.f32 %v2817, 1.0614054
    %v2824 = vmul.f32 %v2819, 1.0614054
    %v2825 = vmul.f32 %v2821, 1.0614054
    %v2826 = vadd.f32 %v2822, -1.4531521
    %v2827 = vadd.f32 %v2823, -1.4531521
    %v2828 = vadd.f32 %v2824, -1.4531521
    %v2829 = vadd.f32 %v2825, -1.4531521
    %v2830 = vmul.f32 %v2826, %v2815
    %v2831 = vmul.f32 %v2827, %v2817
    %v2832 = vmul.f32 %v2828, %v2819
    %v2833 = vmul.f32 %v2829, %v2821
    %v2834 = vadd.f32 %v2830, 1.4214138
    %v2835 = vadd.f32 %v2831, 1.4214138
    %v2836 = vadd.f32 %v2832, 1.4214138
    %v2837 = vadd.f32 %v2833, 1.4214138
    %v2838 = vmul.f32 %v2834, %v2815
    %v2839 = vmul.f32 %v2835, %v2817
    %v2840 = vmul.f32 %v2836, %v2819
    %v2841 = vmul.f32 %v2837, %v2821
    %v2842 = vadd.f32 %v2838, -0.28449672
    %v2843 = vadd.f32 %v2839, -0.28449672
    %v2844 = vadd.f32 %v2840, -0.28449672
    %v2845 = vadd.f32 %v2841, -0.28449672
    %v2846 = vmul.f32 %v2842, %v2815
    %v2847 = vmul.f32 %v2843, %v2817
    %v2848 = vmul.f32 %v2844, %v2819
    %v2849 = vmul.f32 %v2845, %v2821
    %v2850 = vadd.f32 %v2846, 0.2548296
    %v2851 = vadd.f32 %v2847, 0.2548296
    %v2852 = vadd.f32 %v2848, 0.2548296
    %v2853 = vadd.f32 %v2849, 0.2548296
    %v2854 = vmul.f32 %v2850, %v2815
    %v2855 = vmul.f32 %v2851, %v2817
    %v2856 = vmul.f32 %v2852, %v2819
    %v2857 = vmul.f32 %v2853, %v2821
    %v2858 = vsub.f32 0.0, %v2802
    %v2859 = vsub.f32 0.0, %v2803
    %v2860 = vsub.f32 0.0, %v2804
    %v2861 = vsub.f32 0.0, %v2805
    %v2862 = vmul.f32 %v2858, %v2802
    %v2863 = vmul.f32 %v2859, %v2803
    %v2864 = vmul.f32 %v2860, %v2804
    %v2865 = vmul.f32 %v2861, %v2805
    %v2866 = vmul.f32 %v2862, 1.442695
    %v2867 = vpow.pop %v2866
    %v2868 = vmul.f32 %v2863, 1.442695
    %v2869 = vpow.pop %v2868
    %v2870 = vmul.f32 %v2864, 1.442695
    %v2871 = vpow.pop %v2870
    %v2872 = vmul.f32 %v2865, 1.442695
    %v2873 = vpow.pop %v2872
    %v2874 = vmul.f32 %v2854, %v2867
    %v2875 = vmul.f32 %v2855, %v2869
    %v2876 = vmul.f32 %v2856, %v2871
    %v2877 = vmul.f32 %v2857, %v2873
    %v2878 = vsub.f32 1.0, %v2874
    %v2879 = vsub.f32 1.0, %v2875
    %v2880 = vsub.f32 1.0, %v2876
    %v2881 = vsub.f32 1.0, %v2877
    %vm2882 = vcmp.ge.f32.partialorder %v2798, 0.0
    %vm2883 = vcmp.ge.f32.partialorder %v2799, 0.0
    %vm2884 = vcmp.ge.f32.partialorder %v2800, 0.0
    %vm2885 = vcmp.ge.f32.partialorder %v2801, 0.0
    %v2886 = vsub.f32 0.0, %v2878
    %v2887 = vsub.f32 0.0, %v2879
    %v2888 = vsub.f32 0.0, %v2880
    %v2889 = vsub.f32 0.0, %v2881
    %v2890 = vsel %vm2882, %v2878, %v2886
    %v2891 = vsel %vm2883, %v2879, %v2887
    %v2892 = vsel %vm2884, %v2880, %v2888
    %v2893 = vsel %vm2885, %v2881, %v2889
    %v2894 = vmul.f32 %v2780, 0.5
    %v2895 = vmul.f32 %v2785, 0.5
    %v2896 = vmul.f32 %v2790, 0.5
    %v2897 = vmul.f32 %v2795, 0.5
    %v2898 = vadd.f32 %v2890, 1.0
    %v2899 = vadd.f32 %v2891, 1.0
    %v2900 = vadd.f32 %v2892, 1.0
    %v2901 = vadd.f32 %v2893, 1.0
    %v2902 = vmul.f32 %v2894, %v2898
    %v2903 = vmul.f32 %v2895, %v2899
    %v2904 = vmul.f32 %v2896, %v2900
    %v2905 = vmul.f32 %v2897, %v2901
    %v2907 = vlaneseq
    %v2908 = vshrl.u32 %v2907, 7
    %v2909 = vsub.s32 0, %v2908
    %v2910 = vrot.slane %v356, %v2909
    %v2913 = vsel %vm806, %v2902, 0
    %v2916 = vsel %vm806, %v2903, 0
    %v2919 = vsel %vm806, %v2904, 0
    %v2922 = vsel %vm806, %v2905, 0
    %2924 = vmatprep.subr.mxu0 0.0
    %2925 = vmatpush1.msra.mxu0 %v357
    %2926 = vmatprep.subr.mxu0 0.0
    %2927 = vmatpush1.msra.mxu0 %v358
    %2928 = vmatprep.subr.mxu0 0.0
    %2929 = vmatpush1.msra.mxu0 %v359
    %2930 = vmatprep.subr.mxu0 0.0
    %2931 = vmatpush1.msra.mxu0 %v360
    %2932 = vmatprep.subr.mxu0 0.0
    %2933 = vmatpush1.msra.mxu0 0.0
    %2934 = vmatprep.subr.mxu0 0.0
    %2935 = vmatpush1.msra.mxu0 0.0
    %2936 = vmatprep.subr.mxu0 0.0
    %2937 = vmatpush1.msra.mxu0 0.0
    %2938 = vmatprep.subr.mxu0 0.0
    %2939 = vmatpush1.msra.mxu0 0.0
    %2940 = vmatprep.subr.mxu0 0.0
    %2941 = vmatpush1.msra.mxu0 0.0
    %2942 = vmatprep.subr.mxu0 0.0
    %2943 = vmatpush1.msra.mxu0 0.0
    %2944 = vmatprep.subr.mxu0 0.0
    %2945 = vmatpush1.msra.mxu0 0.0
    %2946 = vmatprep.subr.mxu0 0.0
    %2947 = vmatpush1.msra.mxu0 0.0
    %2948 = vmatprep.subr.mxu0 0.0
    %2949 = vmatpush1.msra.mxu0 0.0
    %2950 = vmatprep.subr.mxu0 0.0
    %2951 = vmatpush1.msra.mxu0 0.0
    %2952 = vmatprep.subr.mxu0 0.0
    %2953 = vmatpush1.msra.mxu0 0.0
    %2954 = vmatprep.subr.mxu0 0.0
    %2955 = vmatpush1.msra.mxu0 0.0
    %2956 = vmatprep.subr.mxu0 0.0
    %2957 = vmatpush1.msra.mxu0 0.0
    %2958 = vmatprep.subr.mxu0 0.0
    %2959 = vmatpush1.msra.mxu0 0.0
    %2960 = vmatprep.subr.mxu0 0.0
    %2961 = vmatpush1.msra.mxu0 0.0
    %2962 = vmatprep.subr.mxu0 0.0
    %2963 = vmatpush1.msra.mxu0 0.0
    %2964 = vmatprep.subr.mxu0 0.0
    %2965 = vmatpush1.msra.mxu0 0.0
    %2966 = vmatprep.subr.mxu0 0.0
    %2967 = vmatpush1.msra.mxu0 0.0
    %2968 = vmatprep.subr.mxu0 0.0
    %2969 = vmatpush1.msra.mxu0 0.0
    %2970 = vmatprep.subr.mxu0 0.0
    %2971 = vmatpush1.msra.mxu0 0.0
    %2972 = vmatprep.subr.mxu0 0.0
    %2973 = vmatpush1.msra.mxu0 0.0
    %2974 = vmatprep.subr.mxu0 0.0
    %2975 = vmatpush1.msra.mxu0 0.0
    %2976 = vmatprep.subr.mxu0 0.0
    %2977 = vmatpush1.msra.mxu0 0.0
    %2978 = vmatprep.subr.mxu0 0.0
    %2979 = vmatpush1.msra.mxu0 0.0
    %2980 = vmatprep.subr.mxu0 0.0
    %2981 = vmatpush1.msra.mxu0 0.0
    %2982 = vmatprep.subr.mxu0 0.0
    %2983 = vmatpush1.msra.mxu0 0.0
    %2984 = vmatprep.subr.mxu0 0.0
    %2985 = vmatpush1.msra.mxu0 0.0
    %2986 = vmatprep.subr.mxu0 0.0
    %2987 = vmatpush1.msra.mxu0 0.0
    %2988 = vmatprep.mubr.f32.mxu0 0.0
    %2989 = vmatmul.mubr.f32.gmra.mrb[0].mxu0 %v2913
    %v2990 = vpop.f32.mrb[0].mxu0
    %v2991 = vadd.f32 %v2910, %v2990
    %v2992 = vpop.f32.mrb[0].mxu0
    %2993 = vmatprep.mubr.f32.mxu0 0.0
    %2994 = vmatmul.mubr.f32.gmra.mrb[0].mxu0 %v2916
    %v2995 = vpop.f32.mrb[0].mxu0
    %v2996 = vadd.f32 %v2910, %v2995
    %v2997 = vpop.f32.mrb[0].mxu0
    %2998 = vmatprep.mubr.f32.mxu0 0.0
    %2999 = vmatmul.mubr.f32.gmra.mrb[0].mxu0 %v2919
    %v3000 = vpop.f32.mrb[0].mxu0
    %v3001 = vadd.f32 %v2910, %v3000
    %v3002 = vpop.f32.mrb[0].mxu0
    %3003 = vmatprep.mubr.f32.mxu0 0.0
    %3004 = vmatmul.mubr.f32.gmra.mrb[0].mxu0 %v2922
    %v3005 = vpop.f32.mrb[0].mxu0
    %v3006 = vadd.f32 %v2910, %v3005
    %v3007 = vpop.f32.mrb[0].mxu0
    %3008 = vdwg.mxu0
    %v3009 = vadd.f32 %v2691, %v2991
    %v3010 = vadd.f32 %v2692, %v2996
    %v3011 = vadd.f32 %v2693, %v3001
    %v3012 = vadd.f32 %v2694, %v3006
    %v3014 = vlaneseq
    %v3015 = vshrl.u32 %v3014, 7
    %v3016 = vsub.s32 0, %v3015
    %v3017 = vrot.slane %v351, %v3016
    %v3019 = vmul.f32 %v3009, %v3017
    %v3020 = vmul.f32 %v3010, %v3017
    %v3021 = vmul.f32 %v3011, %v3017
    %v3022 = vmul.f32 %v3012, %v3017
    %v3024 = vlaneseq
    %v3025 = vshrl.u32 %v3024, 7
    %v3026 = vsub.s32 0, %v3025
    %v3027 = vrot.slane %v352, %v3026
    %v3029 = vadd.f32 %v3019, %v3027
    %v3030 = vadd.f32 %v3020, %v3027
    %v3031 = vadd.f32 %v3021, %v3027
    %v3032 = vadd.f32 %v3022, %v3027
    %v3034 = vsel %vm586, %v3030, 0
    %3036 = vmatprep.subr.mxu0 0.0
    %3037 = vmatpush1.msra.mxu0 %v325
    %3038 = vmatprep.subr.mxu0 0.0
    %3039 = vmatpush1.msra.mxu0 %v326
    %3040 = vmatprep.subr.mxu0 0.0
    %3041 = vmatpush1.msra.mxu0 0.0
    %3042 = vmatprep.subr.mxu0 0.0
    %3043 = vmatpush1.msra.mxu0 0.0
    %3044 = vmatprep.subr.mxu0 0.0
    %3045 = vmatpush1.msra.mxu0 0.0
    %3046 = vmatprep.subr.mxu0 0.0
    %3047 = vmatpush1.msra.mxu0 0.0
    %3048 = vmatprep.subr.mxu0 0.0
    %3049 = vmatpush1.msra.mxu0 0.0
    %3050 = vmatprep.subr.mxu0 0.0
    %3051 = vmatpush1.msra.mxu0 0.0
    %3052 = vmatprep.subr.mxu0 0.0
    %3053 = vmatpush1.msra.mxu0 0.0
    %3054 = vmatprep.subr.mxu0 0.0
    %3055 = vmatpush1.msra.mxu0 0.0
    %3056 = vmatprep.subr.mxu0 0.0
    %3057 = vmatpush1.msra.mxu0 0.0
    %3058 = vmatprep.subr.mxu0 0.0
    %3059 = vmatpush1.msra.mxu0 0.0
    %3060 = vmatprep.subr.mxu0 0.0
    %3061 = vmatpush1.msra.mxu0 0.0
    %3062 = vmatprep.subr.mxu0 0.0
    %3063 = vmatpush1.msra.mxu0 0.0
    %3064 = vmatprep.subr.mxu0 0.0
    %3065 = vmatpush1.msra.mxu0 0.0
    %3066 = vmatprep.subr.mxu0 0.0
    %3067 = vmatpush1.msra.mxu0 0.0
    %3068 = vmatprep.subr.mxu0 0.0
    %3069 = vmatpush1.msra.mxu0 0.0
    %3070 = vmatprep.subr.mxu0 0.0
    %3071 = vmatpush1.msra.mxu0 0.0
    %3072 = vmatprep.subr.mxu0 0.0
    %3073 = vmatpush1.msra.mxu0 0.0
    %3074 = vmatprep.subr.mxu0 0.0
    %3075 = vmatpush1.msra.mxu0 0.0
    %3076 = vmatprep.subr.mxu0 0.0
    %3077 = vmatpush1.msra.mxu0 0.0
    %3078 = vmatprep.subr.mxu0 0.0
    %3079 = vmatpush1.msra.mxu0 0.0
    %3080 = vmatprep.subr.mxu0 0.0
    %3081 = vmatpush1.msra.mxu0 0.0
    %3082 = vmatprep.subr.mxu0 0.0
    %3083 = vmatpush1.msra.mxu0 0.0
    %3084 = vmatprep.subr.mxu0 0.0
    %3085 = vmatpush1.msra.mxu0 0.0
    %3086 = vmatprep.subr.mxu0 0.0
    %3087 = vmatpush1.msra.mxu0 0.0
    %3088 = vmatprep.subr.mxu0 0.0
    %3089 = vmatpush1.msra.mxu0 0.0
    %3090 = vmatprep.subr.mxu0 0.0
    %3091 = vmatpush1.msra.mxu0 0.0
    %3092 = vmatprep.subr.mxu0 0.0
    %3093 = vmatpush1.msra.mxu0 0.0
    %3094 = vmatprep.subr.mxu0 0.0
    %3095 = vmatpush1.msra.mxu0 0.0
    %3096 = vmatprep.subr.mxu0 0.0
    %3097 = vmatpush1.msra.mxu0 0.0
    %3098 = vmatprep.subr.mxu0 0.0
    %3099 = vmatpush1.msra.mxu0 0.0
    %3100 = vmatprep.mubr.f32.mxu0 0.0
    %3101 = vmatmul.mubr.f32.gmra.mrb[0].mxu0 %v3034
    %v3102 = vpop.f32.mrb[0].mxu0
    %v3103 = vadd.f32 0.0, %v3102
    %v3104 = vpop.f32.mrb[0].mxu0
    %3105 = vdwg.mxu0
    %v3107 = vsel %vm586, %v3029, 0
    %3109 = vmatprep.subr.mxu0 0.0
    %3110 = vmatpush1.msra.mxu0 %v323
    %3111 = vmatprep.subr.mxu0 0.0
    %3112 = vmatpush1.msra.mxu0 %v324
    %3113 = vmatprep.subr.mxu0 0.0
    %3114 = vmatpush1.msra.mxu0 0.0
    %3115 = vmatprep.subr.mxu0 0.0
    %3116 = vmatpush1.msra.mxu0 0.0
    %3117 = vmatprep.subr.mxu0 0.0
    %3118 = vmatpush1.msra.mxu0 0.0
    %3119 = vmatprep.subr.mxu0 0.0
    %3120 = vmatpush1.msra.mxu0 0.0
    %3121 = vmatprep.subr.mxu0 0.0
    %3122 = vmatpush1.msra.mxu0 0.0
    %3123 = vmatprep.subr.mxu0 0.0
    %3124 = vmatpush1.msra.mxu0 0.0
    %3125 = vmatprep.subr.mxu0 0.0
    %3126 = vmatpush1.msra.mxu0 0.0
    %3127 = vmatprep.subr.mxu0 0.0
    %3128 = vmatpush1.msra.mxu0 0.0
    %3129 = vmatprep.subr.mxu0 0.0
    %3130 = vmatpush1.msra.mxu0 0.0
    %3131 = vmatprep.subr.mxu0 0.0
    %3132 = vmatpush1.msra.mxu0 0.0
    %3133 = vmatprep.subr.mxu0 0.0
    %3134 = vmatpush1.msra.mxu0 0.0
    %3135 = vmatprep.subr.mxu0 0.0
    %3136 = vmatpush1.msra.mxu0 0.0
    %3137 = vmatprep.subr.mxu0 0.0
    %3138 = vmatpush1.msra.mxu0 0.0
    %3139 = vmatprep.subr.mxu0 0.0
    %3140 = vmatpush1.msra.mxu0 0.0
    %3141 = vmatprep.subr.mxu0 0.0
    %3142 = vmatpush1.msra.mxu0 0.0
    %3143 = vmatprep.subr.mxu0 0.0
    %3144 = vmatpush1.msra.mxu0 0.0
    %3145 = vmatprep.subr.mxu0 0.0
    %3146 = vmatpush1.msra.mxu0 0.0
    %3147 = vmatprep.subr.mxu0 0.0
    %3148 = vmatpush1.msra.mxu0 0.0
    %3149 = vmatprep.subr.mxu0 0.0
    %3150 = vmatpush1.msra.mxu0 0.0
    %3151 = vmatprep.subr.mxu0 0.0
    %3152 = vmatpush1.msra.mxu0 0.0
    %3153 = vmatprep.subr.mxu0 0.0
    %3154 = vmatpush1.msra.mxu0 0.0
    %3155 = vmatprep.subr.mxu0 0.0
    %3156 = vmatpush1.msra.mxu0 0.0
    %3157 = vmatprep.subr.mxu0 0.0
    %3158 = vmatpush1.msra.mxu0 0.0
    %3159 = vmatprep.subr.mxu0 0.0
    %3160 = vmatpush1.msra.mxu0 0.0
    %3161 = vmatprep.subr.mxu0 0.0
    %3162 = vmatpush1.msra.mxu0 0.0
    %3163 = vmatprep.subr.mxu0 0.0
    %3164 = vmatpush1.msra.mxu0 0.0
    %3165 = vmatprep.subr.mxu0 0.0
    %3166 = vmatpush1.msra.mxu0 0.0
    %3167 = vmatprep.subr.mxu0 0.0
    %3168 = vmatpush1.msra.mxu0 0.0
    %3169 = vmatprep.subr.mxu0 0.0
    %3170 = vmatpush1.msra.mxu0 0.0
    %3171 = vmatprep.subr.mxu0 0.0
    %3172 = vmatpush1.msra.mxu0 0.0
    %3173 = vmatprep.mubr.f32.mxu0 0.0
    %3174 = vmatmul.mubr.f32.gmra.mrb[0].mxu0 %v3107
    %v3175 = vpop.f32.mrb[0].mxu0
    %v3176 = vadd.f32 %v3103, %v3175
    %v3177 = vpop.f32.mrb[0].mxu0
    %3178 = vdwg.mxu0
    %v3180 = vsel %vm586, %v3031, 0
    %3182 = vmatprep.subr.mxu0 0.0
    %3183 = vmatpush1.msra.mxu0 %v327
    %3184 = vmatprep.subr.mxu0 0.0
    %3185 = vmatpush1.msra.mxu0 %v328
    %3186 = vmatprep.subr.mxu0 0.0
    %3187 = vmatpush1.msra.mxu0 0.0
    %3188 = vmatprep.subr.mxu0 0.0
    %3189 = vmatpush1.msra.mxu0 0.0
    %3190 = vmatprep.subr.mxu0 0.0
    %3191 = vmatpush1.msra.mxu0 0.0
    %3192 = vmatprep.subr.mxu0 0.0
    %3193 = vmatpush1.msra.mxu0 0.0
    %3194 = vmatprep.subr.mxu0 0.0
    %3195 = vmatpush1.msra.mxu0 0.0
    %3196 = vmatprep.subr.mxu0 0.0
    %3197 = vmatpush1.msra.mxu0 0.0
    %3198 = vmatprep.subr.mxu0 0.0
    %3199 = vmatpush1.msra.mxu0 0.0
    %3200 = vmatprep.subr.mxu0 0.0
    %3201 = vmatpush1.msra.mxu0 0.0
    %3202 = vmatprep.subr.mxu0 0.0
    %3203 = vmatpush1.msra.mxu0 0.0
    %3204 = vmatprep.subr.mxu0 0.0
    %3205 = vmatpush1.msra.mxu0 0.0
    %3206 = vmatprep.subr.mxu0 0.0
    %3207 = vmatpush1.msra.mxu0 0.0
    %3208 = vmatprep.subr.mxu0 0.0
    %3209 = vmatpush1.msra.mxu0 0.0
    %3210 = vmatprep.subr.mxu0 0.0
    %3211 = vmatpush1.msra.mxu0 0.0
    %3212 = vmatprep.subr.mxu0 0.0
    %3213 = vmatpush1.msra.mxu0 0.0
    %3214 = vmatprep.subr.mxu0 0.0
    %3215 = vmatpush1.msra.mxu0 0.0
    %3216 = vmatprep.subr.mxu0 0.0
    %3217 = vmatpush1.msra.mxu0 0.0
    %3218 = vmatprep.subr.mxu0 0.0
    %3219 = vmatpush1.msra.mxu0 0.0
    %3220 = vmatprep.subr.mxu0 0.0
    %3221 = vmatpush1.msra.mxu0 0.0
    %3222 = vmatprep.subr.mxu0 0.0
    %3223 = vmatpush1.msra.mxu0 0.0
    %3224 = vmatprep.subr.mxu0 0.0
    %3225 = vmatpush1.msra.mxu0 0.0
    %3226 = vmatprep.subr.mxu0 0.0
    %3227 = vmatpush1.msra.mxu0 0.0
    %3228 = vmatprep.subr.mxu0 0.0
    %3229 = vmatpush1.msra.mxu0 0.0
    %3230 = vmatprep.subr.mxu0 0.0
    %3231 = vmatpush1.msra.mxu0 0.0
    %3232 = vmatprep.subr.mxu0 0.0
    %3233 = vmatpush1.msra.mxu0 0.0
    %3234 = vmatprep.subr.mxu0 0.0
    %3235 = vmatpush1.msra.mxu0 0.0
    %3236 = vmatprep.subr.mxu0 0.0
    %3237 = vmatpush1.msra.mxu0 0.0
    %3238 = vmatprep.subr.mxu0 0.0
    %3239 = vmatpush1.msra.mxu0 0.0
    %3240 = vmatprep.subr.mxu0 0.0
    %3241 = vmatpush1.msra.mxu0 0.0
    %3242 = vmatprep.subr.mxu0 0.0
    %3243 = vmatpush1.msra.mxu0 0.0
    %3244 = vmatprep.subr.mxu0 0.0
    %3245 = vmatpush1.msra.mxu0 0.0
    %3246 = vmatprep.mubr.f32.mxu0 0.0
    %3247 = vmatmul.mubr.f32.gmra.mrb[0].mxu0 %v3180
    %v3248 = vpop.f32.mrb[0].mxu0
    %v3249 = vadd.f32 0.0, %v3248
    %v3250 = vpop.f32.mrb[0].mxu0
    %3251 = vdwg.mxu0
    %v3252 = vadd.f32 %v3176, %v3249
    %v3254 = vsel %vm586, %v3032, 0
    %3256 = vmatprep.subr.mxu0 0.0
    %3257 = vmatpush1.msra.mxu0 %v329
    %3258 = vmatprep.subr.mxu0 0.0
    %3259 = vmatpush1.msra.mxu0 %v330
    %3260 = vmatprep.subr.mxu0 0.0
    %3261 = vmatpush1.msra.mxu0 0.0
    %3262 = vmatprep.subr.mxu0 0.0
    %3263 = vmatpush1.msra.mxu0 0.0
    %3264 = vmatprep.subr.mxu0 0.0
    %3265 = vmatpush1.msra.mxu0 0.0
    %3266 = vmatprep.subr.mxu0 0.0
    %3267 = vmatpush1.msra.mxu0 0.0
    %3268 = vmatprep.subr.mxu0 0.0
    %3269 = vmatpush1.msra.mxu0 0.0
    %3270 = vmatprep.subr.mxu0 0.0
    %3271 = vmatpush1.msra.mxu0 0.0
    %3272 = vmatprep.subr.mxu0 0.0
    %3273 = vmatpush1.msra.mxu0 0.0
    %3274 = vmatprep.subr.mxu0 0.0
    %3275 = vmatpush1.msra.mxu0 0.0
    %3276 = vmatprep.subr.mxu0 0.0
    %3277 = vmatpush1.msra.mxu0 0.0
    %3278 = vmatprep.subr.mxu0 0.0
    %3279 = vmatpush1.msra.mxu0 0.0
    %3280 = vmatprep.subr.mxu0 0.0
    %3281 = vmatpush1.msra.mxu0 0.0
    %3282 = vmatprep.subr.mxu0 0.0
    %3283 = vmatpush1.msra.mxu0 0.0
    %3284 = vmatprep.subr.mxu0 0.0
    %3285 = vmatpush1.msra.mxu0 0.0
    %3286 = vmatprep.subr.mxu0 0.0
    %3287 = vmatpush1.msra.mxu0 0.0
    %3288 = vmatprep.subr.mxu0 0.0
    %3289 = vmatpush1.msra.mxu0 0.0
    %3290 = vmatprep.subr.mxu0 0.0
    %3291 = vmatpush1.msra.mxu0 0.0
    %3292 = vmatprep.subr.mxu0 0.0
    %3293 = vmatpush1.msra.mxu0 0.0
    %3294 = vmatprep.subr.mxu0 0.0
    %3295 = vmatpush1.msra.mxu0 0.0
    %3296 = vmatprep.subr.mxu0 0.0
    %3297 = vmatpush1.msra.mxu0 0.0
    %3298 = vmatprep.subr.mxu0 0.0
    %3299 = vmatpush1.msra.mxu0 0.0
    %3300 = vmatprep.subr.mxu0 0.0
    %3301 = vmatpush1.msra.mxu0 0.0
    %3302 = vmatprep.subr.mxu0 0.0
    %3303 = vmatpush1.msra.mxu0 0.0
    %3304 = vmatprep.subr.mxu0 0.0
    %3305 = vmatpush1.msra.mxu0 0.0
    %3306 = vmatprep.subr.mxu0 0.0
    %3307 = vmatpush1.msra.mxu0 0.0
    %3308 = vmatprep.subr.mxu0 0.0
    %3309 = vmatpush1.msra.mxu0 0.0
    %3310 = vmatprep.subr.mxu0 0.0
    %3311 = vmatpush1.msra.mxu0 0.0
    %3312 = vmatprep.subr.mxu0 0.0
    %3313 = vmatpush1.msra.mxu0 0.0
    %3314 = vmatprep.subr.mxu0 0.0
    %3315 = vmatpush1.msra.mxu0 0.0
    %3316 = vmatprep.subr.mxu0 0.0
    %3317 = vmatpush1.msra.mxu0 0.0
    %3318 = vmatprep.subr.mxu0 0.0
    %3319 = vmatpush1.msra.mxu0 0.0
    %3320 = vmatprep.mubr.f32.mxu0 0.0
    %3321 = vmatmul.mubr.f32.gmra.mrb[0].mxu0 %v3254
    %v3322 = vpop.f32.mrb[0].mxu0
    %v3323 = vadd.f32 0.0, %v3322
    %v3324 = vpop.f32.mrb[0].mxu0
    %3325 = vdwg.mxu0
    %v3326 = vadd.f32 %v3252, %v3323
    %v3328 = vlaneseq
    %v3329 = vshrl.u32 %v3328, 7
    %v3330 = vsub.s32 0, %v3329
    %v3331 = vrot.slane %v322, %v3330
    %v3333 = vadd.f32 %v3326, %v3331
    %v3335 = vsel %vm696, %v459, 0
    %3337 = vmatprep.subr.mxu0 0.0
    %3338 = vmatpush1.msra.mxu0 %v3333
    %3339 = vmatprep.subr.mxu0 0.0
    %3340 = vmatpush1.msra.mxu0 0.0
    %3341 = vmatprep.subr.mxu0 0.0
    %3342 = vmatpush1.msra.mxu0 0.0
    %3343 = vmatprep.subr.mxu0 0.0
    %3344 = vmatpush1.msra.mxu0 0.0
    %3345 = vmatprep.subr.mxu0 0.0
    %3346 = vmatpush1.msra.mxu0 0.0
    %3347 = vmatprep.subr.mxu0 0.0
    %3348 = vmatpush1.msra.mxu0 0.0
    %3349 = vmatprep.subr.mxu0 0.0
    %3350 = vmatpush1.msra.mxu0 0.0
    %3351 = vmatprep.subr.mxu0 0.0
    %3352 = vmatpush1.msra.mxu0 0.0
    %3353 = vmatprep.subr.mxu0 0.0
    %3354 = vmatpush1.msra.mxu0 0.0
    %3355 = vmatprep.subr.mxu0 0.0
    %3356 = vmatpush1.msra.mxu0 0.0
    %3357 = vmatprep.subr.mxu0 0.0
    %3358 = vmatpush1.msra.mxu0 0.0
    %3359 = vmatprep.subr.mxu0 0.0
    %3360 = vmatpush1.msra.mxu0 0.0
    %3361 = vmatprep.subr.mxu0 0.0
    %3362 = vmatpush1.msra.mxu0 0.0
    %3363 = vmatprep.subr.mxu0 0.0
    %3364 = vmatpush1.msra.mxu0 0.0
    %3365 = vmatprep.subr.mxu0 0.0
    %3366 = vmatpush1.msra.mxu0 0.0
    %3367 = vmatprep.subr.mxu0 0.0
    %3368 = vmatpush1.msra.mxu0 0.0
    %3369 = vmatprep.subr.mxu0 0.0
    %3370 = vmatpush1.msra.mxu0 0.0
    %3371 = vmatprep.subr.mxu0 0.0
    %3372 = vmatpush1.msra.mxu0 0.0
    %3373 = vmatprep.subr.mxu0 0.0
    %3374 = vmatpush1.msra.mxu0 0.0
    %3375 = vmatprep.subr.mxu0 0.0
    %3376 = vmatpush1.msra.mxu0 0.0
    %3377 = vmatprep.subr.mxu0 0.0
    %3378 = vmatpush1.msra.mxu0 0.0
    %3379 = vmatprep.subr.mxu0 0.0
    %3380 = vmatpush1.msra.mxu0 0.0
    %3381 = vmatprep.subr.mxu0 0.0
    %3382 = vmatpush1.msra.mxu0 0.0
    %3383 = vmatprep.subr.mxu0 0.0
    %3384 = vmatpush1.msra.mxu0 0.0
    %3385 = vmatprep.subr.mxu0 0.0
    %3386 = vmatpush1.msra.mxu0 0.0
    %3387 = vmatprep.subr.mxu0 0.0
    %3388 = vmatpush1.msra.mxu0 0.0
    %3389 = vmatprep.subr.mxu0 0.0
    %3390 = vmatpush1.msra.mxu0 0.0
    %3391 = vmatprep.subr.mxu0 0.0
    %3392 = vmatpush1.msra.mxu0 0.0
    %3393 = vmatprep.subr.mxu0 0.0
    %3394 = vmatpush1.msra.mxu0 0.0
    %3395 = vmatprep.subr.mxu0 0.0
    %3396 = vmatpush1.msra.mxu0 0.0
    %3397 = vmatprep.subr.mxu0 0.0
    %3398 = vmatpush1.msra.mxu0 0.0
    %3399 = vmatprep.subr.mxu0 0.0
    %3400 = vmatpush1.msra.mxu0 0.0
    %3401 = vmatprep.mubr.f32.mxu0 0.0
    %3402 = vmatmul.mubr.f32.gmra.mrb[0].mxu0 %v3335
    %v3403 = vpop.f32.mrb[0].mxu0
    %v3404 = vadd.f32 0.0, %v3403
    %v3405 = vpop.f32.mrb[0].mxu0
    %3406 = vdwg.mxu0
    %v3408 = vlaneseq
    %v3409 = vshrl.u32 %v3408, 7
    %v3410 = vsub.s32 0, %v3409
    %v3411 = vrot.slane %v451, %v3410
    %v3414 = vsel %vm696, %v3404, 0
    %3416 = vmatprep.subr.mxu0 0.0
    %3417 = vmatpush1.msra.mxu0 %v452
    %3418 = vmatprep.subr.mxu0 0.0
    %3419 = vmatpush1.msra.mxu0 0.0
    %3420 = vmatprep.subr.mxu0 0.0
    %3421 = vmatpush1.msra.mxu0 0.0
    %3422 = vmatprep.subr.mxu0 0.0
    %3423 = vmatpush1.msra.mxu0 0.0
    %3424 = vmatprep.subr.mxu0 0.0
    %3425 = vmatpush1.msra.mxu0 0.0
    %3426 = vmatprep.subr.mxu0 0.0
    %3427 = vmatpush1.msra.mxu0 0.0
    %3428 = vmatprep.subr.mxu0 0.0
    %3429 = vmatpush1.msra.mxu0 0.0
    %3430 = vmatprep.subr.mxu0 0.0
    %3431 = vmatpush1.msra.mxu0 0.0
    %3432 = vmatprep.subr.mxu0 0.0
    %3433 = vmatpush1.msra.mxu0 0.0
    %3434 = vmatprep.subr.mxu0 0.0
    %3435 = vmatpush1.msra.mxu0 0.0
    %3436 = vmatprep.subr.mxu0 0.0
    %3437 = vmatpush1.msra.mxu0 0.0
    %3438 = vmatprep.subr.mxu0 0.0
    %3439 = vmatpush1.msra.mxu0 0.0
    %3440 = vmatprep.subr.mxu0 0.0
    %3441 = vmatpush1.msra.mxu0 0.0
    %3442 = vmatprep.subr.mxu0 0.0
    %3443 = vmatpush1.msra.mxu0 0.0
    %3444 = vmatprep.subr.mxu0 0.0
    %3445 = vmatpush1.msra.mxu0 0.0
    %3446 = vmatprep.subr.mxu0 0.0
    %3447 = vmatpush1.msra.mxu0 0.0
    %3448 = vmatprep.subr.mxu0 0.0
    %3449 = vmatpush1.msra.mxu0 0.0
    %3450 = vmatprep.subr.mxu0 0.0
    %3451 = vmatpush1.msra.mxu0 0.0
    %3452 = vmatprep.subr.mxu0 0.0
    %3453 = vmatpush1.msra.mxu0 0.0
    %3454 = vmatprep.subr.mxu0 0.0
    %3455 = vmatpush1.msra.mxu0 0.0
    %3456 = vmatprep.subr.mxu0 0.0
    %3457 = vmatpush1.msra.mxu0 0.0
    %3458 = vmatprep.subr.mxu0 0.0
    %3459 = vmatpush1.msra.mxu0 0.0
    %3460 = vmatprep.subr.mxu0 0.0
    %3461 = vmatpush1.msra.mxu0 0.0
    %3462 = vmatprep.subr.mxu0 0.0
    %3463 = vmatpush1.msra.mxu0 0.0
    %3464 = vmatprep.subr.mxu0 0.0
    %3465 = vmatpush1.msra.mxu0 0.0
    %3466 = vmatprep.subr.mxu0 0.0
    %3467 = vmatpush1.msra.mxu0 0.0
    %3468 = vmatprep.subr.mxu0 0.0
    %3469 = vmatpush1.msra.mxu0 0.0
    %3470 = vmatprep.subr.mxu0 0.0
    %3471 = vmatpush1.msra.mxu0 0.0
    %3472 = vmatprep.subr.mxu0 0.0
    %3473 = vmatpush1.msra.mxu0 0.0
    %3474 = vmatprep.subr.mxu0 0.0
    %3475 = vmatpush1.msra.mxu0 0.0
    %3476 = vmatprep.subr.mxu0 0.0
    %3477 = vmatpush1.msra.mxu0 0.0
    %3478 = vmatprep.subr.mxu0 0.0
    %3479 = vmatpush1.msra.mxu0 0.0
    %3480 = vmatprep.mubr.f32.mxu0 0.0
    %3481 = vmatmul.mubr.f32.gmra.mrb[0].mxu0 %v3414
    %v3482 = vpop.f32.mrb[0].mxu0
    %v3483 = vadd.f32 %v3411, %v3482
    %v3484 = vpop.f32.mrb[0].mxu0
    %3485 = vdwg.mxu0
    %v3487 = vlaneseq
    %v3488 = vshrl.u32 %v3487, 7
    %v3489 = vsub.s32 0, %v3488
    %v3490 = vrot.slane %v449, %v3489
    %v3493 = vsel %vm696, %v3483, 0
    %3495 = vmatprep.subr.mxu0 0.0
    %3496 = vmatpush1.msra.mxu0 %v450
    %3497 = vmatprep.subr.mxu0 0.0
    %3498 = vmatpush1.msra.mxu0 0.0
    %3499 = vmatprep.subr.mxu0 0.0
    %3500 = vmatpush1.msra.mxu0 0.0
    %3501 = vmatprep.subr.mxu0 0.0
    %3502 = vmatpush1.msra.mxu0 0.0
    %3503 = vmatprep.subr.mxu0 0.0
    %3504 = vmatpush1.msra.mxu0 0.0
    %3505 = vmatprep.subr.mxu0 0.0
    %3506 = vmatpush1.msra.mxu0 0.0
    %3507 = vmatprep.subr.mxu0 0.0
    %3508 = vmatpush1.msra.mxu0 0.0
    %3509 = vmatprep.subr.mxu0 0.0
    %3510 = vmatpush1.msra.mxu0 0.0
    %3511 = vmatprep.subr.mxu0 0.0
    %3512 = vmatpush1.msra.mxu0 0.0
    %3513 = vmatprep.subr.mxu0 0.0
    %3514 = vmatpush1.msra.mxu0 0.0
    %3515 = vmatprep.subr.mxu0 0.0
    %3516 = vmatpush1.msra.mxu0 0.0
    %3517 = vmatprep.subr.mxu0 0.0
    %3518 = vmatpush1.msra.mxu0 0.0
    %3519 = vmatprep.subr.mxu0 0.0
    %3520 = vmatpush1.msra.mxu0 0.0
    %3521 = vmatprep.subr.mxu0 0.0
    %3522 = vmatpush1.msra.mxu0 0.0
    %3523 = vmatprep.subr.mxu0 0.0
    %3524 = vmatpush1.msra.mxu0 0.0
    %3525 = vmatprep.subr.mxu0 0.0
    %3526 = vmatpush1.msra.mxu0 0.0
    %3527 = vmatprep.subr.mxu0 0.0
    %3528 = vmatpush1.msra.mxu0 0.0
    %3529 = vmatprep.subr.mxu0 0.0
    %3530 = vmatpush1.msra.mxu0 0.0
    %3531 = vmatprep.subr.mxu0 0.0
    %3532 = vmatpush1.msra.mxu0 0.0
    %3533 = vmatprep.subr.mxu0 0.0
    %3534 = vmatpush1.msra.mxu0 0.0
    %3535 = vmatprep.subr.mxu0 0.0
    %3536 = vmatpush1.msra.mxu0 0.0
    %3537 = vmatprep.subr.mxu0 0.0
    %3538 = vmatpush1.msra.mxu0 0.0
    %3539 = vmatprep.subr.mxu0 0.0
    %3540 = vmatpush1.msra.mxu0 0.0
    %3541 = vmatprep.subr.mxu0 0.0
    %3542 = vmatpush1.msra.mxu0 0.0
    %3543 = vmatprep.subr.mxu0 0.0
    %3544 = vmatpush1.msra.mxu0 0.0
    %3545 = vmatprep.subr.mxu0 0.0
    %3546 = vmatpush1.msra.mxu0 0.0
    %3547 = vmatprep.subr.mxu0 0.0
    %3548 = vmatpush1.msra.mxu0 0.0
    %3549 = vmatprep.subr.mxu0 0.0
    %3550 = vmatpush1.msra.mxu0 0.0
    %3551 = vmatprep.subr.mxu0 0.0
    %3552 = vmatpush1.msra.mxu0 0.0
    %3553 = vmatprep.subr.mxu0 0.0
    %3554 = vmatpush1.msra.mxu0 0.0
    %3555 = vmatprep.subr.mxu0 0.0
    %3556 = vmatpush1.msra.mxu0 0.0
    %3557 = vmatprep.subr.mxu0 0.0
    %3558 = vmatpush1.msra.mxu0 0.0
    %3559 = vmatprep.mubr.f32.mxu0 0.0
    %3560 = vmatmul.mubr.f32.gmra.mrb[0].mxu0 %v3493
    %v3561 = vpop.f32.mrb[0].mxu0
    %v3562 = vadd.f32 %v3490, %v3561
    %v3563 = vpop.f32.mrb[0].mxu0
    %3564 = vdwg.mxu0
    %v3566 = vlaneseq
    %v3567 = vshrl.u32 %v3566, 7
    %v3568 = vsub.s32 0, %v3567
    %v3569 = vrot.slane %v443, %v3568
    %v3571 = vmul.f32 %v3404, %v3569
    %v3573 = vlaneseq
    %v3574 = vshrl.u32 %v3573, 7
    %v3575 = vsub.s32 0, %v3574
    %v3576 = vrot.slane %v444, %v3575
    %v3578 = vadd.f32 %v3571, %v3576
    %v3579 = vmax.f32 %v3578, 0.0
    %v3581 = vlaneseq
    %v3582 = vshrl.u32 %v3581, 7
    %v3583 = vsub.s32 0, %v3582
    %v3584 = vrot.slane %v445, %v3583
    %v3587 = vsel %vm696, %v3579, 0
    %3589 = vmatprep.subr.mxu0 0.0
    %3590 = vmatpush1.msra.mxu0 %v446
    %3591 = vmatprep.subr.mxu0 0.0
    %3592 = vmatpush1.msra.mxu0 0.0
    %3593 = vmatprep.subr.mxu0 0.0
    %3594 = vmatpush1.msra.mxu0 0.0
    %3595 = vmatprep.subr.mxu0 0.0
    %3596 = vmatpush1.msra.mxu0 0.0
    %3597 = vmatprep.subr.mxu0 0.0
    %3598 = vmatpush1.msra.mxu0 0.0
    %3599 = vmatprep.subr.mxu0 0.0
    %3600 = vmatpush1.msra.mxu0 0.0
    %3601 = vmatprep.subr.mxu0 0.0
    %3602 = vmatpush1.msra.mxu0 0.0
    %3603 = vmatprep.subr.mxu0 0.0
    %3604 = vmatpush1.msra.mxu0 0.0
    %3605 = vmatprep.subr.mxu0 0.0
    %3606 = vmatpush1.msra.mxu0 0.0
    %3607 = vmatprep.subr.mxu0 0.0
    %3608 = vmatpush1.msra.mxu0 0.0
    %3609 = vmatprep.subr.mxu0 0.0
    %3610 = vmatpush1.msra.mxu0 0.0
    %3611 = vmatprep.subr.mxu0 0.0
    %3612 = vmatpush1.msra.mxu0 0.0
    %3613 = vmatprep.subr.mxu0 0.0
    %3614 = vmatpush1.msra.mxu0 0.0
    %3615 = vmatprep.subr.mxu0 0.0
    %3616 = vmatpush1.msra.mxu0 0.0
    %3617 = vmatprep.subr.mxu0 0.0
    %3618 = vmatpush1.msra.mxu0 0.0
    %3619 = vmatprep.subr.mxu0 0.0
    %3620 = vmatpush1.msra.mxu0 0.0
    %3621 = vmatprep.subr.mxu0 0.0
    %3622 = vmatpush1.msra.mxu0 0.0
    %3623 = vmatprep.subr.mxu0 0.0
    %3624 = vmatpush1.msra.mxu0 0.0
    %3625 = vmatprep.subr.mxu0 0.0
    %3626 = vmatpush1.msra.mxu0 0.0
    %3627 = vmatprep.subr.mxu0 0.0
    %3628 = vmatpush1.msra.mxu0 0.0
    %3629 = vmatprep.subr.mxu0 0.0
    %3630 = vmatpush1.msra.mxu0 0.0
    %3631 = vmatprep.subr.mxu0 0.0
    %3632 = vmatpush1.msra.mxu0 0.0
    %3633 = vmatprep.subr.mxu0 0.0
    %3634 = vmatpush1.msra.mxu0 0.0
    %3635 = vmatprep.subr.mxu0 0.0
    %3636 = vmatpush1.msra.mxu0 0.0
    %3637 = vmatprep.subr.mxu0 0.0
    %3638 = vmatpush1.msra.mxu0 0.0
    %3639 = vmatprep.subr.mxu0 0.0
    %3640 = vmatpush1.msra.mxu0 0.0
    %3641 = vmatprep.subr.mxu0 0.0
    %3642 = vmatpush1.msra.mxu0 0.0
    %3643 = vmatprep.subr.mxu0 0.0
    %3644 = vmatpush1.msra.mxu0 0.0
    %3645 = vmatprep.subr.mxu0 0.0
    %3646 = vmatpush1.msra.mxu0 0.0
    %3647 = vmatprep.subr.mxu0 0.0
    %3648 = vmatpush1.msra.mxu0 0.0
    %3649 = vmatprep.subr.mxu0 0.0
    %3650 = vmatpush1.msra.mxu0 0.0
    %3651 = vmatprep.subr.mxu0 0.0
    %3652 = vmatpush1.msra.mxu0 0.0
    %3653 = vmatprep.mubr.f32.mxu0 0.0
    %3654 = vmatmul.mubr.f32.gmra.mrb[0].mxu0 %v3587
    %v3655 = vpop.f32.mrb[0].mxu0
    %v3656 = vadd.f32 %v3584, %v3655
    %v3657 = vpop.f32.mrb[0].mxu0
    %3658 = vdwg.mxu0
    %v3659 = vmax.f32 %v3656, 0.0
    %v3661 = vsel %vm696, %v3659, 0
    %3663 = vmatprep.subr.mxu0 %v373
    %3664 = vmatpush1.msra.mxu0 %v372
    %3665 = vmatprep.subr.mxu0 0.0
    %3666 = vmatpush1.msra.mxu0 0.0
    %3667 = vmatprep.subr.mxu0 0.0
    %3668 = vmatpush1.msra.mxu0 0.0
    %3669 = vmatprep.subr.mxu0 0.0
    %3670 = vmatpush1.msra.mxu0 0.0
    %3671 = vmatprep.subr.mxu0 0.0
    %3672 = vmatpush1.msra.mxu0 0.0
    %3673 = vmatprep.subr.mxu0 0.0
    %3674 = vmatpush1.msra.mxu0 0.0
    %3675 = vmatprep.subr.mxu0 0.0
    %3676 = vmatpush1.msra.mxu0 0.0
    %3677 = vmatprep.subr.mxu0 0.0
    %3678 = vmatpush1.msra.mxu0 0.0
    %3679 = vmatprep.subr.mxu0 0.0
    %3680 = vmatpush1.msra.mxu0 0.0
    %3681 = vmatprep.subr.mxu0 0.0
    %3682 = vmatpush1.msra.mxu0 0.0
    %3683 = vmatprep.subr.mxu0 0.0
    %3684 = vmatpush1.msra.mxu0 0.0
    %3685 = vmatprep.subr.mxu0 0.0
    %3686 = vmatpush1.msra.mxu0 0.0
    %3687 = vmatprep.subr.mxu0 0.0
    %3688 = vmatpush1.msra.mxu0 0.0
    %3689 = vmatprep.subr.mxu0 0.0
    %3690 = vmatpush1.msra.mxu0 0.0
    %3691 = vmatprep.subr.mxu0 0.0
    %3692 = vmatpush1.msra.mxu0 0.0
    %3693 = vmatprep.subr.mxu0 0.0
    %3694 = vmatpush1.msra.mxu0 0.0
    %3695 = vmatprep.subr.mxu0 0.0
    %3696 = vmatpush1.msra.mxu0 0.0
    %3697 = vmatprep.subr.mxu0 0.0
    %3698 = vmatpush1.msra.mxu0 0.0
    %3699 = vmatprep.subr.mxu0 0.0
    %3700 = vmatpush1.msra.mxu0 0.0
    %3701 = vmatprep.subr.mxu0 0.0
    %3702 = vmatpush1.msra.mxu0 0.0
    %3703 = vmatprep.subr.mxu0 0.0
    %3704 = vmatpush1.msra.mxu0 0.0
    %3705 = vmatprep.subr.mxu0 0.0
    %3706 = vmatpush1.msra.mxu0 0.0
    %3707 = vmatprep.subr.mxu0 0.0
    %3708 = vmatpush1.msra.mxu0 0.0
    %3709 = vmatprep.subr.mxu0 0.0
    %3710 = vmatpush1.msra.mxu0 0.0
    %3711 = vmatprep.subr.mxu0 0.0
    %3712 = vmatpush1.msra.mxu0 0.0
    %3713 = vmatprep.subr.mxu0 0.0
    %3714 = vmatpush1.msra.mxu0 0.0
    %3715 = vmatprep.subr.mxu0 0.0
    %3716 = vmatpush1.msra.mxu0 0.0
    %3717 = vmatprep.subr.mxu0 0.0
    %3718 = vmatpush1.msra.mxu0 0.0
    %3719 = vmatprep.subr.mxu0 0.0
    %3720 = vmatpush1.msra.mxu0 0.0
    %3721 = vmatprep.subr.mxu0 0.0
    %3722 = vmatpush1.msra.mxu0 0.0
    %3723 = vmatprep.subr.mxu0 0.0
    %3724 = vmatpush1.msra.mxu0 0.0
    %3725 = vmatprep.subr.mxu0 0.0
    %3726 = vmatpush1.msra.mxu0 0.0
    %3727 = vmatprep.mubr.f32.mxu0 0.0
    %3728 = vmatmul.mubr.f32.gmra.mrb[0].mxu0 %v3661
    %v3729 = vpop.f32.mrb[0].mxu0
    %v3730 = vadd.f32 0.0, %v3729
    %v3731 = vpop.f32.mrb[0].mxu0
    %v3732 = vadd.f32 0.0, %v3731
    %3733 = vdwg.mxu0
    %3734 = vmatprep.subr.mxu0 %v375
    %3735 = vmatpush1.msra.mxu0 %v374
    %3736 = vmatprep.subr.mxu0 0.0
    %3737 = vmatpush1.msra.mxu0 0.0
    %3738 = vmatprep.subr.mxu0 0.0
    %3739 = vmatpush1.msra.mxu0 0.0
    %3740 = vmatprep.subr.mxu0 0.0
    %3741 = vmatpush1.msra.mxu0 0.0
    %3742 = vmatprep.subr.mxu0 0.0
    %3743 = vmatpush1.msra.mxu0 0.0
    %3744 = vmatprep.subr.mxu0 0.0
    %3745 = vmatpush1.msra.mxu0 0.0
    %3746 = vmatprep.subr.mxu0 0.0
    %3747 = vmatpush1.msra.mxu0 0.0
    %3748 = vmatprep.subr.mxu0 0.0
    %3749 = vmatpush1.msra.mxu0 0.0
    %3750 = vmatprep.subr.mxu0 0.0
    %3751 = vmatpush1.msra.mxu0 0.0
    %3752 = vmatprep.subr.mxu0 0.0
    %3753 = vmatpush1.msra.mxu0 0.0
    %3754 = vmatprep.subr.mxu0 0.0
    %3755 = vmatpush1.msra.mxu0 0.0
    %3756 = vmatprep.subr.mxu0 0.0
    %3757 = vmatpush1.msra.mxu0 0.0
    %3758 = vmatprep.subr.mxu0 0.0
    %3759 = vmatpush1.msra.mxu0 0.0
    %3760 = vmatprep.subr.mxu0 0.0
    %3761 = vmatpush1.msra.mxu0 0.0
    %3762 = vmatprep.subr.mxu0 0.0
    %3763 = vmatpush1.msra.mxu0 0.0
    %3764 = vmatprep.subr.mxu0 0.0
    %3765 = vmatpush1.msra.mxu0 0.0
    %3766 = vmatprep.subr.mxu0 0.0
    %3767 = vmatpush1.msra.mxu0 0.0
    %3768 = vmatprep.subr.mxu0 0.0
    %3769 = vmatpush1.msra.mxu0 0.0
    %3770 = vmatprep.subr.mxu0 0.0
    %3771 = vmatpush1.msra.mxu0 0.0
    %3772 = vmatprep.subr.mxu0 0.0
    %3773 = vmatpush1.msra.mxu0 0.0
    %3774 = vmatprep.subr.mxu0 0.0
    %3775 = vmatpush1.msra.mxu0 0.0
    %3776 = vmatprep.subr.mxu0 0.0
    %3777 = vmatpush1.msra.mxu0 0.0
    %3778 = vmatprep.subr.mxu0 0.0
    %3779 = vmatpush1.msra.mxu0 0.0
    %3780 = vmatprep.subr.mxu0 0.0
    %3781 = vmatpush1.msra.mxu0 0.0
    %3782 = vmatprep.subr.mxu0 0.0
    %3783 = vmatpush1.msra.mxu0 0.0
    %3784 = vmatprep.subr.mxu0 0.0
    %3785 = vmatpush1.msra.mxu0 0.0
    %3786 = vmatprep.subr.mxu0 0.0
    %3787 = vmatpush1.msra.mxu0 0.0
    %3788 = vmatprep.subr.mxu0 0.0
    %3789 = vmatpush1.msra.mxu0 0.0
    %3790 = vmatprep.subr.mxu0 0.0
    %3791 = vmatpush1.msra.mxu0 0.0
    %3792 = vmatprep.subr.mxu0 0.0
    %3793 = vmatpush1.msra.mxu0 0.0
    %3794 = vmatprep.subr.mxu0 0.0
    %3795 = vmatpush1.msra.mxu0 0.0
    %3796 = vmatprep.subr.mxu0 0.0
    %3797 = vmatpush1.msra.mxu0 0.0
    %3798 = vmatprep.mubr.f32.mxu0 0.0
    %3799 = vmatmul.mubr.f32.gmra.mrb[0].mxu0 %v3661
    %v3800 = vpop.f32.mrb[0].mxu0
    %v3801 = vadd.f32 0.0, %v3800
    %v3802 = vpop.f32.mrb[0].mxu0
    %v3803 = vadd.f32 0.0, %v3802
    %3804 = vdwg.mxu0
    %v3806 = vsel %vm696, %v3562, 0
    %3808 = vmatprep.subr.mxu0 %v369
    %3809 = vmatpush1.msra.mxu0 %v368
    %3810 = vmatprep.subr.mxu0 0.0
    %3811 = vmatpush1.msra.mxu0 0.0
    %3812 = vmatprep.subr.mxu0 0.0
    %3813 = vmatpush1.msra.mxu0 0.0
    %3814 = vmatprep.subr.mxu0 0.0
    %3815 = vmatpush1.msra.mxu0 0.0
    %3816 = vmatprep.subr.mxu0 0.0
    %3817 = vmatpush1.msra.mxu0 0.0
    %3818 = vmatprep.subr.mxu0 0.0
    %3819 = vmatpush1.msra.mxu0 0.0
    %3820 = vmatprep.subr.mxu0 0.0
    %3821 = vmatpush1.msra.mxu0 0.0
    %3822 = vmatprep.subr.mxu0 0.0
    %3823 = vmatpush1.msra.mxu0 0.0
    %3824 = vmatprep.subr.mxu0 0.0
    %3825 = vmatpush1.msra.mxu0 0.0
    %3826 = vmatprep.subr.mxu0 0.0
    %3827 = vmatpush1.msra.mxu0 0.0
    %3828 = vmatprep.subr.mxu0 0.0
    %3829 = vmatpush1.msra.mxu0 0.0
    %3830 = vmatprep.subr.mxu0 0.0
    %3831 = vmatpush1.msra.mxu0 0.0
    %3832 = vmatprep.subr.mxu0 0.0
    %3833 = vmatpush1.msra.mxu0 0.0
    %3834 = vmatprep.subr.mxu0 0.0
    %3835 = vmatpush1.msra.mxu0 0.0
    %3836 = vmatprep.subr.mxu0 0.0
    %3837 = vmatpush1.msra.mxu0 0.0
    %3838 = vmatprep.subr.mxu0 0.0
    %3839 = vmatpush1.msra.mxu0 0.0
    %3840 = vmatprep.subr.mxu0 0.0
    %3841 = vmatpush1.msra.mxu0 0.0
    %3842 = vmatprep.subr.mxu0 0.0
    %3843 = vmatpush1.msra.mxu0 0.0
    %3844 = vmatprep.subr.mxu0 0.0
    %3845 = vmatpush1.msra.mxu0 0.0
    %3846 = vmatprep.subr.mxu0 0.0
    %3847 = vmatpush1.msra.mxu0 0.0
    %3848 = vmatprep.subr.mxu0 0.0
    %3849 = vmatpush1.msra.mxu0 0.0
    %3850 = vmatprep.subr.mxu0 0.0
    %3851 = vmatpush1.msra.mxu0 0.0
    %3852 = vmatprep.subr.mxu0 0.0
    %3853 = vmatpush1.msra.mxu0 0.0
    %3854 = vmatprep.subr.mxu0 0.0
    %3855 = vmatpush1.msra.mxu0 0.0
    %3856 = vmatprep.subr.mxu0 0.0
    %3857 = vmatpush1.msra.mxu0 0.0
    %3858 = vmatprep.subr.mxu0 0.0
    %3859 = vmatpush1.msra.mxu0 0.0
    %3860 = vmatprep.subr.mxu0 0.0
    %3861 = vmatpush1.msra.mxu0 0.0
    %3862 = vmatprep.subr.mxu0 0.0
    %3863 = vmatpush1.msra.mxu0 0.0
    %3864 = vmatprep.subr.mxu0 0.0
    %3865 = vmatpush1.msra.mxu0 0.0
    %3866 = vmatprep.subr.mxu0 0.0
    %3867 = vmatpush1.msra.mxu0 0.0
    %3868 = vmatprep.subr.mxu0 0.0
    %3869 = vmatpush1.msra.mxu0 0.0
    %3870 = vmatprep.subr.mxu0 0.0
    %3871 = vmatpush1.msra.mxu0 0.0
    %3872 = vmatprep.mubr.f32.mxu0 0.0
    %3873 = vmatmul.mubr.f32.gmra.mrb[0].mxu0 %v3806
    %v3874 = vpop.f32.mrb[0].mxu0
    %v3875 = vadd.f32 %v3730, %v3874
    %v3876 = vpop.f32.mrb[0].mxu0
    %v3877 = vadd.f32 %v3732, %v3876
    %3878 = vdwg.mxu0
    %3879 = vmatprep.subr.mxu0 %v371
    %3880 = vmatpush1.msra.mxu0 %v370
    %3881 = vmatprep.subr.mxu0 0.0
    %3882 = vmatpush1.msra.mxu0 0.0
    %3883 = vmatprep.subr.mxu0 0.0
    %3884 = vmatpush1.msra.mxu0 0.0
    %3885 = vmatprep.subr.mxu0 0.0
    %3886 = vmatpush1.msra.mxu0 0.0
    %3887 = vmatprep.subr.mxu0 0.0
    %3888 = vmatpush1.msra.mxu0 0.0
    %3889 = vmatprep.subr.mxu0 0.0
    %3890 = vmatpush1.msra.mxu0 0.0
    %3891 = vmatprep.subr.mxu0 0.0
    %3892 = vmatpush1.msra.mxu0 0.0
    %3893 = vmatprep.subr.mxu0 0.0
    %3894 = vmatpush1.msra.mxu0 0.0
    %3895 = vmatprep.subr.mxu0 0.0
    %3896 = vmatpush1.msra.mxu0 0.0
    %3897 = vmatprep.subr.mxu0 0.0
    %3898 = vmatpush1.msra.mxu0 0.0
    %3899 = vmatprep.subr.mxu0 0.0
    %3900 = vmatpush1.msra.mxu0 0.0
    %3901 = vmatprep.subr.mxu0 0.0
    %3902 = vmatpush1.msra.mxu0 0.0
    %3903 = vmatprep.subr.mxu0 0.0
    %3904 = vmatpush1.msra.mxu0 0.0
    %3905 = vmatprep.subr.mxu0 0.0
    %3906 = vmatpush1.msra.mxu0 0.0
    %3907 = vmatprep.subr.mxu0 0.0
    %3908 = vmatpush1.msra.mxu0 0.0
    %3909 = vmatprep.subr.mxu0 0.0
    %3910 = vmatpush1.msra.mxu0 0.0
    %3911 = vmatprep.subr.mxu0 0.0
    %3912 = vmatpush1.msra.mxu0 0.0
    %3913 = vmatprep.subr.mxu0 0.0
    %3914 = vmatpush1.msra.mxu0 0.0
    %3915 = vmatprep.subr.mxu0 0.0
    %3916 = vmatpush1.msra.mxu0 0.0
    %3917 = vmatprep.subr.mxu0 0.0
    %3918 = vmatpush1.msra.mxu0 0.0
    %3919 = vmatprep.subr.mxu0 0.0
    %3920 = vmatpush1.msra.mxu0 0.0
    %3921 = vmatprep.subr.mxu0 0.0
    %3922 = vmatpush1.msra.mxu0 0.0
    %3923 = vmatprep.subr.mxu0 0.0
    %3924 = vmatpush1.msra.mxu0 0.0
    %3925 = vmatprep.subr.mxu0 0.0
    %3926 = vmatpush1.msra.mxu0 0.0
    %3927 = vmatprep.subr.mxu0 0.0
    %3928 = vmatpush1.msra.mxu0 0.0
    %3929 = vmatprep.subr.mxu0 0.0
    %3930 = vmatpush1.msra.mxu0 0.0
    %3931 = vmatprep.subr.mxu0 0.0
    %3932 = vmatpush1.msra.mxu0 0.0
    %3933 = vmatprep.subr.mxu0 0.0
    %3934 = vmatpush1.msra.mxu0 0.0
    %3935 = vmatprep.subr.mxu0 0.0
    %3936 = vmatpush1.msra.mxu0 0.0
    %3937 = vmatprep.subr.mxu0 0.0
    %3938 = vmatpush1.msra.mxu0 0.0
    %3939 = vmatprep.subr.mxu0 0.0
    %3940 = vmatpush1.msra.mxu0 0.0
    %3941 = vmatprep.subr.mxu0 0.0
    %3942 = vmatpush1.msra.mxu0 0.0
    %3943 = vmatprep.mubr.f32.mxu0 0.0
    %3944 = vmatmul.mubr.f32.gmra.mrb[0].mxu0 %v3806
    %v3945 = vpop.f32.mrb[0].mxu0
    %v3946 = vadd.f32 %v3801, %v3945
    %v3947 = vpop.f32.mrb[0].mxu0
    %v3948 = vadd.f32 %v3803, %v3947
    %3949 = vdwg.mxu0
    %v3951 = vlaneseq
    %v3952 = vshrl.u32 %v3951, 7
    %v3953 = vsub.s32 0, %v3952
    %v3954 = vrot.slane %v367, %v3953
    %v3955 = vlaneseq
    %v3956 = vshrl.u32 %v3955, 7
    %v3957 = vsub.s32 1, %v3956
    %v3958 = vrot.slane %v367, %v3957
    %v3959 = vlaneseq
    %v3960 = vshrl.u32 %v3959, 7
    %v3961 = vsub.s32 2, %v3960
    %v3962 = vrot.slane %v367, %v3961
    %v3963 = vlaneseq
    %v3964 = vshrl.u32 %v3963, 7
    %v3965 = vsub.s32 3, %v3964
    %v3966 = vrot.slane %v367, %v3965
    %v3971 = vadd.f32 %v3875, %v3954
    %v3972 = vadd.f32 %v3877, %v3958
    %v3973 = vadd.f32 %v3946, %v3962
    %v3974 = vadd.f32 %v3948, %v3966
    %vm3975 = vcmask 1041408
    %v3976 = vsel %vm3975, %v3971, 0.0
    %v3977 = vsel %vm3975, %v3972, 0.0
    %v3978 = vadd.f32 %v3976, %v3977
    %v3979 = vsel %vm3975, %v3973, 0.0
    %v3980 = vadd.f32 %v3978, %v3979
    %v3981 = vsel %vm3975, %v3974, 0.0
    %v3982 = vadd.f32 %v3980, %v3981
    %3983 = vadd.xlane.f32.xlu0 %v3982
    %v3984 = vpop.xlane.xlu0 %3983
    %v3985 = vrcp.pop 512.0
    %v3986 = vmul.f32 %v3984, %v3985
    %v3987 = vsub.f32 %v3971, %v3986
    %v3988 = vsub.f32 %v3972, %v3986
    %v3989 = vsub.f32 %v3973, %v3986
    %v3990 = vsub.f32 %v3974, %v3986
    %v3991 = vmul.f32 %v3987, %v3987
    %v3992 = vmul.f32 %v3988, %v3988
    %v3993 = vmul.f32 %v3989, %v3989
    %v3994 = vmul.f32 %v3990, %v3990
    %v3995 = vsel %vm3975, %v3991, 0.0
    %v3996 = vsel %vm3975, %v3992, 0.0
    %v3997 = vadd.f32 %v3995, %v3996
    %v3998 = vsel %vm3975, %v3993, 0.0
    %v3999 = vadd.f32 %v3997, %v3998
    %v4000 = vsel %vm3975, %v3994, 0.0
    %v4001 = vadd.f32 %v3999, %v4000
    %4002 = vadd.xlane.f32.xlu0 %v4001
    %v4003 = vpop.xlane.xlu0 %4002
    %v4004 = vmul.f32 %v4003, %v3985
    %v4005 = vadd.f32 %v4004, 1e-05
    %v4006 = vrsqrt.pop %v4005
    %v4007 = vmul.f32 %v3987, %v4006
    %v4008 = vmul.f32 %v3988, %v4006
    %v4009 = vmul.f32 %v3989, %v4006
    %v4010 = vmul.f32 %v3990, %v4006
    %v4012 = vlaneseq
    %v4013 = vshrl.u32 %v4012, 7
    %v4014 = vsub.s32 0, %v4013
    %v4015 = vrot.slane %v442, %v4014
    %v4016 = vlaneseq
    %v4017 = vshrl.u32 %v4016, 7
    %v4018 = vsub.s32 1, %v4017
    %v4019 = vrot.slane %v442, %v4018
    %v4020 = vlaneseq
    %v4021 = vshrl.u32 %v4020, 7
    %v4022 = vsub.s32 2, %v4021
    %v4023 = vrot.slane %v442, %v4022
    %v4024 = vlaneseq
    %v4025 = vshrl.u32 %v4024, 7
    %v4026 = vsub.s32 3, %v4025
    %v4027 = vrot.slane %v442, %v4026
    %v4032 = vmul.f32 %v4007, %v4015
    %v4033 = vmul.f32 %v4008, %v4019
    %v4034 = vmul.f32 %v4009, %v4023
    %v4035 = vmul.f32 %v4010, %v4027
    %v4037 = vlaneseq
    %v4038 = vshrl.u32 %v4037, 7
    %v4039 = vsub.s32 0, %v4038
    %v4040 = vrot.slane %v441, %v4039
    %v4041 = vlaneseq
    %v4042 = vshrl.u32 %v4041, 7
    %v4043 = vsub.s32 1, %v4042
    %v4044 = vrot.slane %v441, %v4043
    %v4045 = vlaneseq
    %v4046 = vshrl.u32 %v4045, 7
    %v4047 = vsub.s32 2, %v4046
    %v4048 = vrot.slane %v441, %v4047
    %v4049 = vlaneseq
    %v4050 = vshrl.u32 %v4049, 7
    %v4051 = vsub.s32 3, %v4050
    %v4052 = vrot.slane %v441, %v4051
    %v4057 = vadd.f32 %v4032, %v4040
    %v4058 = vadd.f32 %v4033, %v4044
    %v4059 = vadd.f32 %v4034, %v4048
    %v4060 = vadd.f32 %v4035, %v4052
    %v4061 = vmax.f32 %v4057, 0.0
    %v4062 = vmax.f32 %v4058, 0.0
    %v4063 = vmax.f32 %v4059, 0.0
    %v4064 = vmax.f32 %v4060, 0.0
    %v4066 = vlaneseq
    %v4067 = vshrl.u32 %v4066, 7
    %v4068 = vsub.s32 0, %v4067
    %v4069 = vrot.slane %v376, %v4068
    %4071 = vmatprep.subr.mxu0 0.0
    %4072 = vmatpush1.msra.mxu0 %v377
    %4073 = vmatprep.subr.mxu0 0.0
    %4074 = vmatpush1.msra.mxu0 %v378
    %4075 = vmatprep.subr.mxu0 0.0
    %4076 = vmatpush1.msra.mxu0 %v379
    %4077 = vmatprep.subr.mxu0 0.0
    %4078 = vmatpush1.msra.mxu0 %v380
    %4079 = vmatprep.subr.mxu0 0.0
    %4080 = vmatpush1.msra.mxu0 %v381
    %4081 = vmatprep.subr.mxu0 0.0
    %4082 = vmatpush1.msra.mxu0 %v382
    %4083 = vmatprep.subr.mxu0 0.0
    %4084 = vmatpush1.msra.mxu0 %v383
    %4085 = vmatprep.subr.mxu0 0.0
    %4086 = vmatpush1.msra.mxu0 %v384
    %4087 = vmatprep.subr.mxu0 0.0
    %4088 = vmatpush1.msra.mxu0 %v385
    %4089 = vmatprep.subr.mxu0 0.0
    %4090 = vmatpush1.msra.mxu0 %v386
    %4091 = vmatprep.subr.mxu0 0.0
    %4092 = vmatpush1.msra.mxu0 %v387
    %4093 = vmatprep.subr.mxu0 0.0
    %4094 = vmatpush1.msra.mxu0 %v388
    %4095 = vmatprep.subr.mxu0 0.0
    %4096 = vmatpush1.msra.mxu0 %v389
    %4097 = vmatprep.subr.mxu0 0.0
    %4098 = vmatpush1.msra.mxu0 %v390
    %4099 = vmatprep.subr.mxu0 0.0
    %4100 = vmatpush1.msra.mxu0 %v391
    %4101 = vmatprep.subr.mxu0 0.0
    %4102 = vmatpush1.msra.mxu0 %v392
    %4103 = vmatprep.subr.mxu0 0.0
    %4104 = vmatpush1.msra.mxu0 %v393
    %4105 = vmatprep.subr.mxu0 0.0
    %4106 = vmatpush1.msra.mxu0 %v394
    %4107 = vmatprep.subr.mxu0 0.0
    %4108 = vmatpush1.msra.mxu0 %v395
    %4109 = vmatprep.subr.mxu0 0.0
    %4110 = vmatpush1.msra.mxu0 %v396
    %4111 = vmatprep.subr.mxu0 0.0
    %4112 = vmatpush1.msra.mxu0 %v397
    %4113 = vmatprep.subr.mxu0 0.0
    %4114 = vmatpush1.msra.mxu0 %v398
    %4115 = vmatprep.subr.mxu0 0.0
    %4116 = vmatpush1.msra.mxu0 %v399
    %4117 = vmatprep.subr.mxu0 0.0
    %4118 = vmatpush1.msra.mxu0 %v400
    %4119 = vmatprep.subr.mxu0 0.0
    %4120 = vmatpush1.msra.mxu0 %v401
    %4121 = vmatprep.subr.mxu0 0.0
    %4122 = vmatpush1.msra.mxu0 %v402
    %4123 = vmatprep.subr.mxu0 0.0
    %4124 = vmatpush1.msra.mxu0 %v403
    %4125 = vmatprep.subr.mxu0 0.0
    %4126 = vmatpush1.msra.mxu0 %v404
    %4127 = vmatprep.subr.mxu0 0.0
    %4128 = vmatpush1.msra.mxu0 %v405
    %4129 = vmatprep.subr.mxu0 0.0
    %4130 = vmatpush1.msra.mxu0 %v406
    %4131 = vmatprep.subr.mxu0 0.0
    %4132 = vmatpush1.msra.mxu0 %v407
    %4133 = vmatprep.subr.mxu0 0.0
    %4134 = vmatpush1.msra.mxu0 %v408
    %4135 = vmatprep.mubr.f32.mxu0 %v4062
    %4136 = vmatmul.mubr.f32.gmra.mrb[0].mxu0 %v4061
    %v4137 = vpop.f32.mrb[0].mxu0
    %v4138 = vadd.f32 %v4069, %v4137
    %v4139 = vpop.f32.mrb[0].mxu0
    %4140 = vdwg.mxu0
    %4141 = vmatprep.subr.mxu0 0.0
    %4142 = vmatpush1.msra.mxu0 %v409
    %4143 = vmatprep.subr.mxu0 0.0
    %4144 = vmatpush1.msra.mxu0 %v410
    %4145 = vmatprep.subr.mxu0 0.0
    %4146 = vmatpush1.msra.mxu0 %v411
    %4147 = vmatprep.subr.mxu0 0.0
    %4148 = vmatpush1.msra.mxu0 %v412
    %4149 = vmatprep.subr.mxu0 0.0
    %4150 = vmatpush1.msra.mxu0 %v413
    %4151 = vmatprep.subr.mxu0 0.0
    %4152 = vmatpush1.msra.mxu0 %v414
    %4153 = vmatprep.subr.mxu0 0.0
    %4154 = vmatpush1.msra.mxu0 %v415
    %4155 = vmatprep.subr.mxu0 0.0
    %4156 = vmatpush1.msra.mxu0 %v416
    %4157 = vmatprep.subr.mxu0 0.0
    %4158 = vmatpush1.msra.mxu0 %v417
    %4159 = vmatprep.subr.mxu0 0.0
    %4160 = vmatpush1.msra.mxu0 %v418
    %4161 = vmatprep.subr.mxu0 0.0
    %4162 = vmatpush1.msra.mxu0 %v419
    %4163 = vmatprep.subr.mxu0 0.0
    %4164 = vmatpush1.msra.mxu0 %v420
    %4165 = vmatprep.subr.mxu0 0.0
    %4166 = vmatpush1.msra.mxu0 %v421
    %4167 = vmatprep.subr.mxu0 0.0
    %4168 = vmatpush1.msra.mxu0 %v422
    %4169 = vmatprep.subr.mxu0 0.0
    %4170 = vmatpush1.msra.mxu0 %v423
    %4171 = vmatprep.subr.mxu0 0.0
    %4172 = vmatpush1.msra.mxu0 %v424
    %4173 = vmatprep.subr.mxu0 0.0
    %4174 = vmatpush1.msra.mxu0 %v425
    %4175 = vmatprep.subr.mxu0 0.0
    %4176 = vmatpush1.msra.mxu0 %v426
    %4177 = vmatprep.subr.mxu0 0.0
    %4178 = vmatpush1.msra.mxu0 %v427
    %4179 = vmatprep.subr.mxu0 0.0
    %4180 = vmatpush1.msra.mxu0 %v428
    %4181 = vmatprep.subr.mxu0 0.0
    %4182 = vmatpush1.msra.mxu0 %v429
    %4183 = vmatprep.subr.mxu0 0.0
    %4184 = vmatpush1.msra.mxu0 %v430
    %4185 = vmatprep.subr.mxu0 0.0
    %4186 = vmatpush1.msra.mxu0 %v431
    %4187 = vmatprep.subr.mxu0 0.0
    %4188 = vmatpush1.msra.mxu0 %v432
    %4189 = vmatprep.subr.mxu0 0.0
    %4190 = vmatpush1.msra.mxu0 %v433
    %4191 = vmatprep.subr.mxu0 0.0
    %4192 = vmatpush1.msra.mxu0 %v434
    %4193 = vmatprep.subr.mxu0 0.0
    %4194 = vmatpush1.msra.mxu0 %v435
    %4195 = vmatprep.subr.mxu0 0.0
    %4196 = vmatpush1.msra.mxu0 %v436
    %4197 = vmatprep.subr.mxu0 0.0
    %4198 = vmatpush1.msra.mxu0 %v437
    %4199 = vmatprep.subr.mxu0 0.0
    %4200 = vmatpush1.msra.mxu0 %v438
    %4201 = vmatprep.subr.mxu0 0.0
    %4202 = vmatpush1.msra.mxu0 %v439
    %4203 = vmatprep.subr.mxu0 0.0
    %4204 = vmatpush1.msra.mxu0 %v440
    %4205 = vmatprep.mubr.f32.mxu0 %v4064
    %4206 = vmatmul.mubr.f32.gmra.mrb[0].mxu0 %v4063
    %v4207 = vpop.f32.mrb[0].mxu0
    %v4208 = vadd.f32 %v4138, %v4207
    %v4209 = vpop.f32.mrb[0].mxu0
    %4210 = vdwg.mxu0
    %v4211 = vadd.f32 %v3404, %v4208
    %vm4212 = vcmask 58368
    %v4213 = vsel %vm4212, %v4211, 0.0
    %4214 = vadd.xlane.f32.xlu0 %v4213
    %v4215 = vpop.xlane.xlu0 %4214
    %v4216 = vrcp.pop 8.0
    %v4217 = vmul.f32 %v4215, %v4216
    %v4218 = vsub.f32 %v4211, %v4217
    %v4219 = vmul.f32 %v4218, %v4218
    %v4220 = vsel %vm4212, %v4219, 0.0
    %4221 = vadd.xlane.f32.xlu0 %v4220
    %v4222 = vpop.xlane.xlu0 %4221
    %v4223 = vmul.f32 %v4222, %v4216
    %v4224 = vadd.f32 %v4223, 1e-05
    %v4225 = vrsqrt.pop %v4224
    %v4226 = vmul.f32 %v4218, %v4225
    %v4228 = vlaneseq
    %v4229 = vshrl.u32 %v4228, 7
    %v4230 = vsub.s32 0, %v4229
    %v4231 = vrot.slane %v448, %v4230
    %v4233 = vmul.f32 %v4226, %v4231
    %v4235 = vlaneseq
    %v4236 = vshrl.u32 %v4235, 7
    %v4237 = vsub.s32 0, %v4236
    %v4238 = vrot.slane %v447, %v4237
    %v4240 = vadd.f32 %v4233, %v4238
    %v4242 = vlaneseq
    %v4243 = vshrl.u32 %v4242, 7
    %v4244 = vsub.s32 0, %v4243
    %v4245 = vrot.slane %v316, %v4244
    %v4248 = vsel %vm696, %v4240, 0
    %4250 = vmatprep.subr.mxu0 0.0
    %4251 = vmatpush1.msra.mxu0 %v317
    %4252 = vmatprep.subr.mxu0 0.0
    %4253 = vmatpush1.msra.mxu0 0.0
    %4254 = vmatprep.subr.mxu0 0.0
    %4255 = vmatpush1.msra.mxu0 0.0
    %4256 = vmatprep.subr.mxu0 0.0
    %4257 = vmatpush1.msra.mxu0 0.0
    %4258 = vmatprep.subr.mxu0 0.0
    %4259 = vmatpush1.msra.mxu0 0.0
    %4260 = vmatprep.subr.mxu0 0.0
    %4261 = vmatpush1.msra.mxu0 0.0
    %4262 = vmatprep.subr.mxu0 0.0
    %4263 = vmatpush1.msra.mxu0 0.0
    %4264 = vmatprep.subr.mxu0 0.0
    %4265 = vmatpush1.msra.mxu0 0.0
    %4266 = vmatprep.subr.mxu0 0.0
    %4267 = vmatpush1.msra.mxu0 0.0
    %4268 = vmatprep.subr.mxu0 0.0
    %4269 = vmatpush1.msra.mxu0 0.0
    %4270 = vmatprep.subr.mxu0 0.0
    %4271 = vmatpush1.msra.mxu0 0.0
    %4272 = vmatprep.subr.mxu0 0.0
    %4273 = vmatpush1.msra.mxu0 0.0
    %4274 = vmatprep.subr.mxu0 0.0
    %4275 = vmatpush1.msra.mxu0 0.0
    %4276 = vmatprep.subr.mxu0 0.0
    %4277 = vmatpush1.msra.mxu0 0.0
    %4278 = vmatprep.subr.mxu0 0.0
    %4279 = vmatpush1.msra.mxu0 0.0
    %4280 = vmatprep.subr.mxu0 0.0
    %4281 = vmatpush1.msra.mxu0 0.0
    %4282 = vmatprep.subr.mxu0 0.0
    %4283 = vmatpush1.msra.mxu0 0.0
    %4284 = vmatprep.subr.mxu0 0.0
    %4285 = vmatpush1.msra.mxu0 0.0
    %4286 = vmatprep.subr.mxu0 0.0
    %4287 = vmatpush1.msra.mxu0 0.0
    %4288 = vmatprep.subr.mxu0 0.0
    %4289 = vmatpush1.msra.mxu0 0.0
    %4290 = vmatprep.subr.mxu0 0.0
    %4291 = vmatpush1.msra.mxu0 0.0
    %4292 = vmatprep.subr.mxu0 0.0
    %4293 = vmatpush1.msra.mxu0 0.0
    %4294 = vmatprep.subr.mxu0 0.0
    %4295 = vmatpush1.msra.mxu0 0.0
    %4296 = vmatprep.subr.mxu0 0.0
    %4297 = vmatpush1.msra.mxu0 0.0
    %4298 = vmatprep.subr.mxu0 0.0
    %4299 = vmatpush1.msra.mxu0 0.0
    %4300 = vmatprep.subr.mxu0 0.0
    %4301 = vmatpush1.msra.mxu0 0.0
    %4302 = vmatprep.subr.mxu0 0.0
    %4303 = vmatpush1.msra.mxu0 0.0
    %4304 = vmatprep.subr.mxu0 0.0
    %4305 = vmatpush1.msra.mxu0 0.0
    %4306 = vmatprep.subr.mxu0 0.0
    %4307 = vmatpush1.msra.mxu0 0.0
    %4308 = vmatprep.subr.mxu0 0.0
    %4309 = vmatpush1.msra.mxu0 0.0
    %4310 = vmatprep.subr.mxu0 0.0
    %4311 = vmatpush1.msra.mxu0 0.0
    %4312 = vmatprep.subr.mxu0 0.0
    %4313 = vmatpush1.msra.mxu0 0.0
    %4314 = vmatprep.mubr.f32.mxu0 0.0
    %4315 = vmatmul.mubr.f32.gmra.mrb[0].mxu0 %v4248
    %v4316 = vpop.f32.mrb[0].mxu0
    %v4317 = vadd.f32 %v4245, %v4316
    %v4318 = vpop.f32.mrb[0].mxu0
    %4319 = vdwg.mxu0
    %v4320 = vmax.f32 %v4317, 0.0
    %v4322 = vlaneseq
    %v4323 = vshrl.u32 %v4322, 7
    %v4324 = vsub.s32 0, %v4323
    %v4325 = vrot.slane %v318, %v4324
    %v4328 = vsel %vm474, %v4320, 0
    %v4331 = vsel %vm487, %v319, 0
    %4333 = vmatprep.subr.mxu0 0.0
    %4334 = vmatpush1.msra.mxu0 %v4331
    %4335 = vmatprep.subr.mxu0 0.0
    %4336 = vmatpush1.msra.mxu0 0.0
    %4337 = vmatprep.subr.mxu0 0.0
    %4338 = vmatpush1.msra.mxu0 0.0
    %4339 = vmatprep.subr.mxu0 0.0
    %4340 = vmatpush1.msra.mxu0 0.0
    %4341 = vmatprep.subr.mxu0 0.0
    %4342 = vmatpush1.msra.mxu0 0.0
    %4343 = vmatprep.subr.mxu0 0.0
    %4344 = vmatpush1.msra.mxu0 0.0
    %4345 = vmatprep.subr.mxu0 0.0
    %4346 = vmatpush1.msra.mxu0 0.0
    %4347 = vmatprep.subr.mxu0 0.0
    %4348 = vmatpush1.msra.mxu0 0.0
    %4349 = vmatprep.subr.mxu0 0.0
    %4350 = vmatpush1.msra.mxu0 0.0
    %4351 = vmatprep.subr.mxu0 0.0
    %4352 = vmatpush1.msra.mxu0 0.0
    %4353 = vmatprep.subr.mxu0 0.0
    %4354 = vmatpush1.msra.mxu0 0.0
    %4355 = vmatprep.subr.mxu0 0.0
    %4356 = vmatpush1.msra.mxu0 0.0
    %4357 = vmatprep.subr.mxu0 0.0
    %4358 = vmatpush1.msra.mxu0 0.0
    %4359 = vmatprep.subr.mxu0 0.0
    %4360 = vmatpush1.msra.mxu0 0.0
    %4361 = vmatprep.subr.mxu0 0.0
    %4362 = vmatpush1.msra.mxu0 0.0
    %4363 = vmatprep.subr.mxu0 0.0
    %4364 = vmatpush1.msra.mxu0 0.0
    %4365 = vmatprep.subr.mxu0 0.0
    %4366 = vmatpush1.msra.mxu0 0.0
    %4367 = vmatprep.subr.mxu0 0.0
    %4368 = vmatpush1.msra.mxu0 0.0
    %4369 = vmatprep.subr.mxu0 0.0
    %4370 = vmatpush1.msra.mxu0 0.0
    %4371 = vmatprep.subr.mxu0 0.0
    %4372 = vmatpush1.msra.mxu0 0.0
    %4373 = vmatprep.subr.mxu0 0.0
    %4374 = vmatpush1.msra.mxu0 0.0
    %4375 = vmatprep.subr.mxu0 0.0
    %4376 = vmatpush1.msra.mxu0 0.0
    %4377 = vmatprep.subr.mxu0 0.0
    %4378 = vmatpush1.msra.mxu0 0.0
    %4379 = vmatprep.subr.mxu0 0.0
    %4380 = vmatpush1.msra.mxu0 0.0
    %4381 = vmatprep.subr.mxu0 0.0
    %4382 = vmatpush1.msra.mxu0 0.0
    %4383 = vmatprep.subr.mxu0 0.0
    %4384 = vmatpush1.msra.mxu0 0.0
    %4385 = vmatprep.subr.mxu0 0.0
    %4386 = vmatpush1.msra.mxu0 0.0
    %4387 = vmatprep.subr.mxu0 0.0
    %4388 = vmatpush1.msra.mxu0 0.0
    %4389 = vmatprep.subr.mxu0 0.0
    %4390 = vmatpush1.msra.mxu0 0.0
    %4391 = vmatprep.subr.mxu0 0.0
    %4392 = vmatpush1.msra.mxu0 0.0
    %4393 = vmatprep.subr.mxu0 0.0
    %4394 = vmatpush1.msra.mxu0 0.0
    %4395 = vmatprep.subr.mxu0 0.0
    %4396 = vmatpush1.msra.mxu0 0.0
    %4397 = vmatprep.mubr.f32.mxu0 0.0
    %4398 = vmatmul.mubr.f32.gmra.mrb[0].mxu0 %v4328
    %v4399 = vpop.f32.mrb[0].mxu0
    %v4400 = vadd.f32 %v4325, %v4399
    %v4401 = vpop.f32.mrb[0].mxu0
    %4402 = vdwg.mxu0
    %v4403 = vmax.f32 %v4400, 0.0
    %v4405 = vlaneseq
    %v4406 = vshrl.u32 %v4405, 7
    %v4407 = vsub.s32 0, %v4406
    %v4408 = vrot.slane %v320, %v4407
    %vm4410 = vcmask 15360
    %v4412 = vsel %vm4410, %v4403, 0
    %v4415 = vsel %vm3975, %v321, 0
    %4417 = vmatprep.subr.mxu0 0.0
    %4418 = vmatpush1.msra.mxu0 %v4415
    %4419 = vmatprep.subr.mxu0 0.0
    %4420 = vmatpush1.msra.mxu0 0.0
    %4421 = vmatprep.subr.mxu0 0.0
    %4422 = vmatpush1.msra.mxu0 0.0
    %4423 = vmatprep.subr.mxu0 0.0
    %4424 = vmatpush1.msra.mxu0 0.0
    %4425 = vmatprep.subr.mxu0 0.0
    %4426 = vmatpush1.msra.mxu0 0.0
    %4427 = vmatprep.subr.mxu0 0.0
    %4428 = vmatpush1.msra.mxu0 0.0
    %4429 = vmatprep.subr.mxu0 0.0
    %4430 = vmatpush1.msra.mxu0 0.0
    %4431 = vmatprep.subr.mxu0 0.0
    %4432 = vmatpush1.msra.mxu0 0.0
    %4433 = vmatprep.subr.mxu0 0.0
    %4434 = vmatpush1.msra.mxu0 0.0
    %4435 = vmatprep.subr.mxu0 0.0
    %4436 = vmatpush1.msra.mxu0 0.0
    %4437 = vmatprep.subr.mxu0 0.0
    %4438 = vmatpush1.msra.mxu0 0.0
    %4439 = vmatprep.subr.mxu0 0.0
    %4440 = vmatpush1.msra.mxu0 0.0
    %4441 = vmatprep.subr.mxu0 0.0
    %4442 = vmatpush1.msra.mxu0 0.0
    %4443 = vmatprep.subr.mxu0 0.0
    %4444 = vmatpush1.msra.mxu0 0.0
    %4445 = vmatprep.subr.mxu0 0.0
    %4446 = vmatpush1.msra.mxu0 0.0
    %4447 = vmatprep.subr.mxu0 0.0
    %4448 = vmatpush1.msra.mxu0 0.0
    %4449 = vmatprep.subr.mxu0 0.0
    %4450 = vmatpush1.msra.mxu0 0.0
    %4451 = vmatprep.subr.mxu0 0.0
    %4452 = vmatpush1.msra.mxu0 0.0
    %4453 = vmatprep.subr.mxu0 0.0
    %4454 = vmatpush1.msra.mxu0 0.0
    %4455 = vmatprep.subr.mxu0 0.0
    %4456 = vmatpush1.msra.mxu0 0.0
    %4457 = vmatprep.subr.mxu0 0.0
    %4458 = vmatpush1.msra.mxu0 0.0
    %4459 = vmatprep.subr.mxu0 0.0
    %4460 = vmatpush1.msra.mxu0 0.0
    %4461 = vmatprep.subr.mxu0 0.0
    %4462 = vmatpush1.msra.mxu0 0.0
    %4463 = vmatprep.subr.mxu0 0.0
    %4464 = vmatpush1.msra.mxu0 0.0
    %4465 = vmatprep.subr.mxu0 0.0
    %4466 = vmatpush1.msra.mxu0 0.0
    %4467 = vmatprep.subr.mxu0 0.0
    %4468 = vmatpush1.msra.mxu0 0.0
    %4469 = vmatprep.subr.mxu0 0.0
    %4470 = vmatpush1.msra.mxu0 0.0
    %4471 = vmatprep.subr.mxu0 0.0
    %4472 = vmatpush1.msra.mxu0 0.0
    %4473 = vmatprep.subr.mxu0 0.0
    %4474 = vmatpush1.msra.mxu0 0.0
    %4475 = vmatprep.subr.mxu0 0.0
    %4476 = vmatpush1.msra.mxu0 0.0
    %4477 = vmatprep.subr.mxu0 0.0
    %4478 = vmatpush1.msra.mxu0 0.0
    %4479 = vmatprep.subr.mxu0 0.0
    %4480 = vmatpush1.msra.mxu0 0.0
    %4481 = vmatprep.mubr.f32.mxu0 0.0
    %4482 = vmatmul.mubr.f32.gmra.mrb[0].mxu0 %v4412
    %v4483 = vpop.f32.mrb[0].mxu0
    %v4484 = vadd.f32 %v4408, %v4483
    %v4485 = vpop.f32.mrb[0].mxu0
    %4486 = vdwg.mxu0
    %vm4487 = vcmask 17408
    %v4488 = vsel %vm4487, %v4484, -inf
    %4489 = vmax.xlane.f32.xlu0 %v4488
    %v4490 = vpop.xlane.xlu0 %4489
    %v4491 = vsub.f32 %v4484, %v4490
    %v4492 = vmul.f32 %v4491, 1.442695
    %v4493 = vpow.pop %v4492
    %v4494 = vsel %vm4487, %v4493, 0.0
    %4495 = vadd.xlane.f32.xlu0 %v4494
    %v4496 = vpop.xlane.xlu0 %4495
    %v4497 = vrcp.pop %v4496
    %v4498 = vmul.f32 %v4493, %v4497
    %4499 = vst.msk [vmem:[#allocation16] sm:$0x3] %vm4487, %v4498
    // Predicated region
    $region250: #{forward.1} parent=1 // pred_check
      _
    $region251: #{forward.1} parent=1 // pred_check_branch
      %4501 = sbr.rel (0) target = $region253
    $region252: #{forward.1} parent=1 // pred_region
      %s4503 = ssub.s32 32, 32
      %4504 = vsyncadd [#allocation4], %s4503
      %s4506 = sshll.u32 [#allocation16], 4
      %s4507 = int_to_ptr.vmem [resolvable:$true] %s4506
      %4509 = dma.vmem_to_hbm [thread:$0]  %s4507, 32, %s109, [#allocation4]
    $region253: #{forward.1} parent=1 // pred_fallthru
      _
    // Predicated region
    $region254: #{forward.1} parent=1 // pred_check
      _
    $region255: #{forward.1} parent=1 // pred_check_branch
      %4511 = sbr.rel (0) target = $region257
    $region256: #{forward.1} parent=1 // pred_region
      %4512 = dma.done [#allocation4], 32
    $region257: #{forward.1} parent=1 // pred_fallthru
      _
    %4513 = vsyncpa [#allocation3], 1
    %4514 = vsyncpa [#allocation6], 1
    %4515 = vsyncpa [#allocation9], 1
    %4516 = vsyncpa [#allocation12], 1
    %4517 = vsyncpa [#allocation15], 1
    %4518 = vsyncpa [#allocation4], 1

</llo_original>
